<compile_context>
chip_gen: v6e
topology: v6e:2x2x1
jax: 0.10.0
libtpu: 0.0.40
codegen_flags: <defaults>
</compile_context>

<pallas_src>
import functools

import jax
import jax.numpy as jnp
from jax.experimental import pallas as pl
from jax.experimental.pallas import tpu as pltpu


# --------------------------------------------------------------------------
# Fused Pallas kernel: 2 layers x 2 directions + FC head, grid=()
# --------------------------------------------------------------------------
def _fused_bilstm_kernel(
    xg0f_ref, xg0b_ref,            # (T*B, 4H) layer-0 gate pre-activations
    whh0f_ref, whh0b_ref,          # (H, 4H)   layer-0 recurrent weights
    w1f_top_ref, w1f_bot_ref, b1f_ref, whh1f_ref,   # layer-1 fwd
    w1b_top_ref, w1b_bot_ref, b1b_ref, whh1b_ref,   # layer-1 bwd
    fcwf_ref, fcwb_ref, fcb_ref,   # (1, H), (1, H), (1, 1) FC head
    out_ref,                       # (B, 1) output
    y0f_ref, y0b_ref,              # scratch (T*B, H)  layer-0 outputs
    xg1f_ref, xg1b_ref,            # scratch (T*B, 4H) layer-1 gate pre-acts
    *, seq_len, batch, hidden_dim):
    T, B, H = seq_len, batch, hidden_dim

    def recurrence(xg_ref, whh, y_ref=None, reverse=False):
        """One LSTM direction over precomputed input-gate pre-activations.

        Only h @ W_hh + gate nonlinearities stay on the serial path; h/c are
        carried in vector registers by the fully unrolled loop.
        """
        def step(s, carry):
            h, c = carry
            t = (T - 1 - s) if reverse else s
            gates = xg_ref[pl.ds(t * B, B), :] + jnp.dot(
                h, whh, preferred_element_type=jnp.float32)   # (B, 4H), i f g o
            i = jax.nn.sigmoid(gates[:, 0 * H:1 * H])
            f = jax.nn.sigmoid(gates[:, 1 * H:2 * H])
            g = jnp.tanh(gates[:, 2 * H:3 * H])
            o = jax.nn.sigmoid(gates[:, 3 * H:4 * H])
            c_new = f * c + i * g
            h_new = o * jnp.tanh(c_new)
            if y_ref is not None:
                y_ref[pl.ds(t * B, B), :] = h_new
            return (h_new, c_new)

        zeros = jnp.zeros((B, H), jnp.float32)
        h_fin, _ = jax.lax.fori_loop(0, T, step, (zeros, zeros), unroll=True)
        return h_fin

    # ---- layer 0: both directions; per-step outputs kept in VMEM scratch ----
    recurrence(xg0f_ref, whh0f_ref[...], y_ref=y0f_ref, reverse=False)
    recurrence(xg0b_ref, whh0b_ref[...], y_ref=y0b_ref, reverse=True)

    # ---- layer-1 input projections: one big MXU matmul per direction,
    #      hoisted off the sequential path.  concat(y0f, y0b) @ W_ih1.T is
    #      expressed as two matmuls on the pre-split weight halves (no concat).
    y0f = y0f_ref[...]
    y0b = y0b_ref[...]
    xg1f_ref[...] = (
        jnp.dot(y0f, w1f_top_ref[...], preferred_element_type=jnp.float32)
        + jnp.dot(y0b, w1f_bot_ref[...], preferred_element_type=jnp.float32)
        + b1f_ref[...])
    xg1b_ref[...] = (
        jnp.dot(y0f, w1b_top_ref[...], preferred_element_type=jnp.float32)
        + jnp.dot(y0b, w1b_bot_ref[...], preferred_element_type=jnp.float32)
        + b1b_ref[...])

    # ---- layer 1: only the final hidden states are consumed (no y output) ----
    h1f = recurrence(xg1f_ref, whh1f_ref[...], reverse=False)
    h1b = recurrence(xg1b_ref, whh1b_ref[...], reverse=True)

    # ---- FC head fused as a tail op: concat(h1f, h1b) @ fc_w.T + fc_b ----
    out_ref[...] = (
        jnp.sum(h1f * fcwf_ref[...], axis=1, keepdims=True)
        + jnp.sum(h1b * fcwb_ref[...], axis=1, keepdims=True)
        + fcb_ref[...])


# --------------------------------------------------------------------------
# Wrapper
# --------------------------------------------------------------------------
def my_lstm_forward(x, params, hidden_dim):
    """Forward pass equivalent to MyLSTM.forward (eval mode)."""
    T, B, E = x.shape
    H = hidden_dim
    x_flat = x.reshape(T * B, E).astype(jnp.float32)

    def hoisted_input_gates(w_ih, b_ih, b_hh):
        # Hoist x @ W_ih + b out of the recurrence: one large MXU-friendly
        # matmul done in plain XLA, fed to the kernel as (T*B, 4H).
        return x_flat @ w_ih.T + (b_ih + b_hh)

    w0f, wh0f, bi0f, bh0f = params["l0_fwd"]
    w0b, wh0b, bi0b, bh0b = params["l0_bwd"]
    w1f, wh1f, bi1f, bh1f = params["l1_fwd"]
    w1b, wh1b, bi1b, bh1b = params["l1_bwd"]

    xg0f = hoisted_input_gates(w0f, bi0f, bh0f)      # (T*B, 4H)
    xg0b = hoisted_input_gates(w0b, bi0b, bh0b)      # (T*B, 4H)

    w1f_t = w1f.T                                    # (2H, 4H)
    w1b_t = w1b.T
    fc_w = params["fc_w"]                            # (1, 2H)
    fc_b = params["fc_b"]                            # (1,)

    inputs = (
        xg0f, xg0b,
        wh0f.T, wh0b.T,                              # (H, 4H)
        w1f_t[:H], w1f_t[H:], (bi1f + bh1f).reshape(1, 4 * H), wh1f.T,
        w1b_t[:H], w1b_t[H:], (bi1b + bh1b).reshape(1, 4 * H), wh1b.T,
        fc_w[:, :H], fc_w[:, H:], fc_b.reshape(1, 1),
    )

    kernel = functools.partial(
        _fused_bilstm_kernel, seq_len=T, batch=B, hidden_dim=H)

    # TODO(synk): training-mode dropout (inter-layer LSTM dropout + self.dropout)
    # is identity in eval mode and is not implemented.
    # TODO(synk): on v7x the two independent directions could run on the two
    # TensorCores via pl.core_map; kept single-core for v5e/v6e portability.
    return pl.pallas_call(
        kernel,
        out_shape=jax.ShapeDtypeStruct((B, 1), jnp.float32),
        scratch_shapes=[
            pltpu.VMEM((T * B, H), jnp.float32),        # layer-0 fwd outputs
            pltpu.VMEM((T * B, H), jnp.float32),        # layer-0 bwd outputs
            pltpu.VMEM((T * B, 4 * H), jnp.float32),    # layer-1 fwd gate pre-acts
            pltpu.VMEM((T * B, 4 * H), jnp.float32),    # layer-1 bwd gate pre-acts
        ],
    )(*inputs)


# --------------------------------------------------------------------------
# Pure-JAX reference (for correctness check)
# --------------------------------------------------------------------------
def _ref_lstm_direction(x, w_ih, w_hh, b_ih, b_hh, H, reverse):
    T, B, _ = x.shape

    def step(carry, x_t):
        h, c = carry
        gates = x_t @ w_ih.T + h @ w_hh.T + b_ih + b_hh
        i = jax.nn.sigmoid(gates[:, :H])
        f = jax.nn.sigmoid(gates[:, H:2 * H])
        g = jnp.tanh(gates[:, 2 * H:3 * H])
        o = jax.nn.sigmoid(gates[:, 3 * H:])
        c = f * c + i * g
        h = o * jnp.tanh(c)
        return (h, c), h

    xs = x[::-1] if reverse else x
    (h, _), ys = jax.lax.scan(step, (jnp.zeros((B, H)), jnp.zeros((B, H))), xs)
    if reverse:
        ys = ys[::-1]
    return ys, h


def _ref_forward(x, params, H):
    y0f, _ = _ref_lstm_direction(x, *params["l0_fwd"], H, False)
    y0b, _ = _ref_lstm_direction(x, *params["l0_bwd"], H, True)
    y0 = jnp.concatenate([y0f, y0b], axis=-1)
    _, h1f = _ref_lstm_direction(y0, *params["l1_fwd"], H, False)
    _, h1b = _ref_lstm_direction(y0, *params["l1_bwd"], H, True)
    hidden = jnp.concatenate([h1f, h1b], axis=-1)
    return hidden @ params["fc_w"].T + params["fc_b"]


# --------------------------------------------------------------------------
# Parameter init (deterministic, PyTorch-shaped)
# --------------------------------------------------------------------------
def init_params(key, embedding_dim, hidden_dim):
    H = hidden_dim
    k = 1.0 / jnp.sqrt(jnp.float32(H))

    def uni(key, shape):
        return jax.random.uniform(key, shape, jnp.float32, -k, k)

    params = {}
    din_per_layer = {"l0": embedding_dim, "l1": 2 * H}
    for name in ("l0_fwd", "l0_bwd", "l1_fwd", "l1_bwd"):
        din = din_per_layer[name[:2]]
        key, k1, k2, k3, k4 = jax.random.split(key, 5)
        params[name] = (uni(k1, (4 * H, din)),   # weight_ih
                        uni(k2, (4 * H, H)),     # weight_hh
                        uni(k3, (4 * H,)),       # bias_ih
                        uni(k4, (4 * H,)))       # bias_hh
    key, k1, k2 = jax.random.split(key, 3)
    kf = 1.0 / jnp.sqrt(jnp.float32(2 * H))
    params["fc_w"] = jax.random.uniform(k1, (1, 2 * H), jnp.float32, -kf, kf)
    params["fc_b"] = jax.random.uniform(k2, (1,), jnp.float32, -kf, kf)
    return params


# --------------------------------------------------------------------------
if __name__ == "__main__":
    SEQ, BATCH, EMB, HID = 8, 2, 32, 32

    key = jax.random.PRNGKey(0)
    key, kx = jax.random.split(key)
    x = jax.random.normal(kx, (SEQ, BATCH, EMB), jnp.float32)   # "embedding" input
    params = init_params(key, EMB, HID)

    out = my_lstm_forward(x, params, HID)
    out = jax.block_until_ready(out)

    ref = _ref_forward(x, params, HID)
    assert out.shape == (BATCH, 1), out.shape
    assert jnp.allclose(out, ref, rtol=1e-4, atol=1e-4), (out, ref)

    print("KERNEL_OK")
</pallas_src>

<mosaic_0001>
module attributes {stable_mosaic.version = 11 : i64} {
  func.func @_fused_bilstm_kernel(%arg0: memref<16x128xf32, #tpu.memory_space<vmem>>, %arg1: memref<16x128xf32, #tpu.memory_space<vmem>>, %arg2: memref<32x128xf32, #tpu.memory_space<vmem>>, %arg3: memref<32x128xf32, #tpu.memory_space<vmem>>, %arg4: memref<32x128xf32, #tpu.memory_space<vmem>>, %arg5: memref<32x128xf32, #tpu.memory_space<vmem>>, %arg6: memref<1x128xf32, #tpu.memory_space<vmem>>, %arg7: memref<32x128xf32, #tpu.memory_space<vmem>>, %arg8: memref<32x128xf32, #tpu.memory_space<vmem>>, %arg9: memref<32x128xf32, #tpu.memory_space<vmem>>, %arg10: memref<1x128xf32, #tpu.memory_space<vmem>>, %arg11: memref<32x128xf32, #tpu.memory_space<vmem>>, %arg12: memref<1x32xf32, #tpu.memory_space<vmem>>, %arg13: memref<1x32xf32, #tpu.memory_space<vmem>>, %arg14: memref<1x1xf32, #tpu.memory_space<vmem>>, %arg15: memref<2x1xf32, #tpu.memory_space<vmem>>, %arg16: memref<16x32xf32, #tpu.memory_space<vmem>>, %arg17: memref<16x32xf32, #tpu.memory_space<vmem>>, %arg18: memref<16x128xf32, #tpu.memory_space<vmem>>, %arg19: memref<16x128xf32, #tpu.memory_space<vmem>>) attributes {dimension_semantics = [], scalar_prefetch = 0 : i64, scratch_operands = 4 : i64, tpu.core_type = #tpu.core_type<tc>} {
    %c0 = arith.constant 0 : index
    %c0_0 = arith.constant 0 : index
    %0 = vector.load %arg2[%c0, %c0_0] : memref<32x128xf32, #tpu.memory_space<vmem>>, vector<32x128xf32>
    %cst = arith.constant 0.000000e+00 : f32
    %1 = vector.broadcast %cst : f32 to vector<2x32xf32>
    %c0_i32 = arith.constant 0 : i32
    %c2_i32 = arith.constant 2 : i32
    %2 = arith.muli %c0_i32, %c2_i32 : i32
    %3 = arith.index_cast %2 : i32 to index
    %c0_1 = arith.constant 0 : index
    %4 = vector.load %arg0[%3, %c0_1] : memref<16x128xf32, #tpu.memory_space<vmem>>, vector<2x128xf32>
    %cst_2 = arith.constant dense<0.000000e+00> : vector<2x128xf32>
    %5 = tpu.matmul %1, %0, %cst_2 {dimension_numbers = #tpu.dot_dimension_numbers<[1], [0], [0], [1], [0, 0, 1, 1], [], []>} : vector<2x32xf32>, vector<32x128xf32>, vector<2x128xf32> -> vector<2x128xf32>
    %6 = arith.addf %4, %5 : vector<2x128xf32>
    %7 = vector.extract_strided_slice %6 {offsets = [0, 0], sizes = [2, 32], strides = [1, 1]} : vector<2x128xf32> to vector<2x32xf32>
    %8 = arith.negf %7 : vector<2x32xf32>
    %9 = math.exp %8 : vector<2x32xf32>
    %cst_3 = arith.constant 1.000000e+00 : f32
    %10 = vector.broadcast %cst_3 : f32 to vector<2x32xf32>
    %11 = arith.addf %10, %9 : vector<2x32xf32>
    %12 = arith.divf %10, %11 : vector<2x32xf32>
    %13 = vector.extract_strided_slice %6 {offsets = [0, 32], sizes = [2, 32], strides = [1, 1]} : vector<2x128xf32> to vector<2x32xf32>
    %14 = arith.negf %13 : vector<2x32xf32>
    %15 = math.exp %14 : vector<2x32xf32>
    %cst_4 = arith.constant 1.000000e+00 : f32
    %16 = vector.broadcast %cst_4 : f32 to vector<2x32xf32>
    %17 = arith.addf %16, %15 : vector<2x32xf32>
    %18 = arith.divf %16, %17 : vector<2x32xf32>
    %19 = vector.extract_strided_slice %6 {offsets = [0, 64], sizes = [2, 32], strides = [1, 1]} : vector<2x128xf32> to vector<2x32xf32>
    %20 = math.tanh %19 : vector<2x32xf32>
    %21 = vector.extract_strided_slice %6 {offsets = [0, 96], sizes = [2, 32], strides = [1, 1]} : vector<2x128xf32> to vector<2x32xf32>
    %22 = arith.negf %21 : vector<2x32xf32>
    %23 = math.exp %22 : vector<2x32xf32>
    %cst_5 = arith.constant 1.000000e+00 : f32
    %24 = vector.broadcast %cst_5 : f32 to vector<2x32xf32>
    %25 = arith.addf %24, %23 : vector<2x32xf32>
    %26 = arith.divf %24, %25 : vector<2x32xf32>
    %27 = arith.mulf %18, %1 : vector<2x32xf32>
    %28 = arith.mulf %12, %20 : vector<2x32xf32>
    %29 = arith.addf %27, %28 : vector<2x32xf32>
    %30 = math.tanh %29 : vector<2x32xf32>
    %31 = arith.mulf %26, %30 : vector<2x32xf32>
    %c2_i32_6 = arith.constant 2 : i32
    %32 = arith.muli %c0_i32, %c2_i32_6 : i32
    %33 = arith.index_cast %32 : i32 to index
    %c0_7 = arith.constant 0 : index
    %34 = vector.load %arg16[%33, %c0_7] : memref<16x32xf32, #tpu.memory_space<vmem>>, vector<2x32xf32>
    tpu.vector_store %arg16[%33, %c0_7], %31 {strides = array<i32>} : memref<16x32xf32, #tpu.memory_space<vmem>>, vector<2x32xf32>,
    %c1_i32 = arith.constant 1 : i32
    %c2_i32_8 = arith.constant 2 : i32
    %35 = arith.muli %c1_i32, %c2_i32_8 : i32
    %36 = arith.index_cast %35 : i32 to index
    %c0_9 = arith.constant 0 : index
    %37 = vector.load %arg0[%36, %c0_9] : memref<16x128xf32, #tpu.memory_space<vmem>>, vector<2x128xf32>
    %cst_10 = arith.constant dense<0.000000e+00> : vector<2x128xf32>
    %38 = tpu.matmul %31, %0, %cst_10 {dimension_numbers = #tpu.dot_dimension_numbers<[1], [0], [0], [1], [0, 0, 1, 1], [], []>} : vector<2x32xf32>, vector<32x128xf32>, vector<2x128xf32> -> vector<2x128xf32>
    %39 = arith.addf %37, %38 : vector<2x128xf32>
    %40 = vector.extract_strided_slice %39 {offsets = [0, 0], sizes = [2, 32], strides = [1, 1]} : vector<2x128xf32> to vector<2x32xf32>
    %41 = arith.negf %40 : vector<2x32xf32>
    %42 = math.exp %41 : vector<2x32xf32>
    %cst_11 = arith.constant 1.000000e+00 : f32
    %43 = vector.broadcast %cst_11 : f32 to vector<2x32xf32>
    %44 = arith.addf %43, %42 : vector<2x32xf32>
    %45 = arith.divf %43, %44 : vector<2x32xf32>
    %46 = vector.extract_strided_slice %39 {offsets = [0, 32], sizes = [2, 32], strides = [1, 1]} : vector<2x128xf32> to vector<2x32xf32>
    %47 = arith.negf %46 : vector<2x32xf32>
    %48 = math.exp %47 : vector<2x32xf32>
    %cst_12 = arith.constant 1.000000e+00 : f32
    %49 = vector.broadcast %cst_12 : f32 to vector<2x32xf32>
    %50 = arith.addf %49, %48 : vector<2x32xf32>
    %51 = arith.divf %49, %50 : vector<2x32xf32>
    %52 = vector.extract_strided_slice %39 {offsets = [0, 64], sizes = [2, 32], strides = [1, 1]} : vector<2x128xf32> to vector<2x32xf32>
    %53 = math.tanh %52 : vector<2x32xf32>
    %54 = vector.extract_strided_slice %39 {offsets = [0, 96], sizes = [2, 32], strides = [1, 1]} : vector<2x128xf32> to vector<2x32xf32>
    %55 = arith.negf %54 : vector<2x32xf32>
    %56 = math.exp %55 : vector<2x32xf32>
    %cst_13 = arith.constant 1.000000e+00 : f32
    %57 = vector.broadcast %cst_13 : f32 to vector<2x32xf32>
    %58 = arith.addf %57, %56 : vector<2x32xf32>
    %59 = arith.divf %57, %58 : vector<2x32xf32>
    %60 = arith.mulf %51, %29 : vector<2x32xf32>
    %61 = arith.mulf %45, %53 : vector<2x32xf32>
    %62 = arith.addf %60, %61 : vector<2x32xf32>
    %63 = math.tanh %62 : vector<2x32xf32>
    %64 = arith.mulf %59, %63 : vector<2x32xf32>
    %c2_i32_14 = arith.constant 2 : i32
    %65 = arith.muli %c1_i32, %c2_i32_14 : i32
    %66 = arith.index_cast %65 : i32 to index
    %c0_15 = arith.constant 0 : index
    %67 = vector.load %arg16[%66, %c0_15] : memref<16x32xf32, #tpu.memory_space<vmem>>, vector<2x32xf32>
    tpu.vector_store %arg16[%66, %c0_15], %64 {strides = array<i32>} : memref<16x32xf32, #tpu.memory_space<vmem>>, vector<2x32xf32>,
    %c2_i32_16 = arith.constant 2 : i32
    %c2_i32_17 = arith.constant 2 : i32
    %68 = arith.muli %c2_i32_16, %c2_i32_17 : i32
    %69 = arith.index_cast %68 : i32 to index
    %c0_18 = arith.constant 0 : index
    %70 = vector.load %arg0[%69, %c0_18] : memref<16x128xf32, #tpu.memory_space<vmem>>, vector<2x128xf32>
    %cst_19 = arith.constant dense<0.000000e+00> : vector<2x128xf32>
    %71 = tpu.matmul %64, %0, %cst_19 {dimension_numbers = #tpu.dot_dimension_numbers<[1], [0], [0], [1], [0, 0, 1, 1], [], []>} : vector<2x32xf32>, vector<32x128xf32>, vector<2x128xf32> -> vector<2x128xf32>
    %72 = arith.addf %70, %71 : vector<2x128xf32>
    %73 = vector.extract_strided_slice %72 {offsets = [0, 0], sizes = [2, 32], strides = [1, 1]} : vector<2x128xf32> to vector<2x32xf32>
    %74 = arith.negf %73 : vector<2x32xf32>
    %75 = math.exp %74 : vector<2x32xf32>
    %cst_20 = arith.constant 1.000000e+00 : f32
    %76 = vector.broadcast %cst_20 : f32 to vector<2x32xf32>
    %77 = arith.addf %76, %75 : vector<2x32xf32>
    %78 = arith.divf %76, %77 : vector<2x32xf32>
    %79 = vector.extract_strided_slice %72 {offsets = [0, 32], sizes = [2, 32], strides = [1, 1]} : vector<2x128xf32> to vector<2x32xf32>
    %80 = arith.negf %79 : vector<2x32xf32>
    %81 = math.exp %80 : vector<2x32xf32>
    %cst_21 = arith.constant 1.000000e+00 : f32
    %82 = vector.broadcast %cst_21 : f32 to vector<2x32xf32>
    %83 = arith.addf %82, %81 : vector<2x32xf32>
    %84 = arith.divf %82, %83 : vector<2x32xf32>
    %85 = vector.extract_strided_slice %72 {offsets = [0, 64], sizes = [2, 32], strides = [1, 1]} : vector<2x128xf32> to vector<2x32xf32>
    %86 = math.tanh %85 : vector<2x32xf32>
    %87 = vector.extract_strided_slice %72 {offsets = [0, 96], sizes = [2, 32], strides = [1, 1]} : vector<2x128xf32> to vector<2x32xf32>
    %88 = arith.negf %87 : vector<2x32xf32>
    %89 = math.exp %88 : vector<2x32xf32>
    %cst_22 = arith.constant 1.000000e+00 : f32
    %90 = vector.broadcast %cst_22 : f32 to vector<2x32xf32>
    %91 = arith.addf %90, %89 : vector<2x32xf32>
    %92 = arith.divf %90, %91 : vector<2x32xf32>
    %93 = arith.mulf %84, %62 : vector<2x32xf32>
    %94 = arith.mulf %78, %86 : vector<2x32xf32>
    %95 = arith.addf %93, %94 : vector<2x32xf32>
    %96 = math.tanh %95 : vector<2x32xf32>
    %97 = arith.mulf %92, %96 : vector<2x32xf32>
    %c2_i32_23 = arith.constant 2 : i32
    %98 = arith.muli %c2_i32_16, %c2_i32_23 : i32
    %99 = arith.index_cast %98 : i32 to index
    %c0_24 = arith.constant 0 : index
    %100 = vector.load %arg16[%99, %c0_24] : memref<16x32xf32, #tpu.memory_space<vmem>>, vector<2x32xf32>
    tpu.vector_store %arg16[%99, %c0_24], %97 {strides = array<i32>} : memref<16x32xf32, #tpu.memory_space<vmem>>, vector<2x32xf32>,
    %c3_i32 = arith.constant 3 : i32
    %c2_i32_25 = arith.constant 2 : i32
    %101 = arith.muli %c3_i32, %c2_i32_25 : i32
    %102 = arith.index_cast %101 : i32 to index
    %c0_26 = arith.constant 0 : index
    %103 = vector.load %arg0[%102, %c0_26] : memref<16x128xf32, #tpu.memory_space<vmem>>, vector<2x128xf32>
    %cst_27 = arith.constant dense<0.000000e+00> : vector<2x128xf32>
    %104 = tpu.matmul %97, %0, %cst_27 {dimension_numbers = #tpu.dot_dimension_numbers<[1], [0], [0], [1], [0, 0, 1, 1], [], []>} : vector<2x32xf32>, vector<32x128xf32>, vector<2x128xf32> -> vector<2x128xf32>
    %105 = arith.addf %103, %104 : vector<2x128xf32>
    %106 = vector.extract_strided_slice %105 {offsets = [0, 0], sizes = [2, 32], strides = [1, 1]} : vector<2x128xf32> to vector<2x32xf32>
    %107 = arith.negf %106 : vector<2x32xf32>
    %108 = math.exp %107 : vector<2x32xf32>
    %cst_28 = arith.constant 1.000000e+00 : f32
    %109 = vector.broadcast %cst_28 : f32 to vector<2x32xf32>
    %110 = arith.addf %109, %108 : vector<2x32xf32>
    %111 = arith.divf %109, %110 : vector<2x32xf32>
    %112 = vector.extract_strided_slice %105 {offsets = [0, 32], sizes = [2, 32], strides = [1, 1]} : vector<2x128xf32> to vector<2x32xf32>
    %113 = arith.negf %112 : vector<2x32xf32>
    %114 = math.exp %113 : vector<2x32xf32>
    %cst_29 = arith.constant 1.000000e+00 : f32
    %115 = vector.broadcast %cst_29 : f32 to vector<2x32xf32>
    %116 = arith.addf %115, %114 : vector<2x32xf32>
    %117 = arith.divf %115, %116 : vector<2x32xf32>
    %118 = vector.extract_strided_slice %105 {offsets = [0, 64], sizes = [2, 32], strides = [1, 1]} : vector<2x128xf32> to vector<2x32xf32>
    %119 = math.tanh %118 : vector<2x32xf32>
    %120 = vector.extract_strided_slice %105 {offsets = [0, 96], sizes = [2, 32], strides = [1, 1]} : vector<2x128xf32> to vector<2x32xf32>
    %121 = arith.negf %120 : vector<2x32xf32>
    %122 = math.exp %121 : vector<2x32xf32>
    %cst_30 = arith.constant 1.000000e+00 : f32
    %123 = vector.broadcast %cst_30 : f32 to vector<2x32xf32>
    %124 = arith.addf %123, %122 : vector<2x32xf32>
    %125 = arith.divf %123, %124 : vector<2x32xf32>
    %126 = arith.mulf %117, %95 : vector<2x32xf32>
    %127 = arith.mulf %111, %119 : vector<2x32xf32>
    %128 = arith.addf %126, %127 : vector<2x32xf32>
    %129 = math.tanh %128 : vector<2x32xf32>
    %130 = arith.mulf %125, %129 : vector<2x32xf32>
    %c2_i32_31 = arith.constant 2 : i32
    %131 = arith.muli %c3_i32, %c2_i32_31 : i32
    %132 = arith.index_cast %131 : i32 to index
    %c0_32 = arith.constant 0 : index
    %133 = vector.load %arg16[%132, %c0_32] : memref<16x32xf32, #tpu.memory_space<vmem>>, vector<2x32xf32>
    tpu.vector_store %arg16[%132, %c0_32], %130 {strides = array<i32>} : memref<16x32xf32, #tpu.memory_space<vmem>>, vector<2x32xf32>,
    %c4_i32 = arith.constant 4 : i32
    %c2_i32_33 = arith.constant 2 : i32
    %134 = arith.muli %c4_i32, %c2_i32_33 : i32
    %135 = arith.index_cast %134 : i32 to index
    %c0_34 = arith.constant 0 : index
    %136 = vector.load %arg0[%135, %c0_34] : memref<16x128xf32, #tpu.memory_space<vmem>>, vector<2x128xf32>
    %cst_35 = arith.constant dense<0.000000e+00> : vector<2x128xf32>
    %137 = tpu.matmul %130, %0, %cst_35 {dimension_numbers = #tpu.dot_dimension_numbers<[1], [0], [0], [1], [0, 0, 1, 1], [], []>} : vector<2x32xf32>, vector<32x128xf32>, vector<2x128xf32> -> vector<2x128xf32>
    %138 = arith.addf %136, %137 : vector<2x128xf32>
    %139 = vector.extract_strided_slice %138 {offsets = [0, 0], sizes = [2, 32], strides = [1, 1]} : vector<2x128xf32> to vector<2x32xf32>
    %140 = arith.negf %139 : vector<2x32xf32>
    %141 = math.exp %140 : vector<2x32xf32>
    %cst_36 = arith.constant 1.000000e+00 : f32
    %142 = vector.broadcast %cst_36 : f32 to vector<2x32xf32>
    %143 = arith.addf %142, %141 : vector<2x32xf32>
    %144 = arith.divf %142, %143 : vector<2x32xf32>
    %145 = vector.extract_strided_slice %138 {offsets = [0, 32], sizes = [2, 32], strides = [1, 1]} : vector<2x128xf32> to vector<2x32xf32>
    %146 = arith.negf %145 : vector<2x32xf32>
    %147 = math.exp %146 : vector<2x32xf32>
    %cst_37 = arith.constant 1.000000e+00 : f32
    %148 = vector.broadcast %cst_37 : f32 to vector<2x32xf32>
    %149 = arith.addf %148, %147 : vector<2x32xf32>
    %150 = arith.divf %148, %149 : vector<2x32xf32>
    %151 = vector.extract_strided_slice %138 {offsets = [0, 64], sizes = [2, 32], strides = [1, 1]} : vector<2x128xf32> to vector<2x32xf32>
    %152 = math.tanh %151 : vector<2x32xf32>
    %153 = vector.extract_strided_slice %138 {offsets = [0, 96], sizes = [2, 32], strides = [1, 1]} : vector<2x128xf32> to vector<2x32xf32>
    %154 = arith.negf %153 : vector<2x32xf32>
    %155 = math.exp %154 : vector<2x32xf32>
    %cst_38 = arith.constant 1.000000e+00 : f32
    %156 = vector.broadcast %cst_38 : f32 to vector<2x32xf32>
    %157 = arith.addf %156, %155 : vector<2x32xf32>
    %158 = arith.divf %156, %157 : vector<2x32xf32>
    %159 = arith.mulf %150, %128 : vector<2x32xf32>
    %160 = arith.mulf %144, %152 : vector<2x32xf32>
    %161 = arith.addf %159, %160 : vector<2x32xf32>
    %162 = math.tanh %161 : vector<2x32xf32>
    %163 = arith.mulf %158, %162 : vector<2x32xf32>
    %c2_i32_39 = arith.constant 2 : i32
    %164 = arith.muli %c4_i32, %c2_i32_39 : i32
    %165 = arith.index_cast %164 : i32 to index
    %c0_40 = arith.constant 0 : index
    %166 = vector.load %arg16[%165, %c0_40] : memref<16x32xf32, #tpu.memory_space<vmem>>, vector<2x32xf32>
    tpu.vector_store %arg16[%165, %c0_40], %163 {strides = array<i32>} : memref<16x32xf32, #tpu.memory_space<vmem>>, vector<2x32xf32>,
    %c5_i32 = arith.constant 5 : i32
    %c2_i32_41 = arith.constant 2 : i32
    %167 = arith.muli %c5_i32, %c2_i32_41 : i32
    %168 = arith.index_cast %167 : i32 to index
    %c0_42 = arith.constant 0 : index
    %169 = vector.load %arg0[%168, %c0_42] : memref<16x128xf32, #tpu.memory_space<vmem>>, vector<2x128xf32>
    %cst_43 = arith.constant dense<0.000000e+00> : vector<2x128xf32>
    %170 = tpu.matmul %163, %0, %cst_43 {dimension_numbers = #tpu.dot_dimension_numbers<[1], [0], [0], [1], [0, 0, 1, 1], [], []>} : vector<2x32xf32>, vector<32x128xf32>, vector<2x128xf32> -> vector<2x128xf32>
    %171 = arith.addf %169, %170 : vector<2x128xf32>
    %172 = vector.extract_strided_slice %171 {offsets = [0, 0], sizes = [2, 32], strides = [1, 1]} : vector<2x128xf32> to vector<2x32xf32>
    %173 = arith.negf %172 : vector<2x32xf32>
    %174 = math.exp %173 : vector<2x32xf32>
    %cst_44 = arith.constant 1.000000e+00 : f32
    %175 = vector.broadcast %cst_44 : f32 to vector<2x32xf32>
    %176 = arith.addf %175, %174 : vector<2x32xf32>
    %177 = arith.divf %175, %176 : vector<2x32xf32>
    %178 = vector.extract_strided_slice %171 {offsets = [0, 32], sizes = [2, 32], strides = [1, 1]} : vector<2x128xf32> to vector<2x32xf32>
    %179 = arith.negf %178 : vector<2x32xf32>
    %180 = math.exp %179 : vector<2x32xf32>
    %cst_45 = arith.constant 1.000000e+00 : f32
    %181 = vector.broadcast %cst_45 : f32 to vector<2x32xf32>
    %182 = arith.addf %181, %180 : vector<2x32xf32>
    %183 = arith.divf %181, %182 : vector<2x32xf32>
    %184 = vector.extract_strided_slice %171 {offsets = [0, 64], sizes = [2, 32], strides = [1, 1]} : vector<2x128xf32> to vector<2x32xf32>
    %185 = math.tanh %184 : vector<2x32xf32>
    %186 = vector.extract_strided_slice %171 {offsets = [0, 96], sizes = [2, 32], strides = [1, 1]} : vector<2x128xf32> to vector<2x32xf32>
    %187 = arith.negf %186 : vector<2x32xf32>
    %188 = math.exp %187 : vector<2x32xf32>
    %cst_46 = arith.constant 1.000000e+00 : f32
    %189 = vector.broadcast %cst_46 : f32 to vector<2x32xf32>
    %190 = arith.addf %189, %188 : vector<2x32xf32>
    %191 = arith.divf %189, %190 : vector<2x32xf32>
    %192 = arith.mulf %183, %161 : vector<2x32xf32>
    %193 = arith.mulf %177, %185 : vector<2x32xf32>
    %194 = arith.addf %192, %193 : vector<2x32xf32>
    %195 = math.tanh %194 : vector<2x32xf32>
    %196 = arith.mulf %191, %195 : vector<2x32xf32>
    %c2_i32_47 = arith.constant 2 : i32
    %197 = arith.muli %c5_i32, %c2_i32_47 : i32
    %198 = arith.index_cast %197 : i32 to index
    %c0_48 = arith.constant 0 : index
    %199 = vector.load %arg16[%198, %c0_48] : memref<16x32xf32, #tpu.memory_space<vmem>>, vector<2x32xf32>
    tpu.vector_store %arg16[%198, %c0_48], %196 {strides = array<i32>} : memref<16x32xf32, #tpu.memory_space<vmem>>, vector<2x32xf32>,
    %c6_i32 = arith.constant 6 : i32
    %c2_i32_49 = arith.constant 2 : i32
    %200 = arith.muli %c6_i32, %c2_i32_49 : i32
    %201 = arith.index_cast %200 : i32 to index
    %c0_50 = arith.constant 0 : index
    %202 = vector.load %arg0[%201, %c0_50] : memref<16x128xf32, #tpu.memory_space<vmem>>, vector<2x128xf32>
    %cst_51 = arith.constant dense<0.000000e+00> : vector<2x128xf32>
    %203 = tpu.matmul %196, %0, %cst_51 {dimension_numbers = #tpu.dot_dimension_numbers<[1], [0], [0], [1], [0, 0, 1, 1], [], []>} : vector<2x32xf32>, vector<32x128xf32>, vector<2x128xf32> -> vector<2x128xf32>
    %204 = arith.addf %202, %203 : vector<2x128xf32>
    %205 = vector.extract_strided_slice %204 {offsets = [0, 0], sizes = [2, 32], strides = [1, 1]} : vector<2x128xf32> to vector<2x32xf32>
    %206 = arith.negf %205 : vector<2x32xf32>
    %207 = math.exp %206 : vector<2x32xf32>
    %cst_52 = arith.constant 1.000000e+00 : f32
    %208 = vector.broadcast %cst_52 : f32 to vector<2x32xf32>
    %209 = arith.addf %208, %207 : vector<2x32xf32>
    %210 = arith.divf %208, %209 : vector<2x32xf32>
    %211 = vector.extract_strided_slice %204 {offsets = [0, 32], sizes = [2, 32], strides = [1, 1]} : vector<2x128xf32> to vector<2x32xf32>
    %212 = arith.negf %211 : vector<2x32xf32>
    %213 = math.exp %212 : vector<2x32xf32>
    %cst_53 = arith.constant 1.000000e+00 : f32
    %214 = vector.broadcast %cst_53 : f32 to vector<2x32xf32>
    %215 = arith.addf %214, %213 : vector<2x32xf32>
    %216 = arith.divf %214, %215 : vector<2x32xf32>
    %217 = vector.extract_strided_slice %204 {offsets = [0, 64], sizes = [2, 32], strides = [1, 1]} : vector<2x128xf32> to vector<2x32xf32>
    %218 = math.tanh %217 : vector<2x32xf32>
    %219 = vector.extract_strided_slice %204 {offsets = [0, 96], sizes = [2, 32], strides = [1, 1]} : vector<2x128xf32> to vector<2x32xf32>
    %220 = arith.negf %219 : vector<2x32xf32>
    %221 = math.exp %220 : vector<2x32xf32>
    %cst_54 = arith.constant 1.000000e+00 : f32
    %222 = vector.broadcast %cst_54 : f32 to vector<2x32xf32>
    %223 = arith.addf %222, %221 : vector<2x32xf32>
    %224 = arith.divf %222, %223 : vector<2x32xf32>
    %225 = arith.mulf %216, %194 : vector<2x32xf32>
    %226 = arith.mulf %210, %218 : vector<2x32xf32>
    %227 = arith.addf %225, %226 : vector<2x32xf32>
    %228 = math.tanh %227 : vector<2x32xf32>
    %229 = arith.mulf %224, %228 : vector<2x32xf32>
    %c2_i32_55 = arith.constant 2 : i32
    %230 = arith.muli %c6_i32, %c2_i32_55 : i32
    %231 = arith.index_cast %230 : i32 to index
    %c0_56 = arith.constant 0 : index
    %232 = vector.load %arg16[%231, %c0_56] : memref<16x32xf32, #tpu.memory_space<vmem>>, vector<2x32xf32>
    tpu.vector_store %arg16[%231, %c0_56], %229 {strides = array<i32>} : memref<16x32xf32, #tpu.memory_space<vmem>>, vector<2x32xf32>,
    %c7_i32 = arith.constant 7 : i32
    %c2_i32_57 = arith.constant 2 : i32
    %233 = arith.muli %c7_i32, %c2_i32_57 : i32
    %234 = arith.index_cast %233 : i32 to index
    %c0_58 = arith.constant 0 : index
    %235 = vector.load %arg0[%234, %c0_58] : memref<16x128xf32, #tpu.memory_space<vmem>>, vector<2x128xf32>
    %cst_59 = arith.constant dense<0.000000e+00> : vector<2x128xf32>
    %236 = tpu.matmul %229, %0, %cst_59 {dimension_numbers = #tpu.dot_dimension_numbers<[1], [0], [0], [1], [0, 0, 1, 1], [], []>} : vector<2x32xf32>, vector<32x128xf32>, vector<2x128xf32> -> vector<2x128xf32>
    %237 = arith.addf %235, %236 : vector<2x128xf32>
    %238 = vector.extract_strided_slice %237 {offsets = [0, 0], sizes = [2, 32], strides = [1, 1]} : vector<2x128xf32> to vector<2x32xf32>
    %239 = arith.negf %238 : vector<2x32xf32>
    %240 = math.exp %239 : vector<2x32xf32>
    %cst_60 = arith.constant 1.000000e+00 : f32
    %241 = vector.broadcast %cst_60 : f32 to vector<2x32xf32>
    %242 = arith.addf %241, %240 : vector<2x32xf32>
    %243 = arith.divf %241, %242 : vector<2x32xf32>
    %244 = vector.extract_strided_slice %237 {offsets = [0, 32], sizes = [2, 32], strides = [1, 1]} : vector<2x128xf32> to vector<2x32xf32>
    %245 = arith.negf %244 : vector<2x32xf32>
    %246 = math.exp %245 : vector<2x32xf32>
    %cst_61 = arith.constant 1.000000e+00 : f32
    %247 = vector.broadcast %cst_61 : f32 to vector<2x32xf32>
    %248 = arith.addf %247, %246 : vector<2x32xf32>
    %249 = arith.divf %247, %248 : vector<2x32xf32>
    %250 = vector.extract_strided_slice %237 {offsets = [0, 64], sizes = [2, 32], strides = [1, 1]} : vector<2x128xf32> to vector<2x32xf32>
    %251 = math.tanh %250 : vector<2x32xf32>
    %252 = vector.extract_strided_slice %237 {offsets = [0, 96], sizes = [2, 32], strides = [1, 1]} : vector<2x128xf32> to vector<2x32xf32>
    %253 = arith.negf %252 : vector<2x32xf32>
    %254 = math.exp %253 : vector<2x32xf32>
    %cst_62 = arith.constant 1.000000e+00 : f32
    %255 = vector.broadcast %cst_62 : f32 to vector<2x32xf32>
    %256 = arith.addf %255, %254 : vector<2x32xf32>
    %257 = arith.divf %255, %256 : vector<2x32xf32>
    %258 = arith.mulf %249, %227 : vector<2x32xf32>
    %259 = arith.mulf %243, %251 : vector<2x32xf32>
    %260 = arith.addf %258, %259 : vector<2x32xf32>
    %261 = math.tanh %260 : vector<2x32xf32>
    %262 = arith.mulf %257, %261 : vector<2x32xf32>
    %c2_i32_63 = arith.constant 2 : i32
    %263 = arith.muli %c7_i32, %c2_i32_63 : i32
    %264 = arith.index_cast %263 : i32 to index
    %c0_64 = arith.constant 0 : index
    %265 = vector.load %arg16[%264, %c0_64] : memref<16x32xf32, #tpu.memory_space<vmem>>, vector<2x32xf32>
    tpu.vector_store %arg16[%264, %c0_64], %262 {strides = array<i32>} : memref<16x32xf32, #tpu.memory_space<vmem>>, vector<2x32xf32>,
    %c8_i32 = arith.constant 8 : i32
    %c0_65 = arith.constant 0 : index
    %c0_66 = arith.constant 0 : index
    %266 = vector.load %arg3[%c0_65, %c0_66] : memref<32x128xf32, #tpu.memory_space<vmem>>, vector<32x128xf32>
    %cst_67 = arith.constant 0.000000e+00 : f32
    %267 = vector.broadcast %cst_67 : f32 to vector<2x32xf32>
    %c0_i32_68 = arith.constant 0 : i32
    %c7_i32_69 = arith.constant 7 : i32
    %268 = arith.subi %c7_i32_69, %c0_i32_68 : i32
    %c2_i32_70 = arith.constant 2 : i32
    %269 = arith.muli %268, %c2_i32_70 : i32
    %270 = arith.index_cast %269 : i32 to index
    %c0_71 = arith.constant 0 : index
    %271 = vector.load %arg1[%270, %c0_71] : memref<16x128xf32, #tpu.memory_space<vmem>>, vector<2x128xf32>
    %cst_72 = arith.constant dense<0.000000e+00> : vector<2x128xf32>
    %272 = tpu.matmul %267, %266, %cst_72 {dimension_numbers = #tpu.dot_dimension_numbers<[1], [0], [0], [1], [0, 0, 1, 1], [], []>} : vector<2x32xf32>, vector<32x128xf32>, vector<2x128xf32> -> vector<2x128xf32>
    %273 = arith.addf %271, %272 : vector<2x128xf32>
    %274 = vector.extract_strided_slice %273 {offsets = [0, 0], sizes = [2, 32], strides = [1, 1]} : vector<2x128xf32> to vector<2x32xf32>
    %275 = arith.negf %274 : vector<2x32xf32>
    %276 = math.exp %275 : vector<2x32xf32>
    %cst_73 = arith.constant 1.000000e+00 : f32
    %277 = vector.broadcast %cst_73 : f32 to vector<2x32xf32>
    %278 = arith.addf %277, %276 : vector<2x32xf32>
    %279 = arith.divf %277, %278 : vector<2x32xf32>
    %280 = vector.extract_strided_slice %273 {offsets = [0, 32], sizes = [2, 32], strides = [1, 1]} : vector<2x128xf32> to vector<2x32xf32>
    %281 = arith.negf %280 : vector<2x32xf32>
    %282 = math.exp %281 : vector<2x32xf32>
    %cst_74 = arith.constant 1.000000e+00 : f32
    %283 = vector.broadcast %cst_74 : f32 to vector<2x32xf32>
    %284 = arith.addf %283, %282 : vector<2x32xf32>
    %285 = arith.divf %283, %284 : vector<2x32xf32>
    %286 = vector.extract_strided_slice %273 {offsets = [0, 64], sizes = [2, 32], strides = [1, 1]} : vector<2x128xf32> to vector<2x32xf32>
    %287 = math.tanh %286 : vector<2x32xf32>
    %288 = vector.extract_strided_slice %273 {offsets = [0, 96], sizes = [2, 32], strides = [1, 1]} : vector<2x128xf32> to vector<2x32xf32>
    %289 = arith.negf %288 : vector<2x32xf32>
    %290 = math.exp %289 : vector<2x32xf32>
    %cst_75 = arith.constant 1.000000e+00 : f32
    %291 = vector.broadcast %cst_75 : f32 to vector<2x32xf32>
    %292 = arith.addf %291, %290 : vector<2x32xf32>
    %293 = arith.divf %291, %292 : vector<2x32xf32>
    %294 = arith.mulf %285, %267 : vector<2x32xf32>
    %295 = arith.mulf %279, %287 : vector<2x32xf32>
    %296 = arith.addf %294, %295 : vector<2x32xf32>
    %297 = math.tanh %296 : vector<2x32xf32>
    %298 = arith.mulf %293, %297 : vector<2x32xf32>
    %c2_i32_76 = arith.constant 2 : i32
    %299 = arith.muli %268, %c2_i32_76 : i32
    %300 = arith.index_cast %299 : i32 to index
    %c0_77 = arith.constant 0 : index
    %301 = vector.load %arg17[%300, %c0_77] : memref<16x32xf32, #tpu.memory_space<vmem>>, vector<2x32xf32>
    tpu.vector_store %arg17[%300, %c0_77], %298 {strides = array<i32>} : memref<16x32xf32, #tpu.memory_space<vmem>>, vector<2x32xf32>,
    %c1_i32_78 = arith.constant 1 : i32
    %c7_i32_79 = arith.constant 7 : i32
    %302 = arith.subi %c7_i32_79, %c1_i32_78 : i32
    %c2_i32_80 = arith.constant 2 : i32
    %303 = arith.muli %302, %c2_i32_80 : i32
    %304 = arith.index_cast %303 : i32 to index
    %c0_81 = arith.constant 0 : index
    %305 = vector.load %arg1[%304, %c0_81] : memref<16x128xf32, #tpu.memory_space<vmem>>, vector<2x128xf32>
    %cst_82 = arith.constant dense<0.000000e+00> : vector<2x128xf32>
    %306 = tpu.matmul %298, %266, %cst_82 {dimension_numbers = #tpu.dot_dimension_numbers<[1], [0], [0], [1], [0, 0, 1, 1], [], []>} : vector<2x32xf32>, vector<32x128xf32>, vector<2x128xf32> -> vector<2x128xf32>
    %307 = arith.addf %305, %306 : vector<2x128xf32>
    %308 = vector.extract_strided_slice %307 {offsets = [0, 0], sizes = [2, 32], strides = [1, 1]} : vector<2x128xf32> to vector<2x32xf32>
    %309 = arith.negf %308 : vector<2x32xf32>
    %310 = math.exp %309 : vector<2x32xf32>
    %cst_83 = arith.constant 1.000000e+00 : f32
    %311 = vector.broadcast %cst_83 : f32 to vector<2x32xf32>
    %312 = arith.addf %311, %310 : vector<2x32xf32>
    %313 = arith.divf %311, %312 : vector<2x32xf32>
    %314 = vector.extract_strided_slice %307 {offsets = [0, 32], sizes = [2, 32], strides = [1, 1]} : vector<2x128xf32> to vector<2x32xf32>
    %315 = arith.negf %314 : vector<2x32xf32>
    %316 = math.exp %315 : vector<2x32xf32>
    %cst_84 = arith.constant 1.000000e+00 : f32
    %317 = vector.broadcast %cst_84 : f32 to vector<2x32xf32>
    %318 = arith.addf %317, %316 : vector<2x32xf32>
    %319 = arith.divf %317, %318 : vector<2x32xf32>
    %320 = vector.extract_strided_slice %307 {offsets = [0, 64], sizes = [2, 32], strides = [1, 1]} : vector<2x128xf32> to vector<2x32xf32>
    %321 = math.tanh %320 : vector<2x32xf32>
    %322 = vector.extract_strided_slice %307 {offsets = [0, 96], sizes = [2, 32], strides = [1, 1]} : vector<2x128xf32> to vector<2x32xf32>
    %323 = arith.negf %322 : vector<2x32xf32>
    %324 = math.exp %323 : vector<2x32xf32>
    %cst_85 = arith.constant 1.000000e+00 : f32
    %325 = vector.broadcast %cst_85 : f32 to vector<2x32xf32>
    %326 = arith.addf %325, %324 : vector<2x32xf32>
    %327 = arith.divf %325, %326 : vector<2x32xf32>
    %328 = arith.mulf %319, %296 : vector<2x32xf32>
    %329 = arith.mulf %313, %321 : vector<2x32xf32>
    %330 = arith.addf %328, %329 : vector<2x32xf32>
    %331 = math.tanh %330 : vector<2x32xf32>
    %332 = arith.mulf %327, %331 : vector<2x32xf32>
    %c2_i32_86 = arith.constant 2 : i32
    %333 = arith.muli %302, %c2_i32_86 : i32
    %334 = arith.index_cast %333 : i32 to index
    %c0_87 = arith.constant 0 : index
    %335 = vector.load %arg17[%334, %c0_87] : memref<16x32xf32, #tpu.memory_space<vmem>>, vector<2x32xf32>
    tpu.vector_store %arg17[%334, %c0_87], %332 {strides = array<i32>} : memref<16x32xf32, #tpu.memory_space<vmem>>, vector<2x32xf32>,
    %c2_i32_88 = arith.constant 2 : i32
    %c7_i32_89 = arith.constant 7 : i32
    %336 = arith.subi %c7_i32_89, %c2_i32_88 : i32
    %c2_i32_90 = arith.constant 2 : i32
    %337 = arith.muli %336, %c2_i32_90 : i32
    %338 = arith.index_cast %337 : i32 to index
    %c0_91 = arith.constant 0 : index
    %339 = vector.load %arg1[%338, %c0_91] : memref<16x128xf32, #tpu.memory_space<vmem>>, vector<2x128xf32>
    %cst_92 = arith.constant dense<0.000000e+00> : vector<2x128xf32>
    %340 = tpu.matmul %332, %266, %cst_92 {dimension_numbers = #tpu.dot_dimension_numbers<[1], [0], [0], [1], [0, 0, 1, 1], [], []>} : vector<2x32xf32>, vector<32x128xf32>, vector<2x128xf32> -> vector<2x128xf32>
    %341 = arith.addf %339, %340 : vector<2x128xf32>
    %342 = vector.extract_strided_slice %341 {offsets = [0, 0], sizes = [2, 32], strides = [1, 1]} : vector<2x128xf32> to vector<2x32xf32>
    %343 = arith.negf %342 : vector<2x32xf32>
    %344 = math.exp %343 : vector<2x32xf32>
    %cst_93 = arith.constant 1.000000e+00 : f32
    %345 = vector.broadcast %cst_93 : f32 to vector<2x32xf32>
    %346 = arith.addf %345, %344 : vector<2x32xf32>
    %347 = arith.divf %345, %346 : vector<2x32xf32>
    %348 = vector.extract_strided_slice %341 {offsets = [0, 32], sizes = [2, 32], strides = [1, 1]} : vector<2x128xf32> to vector<2x32xf32>
    %349 = arith.negf %348 : vector<2x32xf32>
    %350 = math.exp %349 : vector<2x32xf32>
    %cst_94 = arith.constant 1.000000e+00 : f32
    %351 = vector.broadcast %cst_94 : f32 to vector<2x32xf32>
    %352 = arith.addf %351, %350 : vector<2x32xf32>
    %353 = arith.divf %351, %352 : vector<2x32xf32>
    %354 = vector.extract_strided_slice %341 {offsets = [0, 64], sizes = [2, 32], strides = [1, 1]} : vector<2x128xf32> to vector<2x32xf32>
    %355 = math.tanh %354 : vector<2x32xf32>
    %356 = vector.extract_strided_slice %341 {offsets = [0, 96], sizes = [2, 32], strides = [1, 1]} : vector<2x128xf32> to vector<2x32xf32>
    %357 = arith.negf %356 : vector<2x32xf32>
    %358 = math.exp %357 : vector<2x32xf32>
    %cst_95 = arith.constant 1.000000e+00 : f32
    %359 = vector.broadcast %cst_95 : f32 to vector<2x32xf32>
    %360 = arith.addf %359, %358 : vector<2x32xf32>
    %361 = arith.divf %359, %360 : vector<2x32xf32>
    %362 = arith.mulf %353, %330 : vector<2x32xf32>
    %363 = arith.mulf %347, %355 : vector<2x32xf32>
    %364 = arith.addf %362, %363 : vector<2x32xf32>
    %365 = math.tanh %364 : vector<2x32xf32>
    %366 = arith.mulf %361, %365 : vector<2x32xf32>
    %c2_i32_96 = arith.constant 2 : i32
    %367 = arith.muli %336, %c2_i32_96 : i32
    %368 = arith.index_cast %367 : i32 to index
    %c0_97 = arith.constant 0 : index
    %369 = vector.load %arg17[%368, %c0_97] : memref<16x32xf32, #tpu.memory_space<vmem>>, vector<2x32xf32>
    tpu.vector_store %arg17[%368, %c0_97], %366 {strides = array<i32>} : memref<16x32xf32, #tpu.memory_space<vmem>>, vector<2x32xf32>,
    %c3_i32_98 = arith.constant 3 : i32
    %c7_i32_99 = arith.constant 7 : i32
    %370 = arith.subi %c7_i32_99, %c3_i32_98 : i32
    %c2_i32_100 = arith.constant 2 : i32
    %371 = arith.muli %370, %c2_i32_100 : i32
    %372 = arith.index_cast %371 : i32 to index
    %c0_101 = arith.constant 0 : index
    %373 = vector.load %arg1[%372, %c0_101] : memref<16x128xf32, #tpu.memory_space<vmem>>, vector<2x128xf32>
    %cst_102 = arith.constant dense<0.000000e+00> : vector<2x128xf32>
    %374 = tpu.matmul %366, %266, %cst_102 {dimension_numbers = #tpu.dot_dimension_numbers<[1], [0], [0], [1], [0, 0, 1, 1], [], []>} : vector<2x32xf32>, vector<32x128xf32>, vector<2x128xf32> -> vector<2x128xf32>
    %375 = arith.addf %373, %374 : vector<2x128xf32>
    %376 = vector.extract_strided_slice %375 {offsets = [0, 0], sizes = [2, 32], strides = [1, 1]} : vector<2x128xf32> to vector<2x32xf32>
    %377 = arith.negf %376 : vector<2x32xf32>
    %378 = math.exp %377 : vector<2x32xf32>
    %cst_103 = arith.constant 1.000000e+00 : f32
    %379 = vector.broadcast %cst_103 : f32 to vector<2x32xf32>
    %380 = arith.addf %379, %378 : vector<2x32xf32>
    %381 = arith.divf %379, %380 : vector<2x32xf32>
    %382 = vector.extract_strided_slice %375 {offsets = [0, 32], sizes = [2, 32], strides = [1, 1]} : vector<2x128xf32> to vector<2x32xf32>
    %383 = arith.negf %382 : vector<2x32xf32>
    %384 = math.exp %383 : vector<2x32xf32>
    %cst_104 = arith.constant 1.000000e+00 : f32
    %385 = vector.broadcast %cst_104 : f32 to vector<2x32xf32>
    %386 = arith.addf %385, %384 : vector<2x32xf32>
    %387 = arith.divf %385, %386 : vector<2x32xf32>
    %388 = vector.extract_strided_slice %375 {offsets = [0, 64], sizes = [2, 32], strides = [1, 1]} : vector<2x128xf32> to vector<2x32xf32>
    %389 = math.tanh %388 : vector<2x32xf32>
    %390 = vector.extract_strided_slice %375 {offsets = [0, 96], sizes = [2, 32], strides = [1, 1]} : vector<2x128xf32> to vector<2x32xf32>
    %391 = arith.negf %390 : vector<2x32xf32>
    %392 = math.exp %391 : vector<2x32xf32>
    %cst_105 = arith.constant 1.000000e+00 : f32
    %393 = vector.broadcast %cst_105 : f32 to vector<2x32xf32>
    %394 = arith.addf %393, %392 : vector<2x32xf32>
    %395 = arith.divf %393, %394 : vector<2x32xf32>
    %396 = arith.mulf %387, %364 : vector<2x32xf32>
    %397 = arith.mulf %381, %389 : vector<2x32xf32>
    %398 = arith.addf %396, %397 : vector<2x32xf32>
    %399 = math.tanh %398 : vector<2x32xf32>
    %400 = arith.mulf %395, %399 : vector<2x32xf32>
    %c2_i32_106 = arith.constant 2 : i32
    %401 = arith.muli %370, %c2_i32_106 : i32
    %402 = arith.index_cast %401 : i32 to index
    %c0_107 = arith.constant 0 : index
    %403 = vector.load %arg17[%402, %c0_107] : memref<16x32xf32, #tpu.memory_space<vmem>>, vector<2x32xf32>
    tpu.vector_store %arg17[%402, %c0_107], %400 {strides = array<i32>} : memref<16x32xf32, #tpu.memory_space<vmem>>, vector<2x32xf32>,
    %c4_i32_108 = arith.constant 4 : i32
    %c7_i32_109 = arith.constant 7 : i32
    %404 = arith.subi %c7_i32_109, %c4_i32_108 : i32
    %c2_i32_110 = arith.constant 2 : i32
    %405 = arith.muli %404, %c2_i32_110 : i32
    %406 = arith.index_cast %405 : i32 to index
    %c0_111 = arith.constant 0 : index
    %407 = vector.load %arg1[%406, %c0_111] : memref<16x128xf32, #tpu.memory_space<vmem>>, vector<2x128xf32>
    %cst_112 = arith.constant dense<0.000000e+00> : vector<2x128xf32>
    %408 = tpu.matmul %400, %266, %cst_112 {dimension_numbers = #tpu.dot_dimension_numbers<[1], [0], [0], [1], [0, 0, 1, 1], [], []>} : vector<2x32xf32>, vector<32x128xf32>, vector<2x128xf32> -> vector<2x128xf32>
    %409 = arith.addf %407, %408 : vector<2x128xf32>
    %410 = vector.extract_strided_slice %409 {offsets = [0, 0], sizes = [2, 32], strides = [1, 1]} : vector<2x128xf32> to vector<2x32xf32>
    %411 = arith.negf %410 : vector<2x32xf32>
    %412 = math.exp %411 : vector<2x32xf32>
    %cst_113 = arith.constant 1.000000e+00 : f32
    %413 = vector.broadcast %cst_113 : f32 to vector<2x32xf32>
    %414 = arith.addf %413, %412 : vector<2x32xf32>
    %415 = arith.divf %413, %414 : vector<2x32xf32>
    %416 = vector.extract_strided_slice %409 {offsets = [0, 32], sizes = [2, 32], strides = [1, 1]} : vector<2x128xf32> to vector<2x32xf32>
    %417 = arith.negf %416 : vector<2x32xf32>
    %418 = math.exp %417 : vector<2x32xf32>
    %cst_114 = arith.constant 1.000000e+00 : f32
    %419 = vector.broadcast %cst_114 : f32 to vector<2x32xf32>
    %420 = arith.addf %419, %418 : vector<2x32xf32>
    %421 = arith.divf %419, %420 : vector<2x32xf32>
    %422 = vector.extract_strided_slice %409 {offsets = [0, 64], sizes = [2, 32], strides = [1, 1]} : vector<2x128xf32> to vector<2x32xf32>
    %423 = math.tanh %422 : vector<2x32xf32>
    %424 = vector.extract_strided_slice %409 {offsets = [0, 96], sizes = [2, 32], strides = [1, 1]} : vector<2x128xf32> to vector<2x32xf32>
    %425 = arith.negf %424 : vector<2x32xf32>
    %426 = math.exp %425 : vector<2x32xf32>
    %cst_115 = arith.constant 1.000000e+00 : f32
    %427 = vector.broadcast %cst_115 : f32 to vector<2x32xf32>
    %428 = arith.addf %427, %426 : vector<2x32xf32>
    %429 = arith.divf %427, %428 : vector<2x32xf32>
    %430 = arith.mulf %421, %398 : vector<2x32xf32>
    %431 = arith.mulf %415, %423 : vector<2x32xf32>
    %432 = arith.addf %430, %431 : vector<2x32xf32>
    %433 = math.tanh %432 : vector<2x32xf32>
    %434 = arith.mulf %429, %433 : vector<2x32xf32>
    %c2_i32_116 = arith.constant 2 : i32
    %435 = arith.muli %404, %c2_i32_116 : i32
    %436 = arith.index_cast %435 : i32 to index
    %c0_117 = arith.constant 0 : index
    %437 = vector.load %arg17[%436, %c0_117] : memref<16x32xf32, #tpu.memory_space<vmem>>, vector<2x32xf32>
    tpu.vector_store %arg17[%436, %c0_117], %434 {strides = array<i32>} : memref<16x32xf32, #tpu.memory_space<vmem>>, vector<2x32xf32>,
    %c5_i32_118 = arith.constant 5 : i32
    %c7_i32_119 = arith.constant 7 : i32
    %438 = arith.subi %c7_i32_119, %c5_i32_118 : i32
    %c2_i32_120 = arith.constant 2 : i32
    %439 = arith.muli %438, %c2_i32_120 : i32
    %440 = arith.index_cast %439 : i32 to index
    %c0_121 = arith.constant 0 : index
    %441 = vector.load %arg1[%440, %c0_121] : memref<16x128xf32, #tpu.memory_space<vmem>>, vector<2x128xf32>
    %cst_122 = arith.constant dense<0.000000e+00> : vector<2x128xf32>
    %442 = tpu.matmul %434, %266, %cst_122 {dimension_numbers = #tpu.dot_dimension_numbers<[1], [0], [0], [1], [0, 0, 1, 1], [], []>} : vector<2x32xf32>, vector<32x128xf32>, vector<2x128xf32> -> vector<2x128xf32>
    %443 = arith.addf %441, %442 : vector<2x128xf32>
    %444 = vector.extract_strided_slice %443 {offsets = [0, 0], sizes = [2, 32], strides = [1, 1]} : vector<2x128xf32> to vector<2x32xf32>
    %445 = arith.negf %444 : vector<2x32xf32>
    %446 = math.exp %445 : vector<2x32xf32>
    %cst_123 = arith.constant 1.000000e+00 : f32
    %447 = vector.broadcast %cst_123 : f32 to vector<2x32xf32>
    %448 = arith.addf %447, %446 : vector<2x32xf32>
    %449 = arith.divf %447, %448 : vector<2x32xf32>
    %450 = vector.extract_strided_slice %443 {offsets = [0, 32], sizes = [2, 32], strides = [1, 1]} : vector<2x128xf32> to vector<2x32xf32>
    %451 = arith.negf %450 : vector<2x32xf32>
    %452 = math.exp %451 : vector<2x32xf32>
    %cst_124 = arith.constant 1.000000e+00 : f32
    %453 = vector.broadcast %cst_124 : f32 to vector<2x32xf32>
    %454 = arith.addf %453, %452 : vector<2x32xf32>
    %455 = arith.divf %453, %454 : vector<2x32xf32>
    %456 = vector.extract_strided_slice %443 {offsets = [0, 64], sizes = [2, 32], strides = [1, 1]} : vector<2x128xf32> to vector<2x32xf32>
    %457 = math.tanh %456 : vector<2x32xf32>
    %458 = vector.extract_strided_slice %443 {offsets = [0, 96], sizes = [2, 32], strides = [1, 1]} : vector<2x128xf32> to vector<2x32xf32>
    %459 = arith.negf %458 : vector<2x32xf32>
    %460 = math.exp %459 : vector<2x32xf32>
    %cst_125 = arith.constant 1.000000e+00 : f32
    %461 = vector.broadcast %cst_125 : f32 to vector<2x32xf32>
    %462 = arith.addf %461, %460 : vector<2x32xf32>
    %463 = arith.divf %461, %462 : vector<2x32xf32>
    %464 = arith.mulf %455, %432 : vector<2x32xf32>
    %465 = arith.mulf %449, %457 : vector<2x32xf32>
    %466 = arith.addf %464, %465 : vector<2x32xf32>
    %467 = math.tanh %466 : vector<2x32xf32>
    %468 = arith.mulf %463, %467 : vector<2x32xf32>
    %c2_i32_126 = arith.constant 2 : i32
    %469 = arith.muli %438, %c2_i32_126 : i32
    %470 = arith.index_cast %469 : i32 to index
    %c0_127 = arith.constant 0 : index
    %471 = vector.load %arg17[%470, %c0_127] : memref<16x32xf32, #tpu.memory_space<vmem>>, vector<2x32xf32>
    tpu.vector_store %arg17[%470, %c0_127], %468 {strides = array<i32>} : memref<16x32xf32, #tpu.memory_space<vmem>>, vector<2x32xf32>,
    %c6_i32_128 = arith.constant 6 : i32
    %c7_i32_129 = arith.constant 7 : i32
    %472 = arith.subi %c7_i32_129, %c6_i32_128 : i32
    %c2_i32_130 = arith.constant 2 : i32
    %473 = arith.muli %472, %c2_i32_130 : i32
    %474 = arith.index_cast %473 : i32 to index
    %c0_131 = arith.constant 0 : index
    %475 = vector.load %arg1[%474, %c0_131] : memref<16x128xf32, #tpu.memory_space<vmem>>, vector<2x128xf32>
    %cst_132 = arith.constant dense<0.000000e+00> : vector<2x128xf32>
    %476 = tpu.matmul %468, %266, %cst_132 {dimension_numbers = #tpu.dot_dimension_numbers<[1], [0], [0], [1], [0, 0, 1, 1], [], []>} : vector<2x32xf32>, vector<32x128xf32>, vector<2x128xf32> -> vector<2x128xf32>
    %477 = arith.addf %475, %476 : vector<2x128xf32>
    %478 = vector.extract_strided_slice %477 {offsets = [0, 0], sizes = [2, 32], strides = [1, 1]} : vector<2x128xf32> to vector<2x32xf32>
    %479 = arith.negf %478 : vector<2x32xf32>
    %480 = math.exp %479 : vector<2x32xf32>
    %cst_133 = arith.constant 1.000000e+00 : f32
    %481 = vector.broadcast %cst_133 : f32 to vector<2x32xf32>
    %482 = arith.addf %481, %480 : vector<2x32xf32>
    %483 = arith.divf %481, %482 : vector<2x32xf32>
    %484 = vector.extract_strided_slice %477 {offsets = [0, 32], sizes = [2, 32], strides = [1, 1]} : vector<2x128xf32> to vector<2x32xf32>
    %485 = arith.negf %484 : vector<2x32xf32>
    %486 = math.exp %485 : vector<2x32xf32>
    %cst_134 = arith.constant 1.000000e+00 : f32
    %487 = vector.broadcast %cst_134 : f32 to vector<2x32xf32>
    %488 = arith.addf %487, %486 : vector<2x32xf32>
    %489 = arith.divf %487, %488 : vector<2x32xf32>
    %490 = vector.extract_strided_slice %477 {offsets = [0, 64], sizes = [2, 32], strides = [1, 1]} : vector<2x128xf32> to vector<2x32xf32>
    %491 = math.tanh %490 : vector<2x32xf32>
    %492 = vector.extract_strided_slice %477 {offsets = [0, 96], sizes = [2, 32], strides = [1, 1]} : vector<2x128xf32> to vector<2x32xf32>
    %493 = arith.negf %492 : vector<2x32xf32>
    %494 = math.exp %493 : vector<2x32xf32>
    %cst_135 = arith.constant 1.000000e+00 : f32
    %495 = vector.broadcast %cst_135 : f32 to vector<2x32xf32>
    %496 = arith.addf %495, %494 : vector<2x32xf32>
    %497 = arith.divf %495, %496 : vector<2x32xf32>
    %498 = arith.mulf %489, %466 : vector<2x32xf32>
    %499 = arith.mulf %483, %491 : vector<2x32xf32>
    %500 = arith.addf %498, %499 : vector<2x32xf32>
    %501 = math.tanh %500 : vector<2x32xf32>
    %502 = arith.mulf %497, %501 : vector<2x32xf32>
    %c2_i32_136 = arith.constant 2 : i32
    %503 = arith.muli %472, %c2_i32_136 : i32
    %504 = arith.index_cast %503 : i32 to index
    %c0_137 = arith.constant 0 : index
    %505 = vector.load %arg17[%504, %c0_137] : memref<16x32xf32, #tpu.memory_space<vmem>>, vector<2x32xf32>
    tpu.vector_store %arg17[%504, %c0_137], %502 {strides = array<i32>} : memref<16x32xf32, #tpu.memory_space<vmem>>, vector<2x32xf32>,
    %c7_i32_138 = arith.constant 7 : i32
    %c7_i32_139 = arith.constant 7 : i32
    %506 = arith.subi %c7_i32_139, %c7_i32_138 : i32
    %c2_i32_140 = arith.constant 2 : i32
    %507 = arith.muli %506, %c2_i32_140 : i32
    %508 = arith.index_cast %507 : i32 to index
    %c0_141 = arith.constant 0 : index
    %509 = vector.load %arg1[%508, %c0_141] : memref<16x128xf32, #tpu.memory_space<vmem>>, vector<2x128xf32>
    %cst_142 = arith.constant dense<0.000000e+00> : vector<2x128xf32>
    %510 = tpu.matmul %502, %266, %cst_142 {dimension_numbers = #tpu.dot_dimension_numbers<[1], [0], [0], [1], [0, 0, 1, 1], [], []>} : vector<2x32xf32>, vector<32x128xf32>, vector<2x128xf32> -> vector<2x128xf32>
    %511 = arith.addf %509, %510 : vector<2x128xf32>
    %512 = vector.extract_strided_slice %511 {offsets = [0, 0], sizes = [2, 32], strides = [1, 1]} : vector<2x128xf32> to vector<2x32xf32>
    %513 = arith.negf %512 : vector<2x32xf32>
    %514 = math.exp %513 : vector<2x32xf32>
    %cst_143 = arith.constant 1.000000e+00 : f32
    %515 = vector.broadcast %cst_143 : f32 to vector<2x32xf32>
    %516 = arith.addf %515, %514 : vector<2x32xf32>
    %517 = arith.divf %515, %516 : vector<2x32xf32>
    %518 = vector.extract_strided_slice %511 {offsets = [0, 32], sizes = [2, 32], strides = [1, 1]} : vector<2x128xf32> to vector<2x32xf32>
    %519 = arith.negf %518 : vector<2x32xf32>
    %520 = math.exp %519 : vector<2x32xf32>
    %cst_144 = arith.constant 1.000000e+00 : f32
    %521 = vector.broadcast %cst_144 : f32 to vector<2x32xf32>
    %522 = arith.addf %521, %520 : vector<2x32xf32>
    %523 = arith.divf %521, %522 : vector<2x32xf32>
    %524 = vector.extract_strided_slice %511 {offsets = [0, 64], sizes = [2, 32], strides = [1, 1]} : vector<2x128xf32> to vector<2x32xf32>
    %525 = math.tanh %524 : vector<2x32xf32>
    %526 = vector.extract_strided_slice %511 {offsets = [0, 96], sizes = [2, 32], strides = [1, 1]} : vector<2x128xf32> to vector<2x32xf32>
    %527 = arith.negf %526 : vector<2x32xf32>
    %528 = math.exp %527 : vector<2x32xf32>
    %cst_145 = arith.constant 1.000000e+00 : f32
    %529 = vector.broadcast %cst_145 : f32 to vector<2x32xf32>
    %530 = arith.addf %529, %528 : vector<2x32xf32>
    %531 = arith.divf %529, %530 : vector<2x32xf32>
    %532 = arith.mulf %523, %500 : vector<2x32xf32>
    %533 = arith.mulf %517, %525 : vector<2x32xf32>
    %534 = arith.addf %532, %533 : vector<2x32xf32>
    %535 = math.tanh %534 : vector<2x32xf32>
    %536 = arith.mulf %531, %535 : vector<2x32xf32>
    %c2_i32_146 = arith.constant 2 : i32
    %537 = arith.muli %506, %c2_i32_146 : i32
    %538 = arith.index_cast %537 : i32 to index
    %c0_147 = arith.constant 0 : index
    %539 = vector.load %arg17[%538, %c0_147] : memref<16x32xf32, #tpu.memory_space<vmem>>, vector<2x32xf32>
    tpu.vector_store %arg17[%538, %c0_147], %536 {strides = array<i32>} : memref<16x32xf32, #tpu.memory_space<vmem>>, vector<2x32xf32>,
    %c8_i32_148 = arith.constant 8 : i32
    %c0_149 = arith.constant 0 : index
    %c0_150 = arith.constant 0 : index
    %540 = vector.load %arg16[%c0_149, %c0_150] : memref<16x32xf32, #tpu.memory_space<vmem>>, vector<16x32xf32>
    %c0_151 = arith.constant 0 : index
    %c0_152 = arith.constant 0 : index
    %541 = vector.load %arg17[%c0_151, %c0_152] : memref<16x32xf32, #tpu.memory_space<vmem>>, vector<16x32xf32>
    %c0_153 = arith.constant 0 : index
    %c0_154 = arith.constant 0 : index
    %542 = vector.load %arg4[%c0_153, %c0_154] : memref<32x128xf32, #tpu.memory_space<vmem>>, vector<32x128xf32>
    %cst_155 = arith.constant dense<0.000000e+00> : vector<16x128xf32>
    %543 = tpu.matmul %540, %542, %cst_155 {dimension_numbers = #tpu.dot_dimension_numbers<[1], [0], [0], [1], [0, 0, 1, 1], [], []>} : vector<16x32xf32>, vector<32x128xf32>, vector<16x128xf32> -> vector<16x128xf32>
    %c0_156 = arith.constant 0 : index
    %c0_157 = arith.constant 0 : index
    %544 = vector.load %arg5[%c0_156, %c0_157] : memref<32x128xf32, #tpu.memory_space<vmem>>, vector<32x128xf32>
    %cst_158 = arith.constant dense<0.000000e+00> : vector<16x128xf32>
    %545 = tpu.matmul %541, %544, %cst_158 {dimension_numbers = #tpu.dot_dimension_numbers<[1], [0], [0], [1], [0, 0, 1, 1], [], []>} : vector<16x32xf32>, vector<32x128xf32>, vector<16x128xf32> -> vector<16x128xf32>
    %546 = arith.addf %543, %545 : vector<16x128xf32>
    %c0_159 = arith.constant 0 : index
    %c0_160 = arith.constant 0 : index
    %547 = vector.load %arg6[%c0_159, %c0_160] : memref<1x128xf32, #tpu.memory_space<vmem>>, vector<1x128xf32>
    %548 = vector.broadcast %547 : vector<1x128xf32> to vector<16x128xf32>
    %549 = arith.addf %546, %548 : vector<16x128xf32>
    %c0_161 = arith.constant 0 : index
    %c0_162 = arith.constant 0 : index
    %550 = vector.load %arg18[%c0_161, %c0_162] : memref<16x128xf32, #tpu.memory_space<vmem>>, vector<16x128xf32>
    tpu.vector_store %arg18[%c0_161, %c0_162], %549 {strides = array<i32>} : memref<16x128xf32, #tpu.memory_space<vmem>>, vector<16x128xf32>,
    %c0_163 = arith.constant 0 : index
    %c0_164 = arith.constant 0 : index
    %551 = vector.load %arg8[%c0_163, %c0_164] : memref<32x128xf32, #tpu.memory_space<vmem>>, vector<32x128xf32>
    %cst_165 = arith.constant dense<0.000000e+00> : vector<16x128xf32>
    %552 = tpu.matmul %540, %551, %cst_165 {dimension_numbers = #tpu.dot_dimension_numbers<[1], [0], [0], [1], [0, 0, 1, 1], [], []>} : vector<16x32xf32>, vector<32x128xf32>, vector<16x128xf32> -> vector<16x128xf32>
    %c0_166 = arith.constant 0 : index
    %c0_167 = arith.constant 0 : index
    %553 = vector.load %arg9[%c0_166, %c0_167] : memref<32x128xf32, #tpu.memory_space<vmem>>, vector<32x128xf32>
    %cst_168 = arith.constant dense<0.000000e+00> : vector<16x128xf32>
    %554 = tpu.matmul %541, %553, %cst_168 {dimension_numbers = #tpu.dot_dimension_numbers<[1], [0], [0], [1], [0, 0, 1, 1], [], []>} : vector<16x32xf32>, vector<32x128xf32>, vector<16x128xf32> -> vector<16x128xf32>
    %555 = arith.addf %552, %554 : vector<16x128xf32>
    %c0_169 = arith.constant 0 : index
    %c0_170 = arith.constant 0 : index
    %556 = vector.load %arg10[%c0_169, %c0_170] : memref<1x128xf32, #tpu.memory_space<vmem>>, vector<1x128xf32>
    %557 = vector.broadcast %556 : vector<1x128xf32> to vector<16x128xf32>
    %558 = arith.addf %555, %557 : vector<16x128xf32>
    %c0_171 = arith.constant 0 : index
    %c0_172 = arith.constant 0 : index
    %559 = vector.load %arg19[%c0_171, %c0_172] : memref<16x128xf32, #tpu.memory_space<vmem>>, vector<16x128xf32>
    tpu.vector_store %arg19[%c0_171, %c0_172], %558 {strides = array<i32>} : memref<16x128xf32, #tpu.memory_space<vmem>>, vector<16x128xf32>,
    %c0_173 = arith.constant 0 : index
    %c0_174 = arith.constant 0 : index
    %560 = vector.load %arg7[%c0_173, %c0_174] : memref<32x128xf32, #tpu.memory_space<vmem>>, vector<32x128xf32>
    %cst_175 = arith.constant 0.000000e+00 : f32
    %561 = vector.broadcast %cst_175 : f32 to vector<2x32xf32>
    %c0_i32_176 = arith.constant 0 : i32
    %c2_i32_177 = arith.constant 2 : i32
    %562 = arith.muli %c0_i32_176, %c2_i32_177 : i32
    %563 = arith.index_cast %562 : i32 to index
    %c0_178 = arith.constant 0 : index
    %564 = vector.load %arg18[%563, %c0_178] : memref<16x128xf32, #tpu.memory_space<vmem>>, vector<2x128xf32>
    %cst_179 = arith.constant dense<0.000000e+00> : vector<2x128xf32>
    %565 = tpu.matmul %561, %560, %cst_179 {dimension_numbers = #tpu.dot_dimension_numbers<[1], [0], [0], [1], [0, 0, 1, 1], [], []>} : vector<2x32xf32>, vector<32x128xf32>, vector<2x128xf32> -> vector<2x128xf32>
    %566 = arith.addf %564, %565 : vector<2x128xf32>
    %567 = vector.extract_strided_slice %566 {offsets = [0, 0], sizes = [2, 32], strides = [1, 1]} : vector<2x128xf32> to vector<2x32xf32>
    %568 = arith.negf %567 : vector<2x32xf32>
    %569 = math.exp %568 : vector<2x32xf32>
    %cst_180 = arith.constant 1.000000e+00 : f32
    %570 = vector.broadcast %cst_180 : f32 to vector<2x32xf32>
    %571 = arith.addf %570, %569 : vector<2x32xf32>
    %572 = arith.divf %570, %571 : vector<2x32xf32>
    %573 = vector.extract_strided_slice %566 {offsets = [0, 32], sizes = [2, 32], strides = [1, 1]} : vector<2x128xf32> to vector<2x32xf32>
    %574 = arith.negf %573 : vector<2x32xf32>
    %575 = math.exp %574 : vector<2x32xf32>
    %cst_181 = arith.constant 1.000000e+00 : f32
    %576 = vector.broadcast %cst_181 : f32 to vector<2x32xf32>
    %577 = arith.addf %576, %575 : vector<2x32xf32>
    %578 = arith.divf %576, %577 : vector<2x32xf32>
    %579 = vector.extract_strided_slice %566 {offsets = [0, 64], sizes = [2, 32], strides = [1, 1]} : vector<2x128xf32> to vector<2x32xf32>
    %580 = math.tanh %579 : vector<2x32xf32>
    %581 = vector.extract_strided_slice %566 {offsets = [0, 96], sizes = [2, 32], strides = [1, 1]} : vector<2x128xf32> to vector<2x32xf32>
    %582 = arith.negf %581 : vector<2x32xf32>
    %583 = math.exp %582 : vector<2x32xf32>
    %cst_182 = arith.constant 1.000000e+00 : f32
    %584 = vector.broadcast %cst_182 : f32 to vector<2x32xf32>
    %585 = arith.addf %584, %583 : vector<2x32xf32>
    %586 = arith.divf %584, %585 : vector<2x32xf32>
    %587 = arith.mulf %578, %561 : vector<2x32xf32>
    %588 = arith.mulf %572, %580 : vector<2x32xf32>
    %589 = arith.addf %587, %588 : vector<2x32xf32>
    %590 = math.tanh %589 : vector<2x32xf32>
    %591 = arith.mulf %586, %590 : vector<2x32xf32>
    %c1_i32_183 = arith.constant 1 : i32
    %c2_i32_184 = arith.constant 2 : i32
    %592 = arith.muli %c1_i32_183, %c2_i32_184 : i32
    %593 = arith.index_cast %592 : i32 to index
    %c0_185 = arith.constant 0 : index
    %594 = vector.load %arg18[%593, %c0_185] : memref<16x128xf32, #tpu.memory_space<vmem>>, vector<2x128xf32>
    %cst_186 = arith.constant dense<0.000000e+00> : vector<2x128xf32>
    %595 = tpu.matmul %591, %560, %cst_186 {dimension_numbers = #tpu.dot_dimension_numbers<[1], [0], [0], [1], [0, 0, 1, 1], [], []>} : vector<2x32xf32>, vector<32x128xf32>, vector<2x128xf32> -> vector<2x128xf32>
    %596 = arith.addf %594, %595 : vector<2x128xf32>
    %597 = vector.extract_strided_slice %596 {offsets = [0, 0], sizes = [2, 32], strides = [1, 1]} : vector<2x128xf32> to vector<2x32xf32>
    %598 = arith.negf %597 : vector<2x32xf32>
    %599 = math.exp %598 : vector<2x32xf32>
    %cst_187 = arith.constant 1.000000e+00 : f32
    %600 = vector.broadcast %cst_187 : f32 to vector<2x32xf32>
    %601 = arith.addf %600, %599 : vector<2x32xf32>
    %602 = arith.divf %600, %601 : vector<2x32xf32>
    %603 = vector.extract_strided_slice %596 {offsets = [0, 32], sizes = [2, 32], strides = [1, 1]} : vector<2x128xf32> to vector<2x32xf32>
    %604 = arith.negf %603 : vector<2x32xf32>
    %605 = math.exp %604 : vector<2x32xf32>
    %cst_188 = arith.constant 1.000000e+00 : f32
    %606 = vector.broadcast %cst_188 : f32 to vector<2x32xf32>
    %607 = arith.addf %606, %605 : vector<2x32xf32>
    %608 = arith.divf %606, %607 : vector<2x32xf32>
    %609 = vector.extract_strided_slice %596 {offsets = [0, 64], sizes = [2, 32], strides = [1, 1]} : vector<2x128xf32> to vector<2x32xf32>
    %610 = math.tanh %609 : vector<2x32xf32>
    %611 = vector.extract_strided_slice %596 {offsets = [0, 96], sizes = [2, 32], strides = [1, 1]} : vector<2x128xf32> to vector<2x32xf32>
    %612 = arith.negf %611 : vector<2x32xf32>
    %613 = math.exp %612 : vector<2x32xf32>
    %cst_189 = arith.constant 1.000000e+00 : f32
    %614 = vector.broadcast %cst_189 : f32 to vector<2x32xf32>
    %615 = arith.addf %614, %613 : vector<2x32xf32>
    %616 = arith.divf %614, %615 : vector<2x32xf32>
    %617 = arith.mulf %608, %589 : vector<2x32xf32>
    %618 = arith.mulf %602, %610 : vector<2x32xf32>
    %619 = arith.addf %617, %618 : vector<2x32xf32>
    %620 = math.tanh %619 : vector<2x32xf32>
    %621 = arith.mulf %616, %620 : vector<2x32xf32>
    %c2_i32_190 = arith.constant 2 : i32
    %c2_i32_191 = arith.constant 2 : i32
    %622 = arith.muli %c2_i32_190, %c2_i32_191 : i32
    %623 = arith.index_cast %622 : i32 to index
    %c0_192 = arith.constant 0 : index
    %624 = vector.load %arg18[%623, %c0_192] : memref<16x128xf32, #tpu.memory_space<vmem>>, vector<2x128xf32>
    %cst_193 = arith.constant dense<0.000000e+00> : vector<2x128xf32>
    %625 = tpu.matmul %621, %560, %cst_193 {dimension_numbers = #tpu.dot_dimension_numbers<[1], [0], [0], [1], [0, 0, 1, 1], [], []>} : vector<2x32xf32>, vector<32x128xf32>, vector<2x128xf32> -> vector<2x128xf32>
    %626 = arith.addf %624, %625 : vector<2x128xf32>
    %627 = vector.extract_strided_slice %626 {offsets = [0, 0], sizes = [2, 32], strides = [1, 1]} : vector<2x128xf32> to vector<2x32xf32>
    %628 = arith.negf %627 : vector<2x32xf32>
    %629 = math.exp %628 : vector<2x32xf32>
    %cst_194 = arith.constant 1.000000e+00 : f32
    %630 = vector.broadcast %cst_194 : f32 to vector<2x32xf32>
    %631 = arith.addf %630, %629 : vector<2x32xf32>
    %632 = arith.divf %630, %631 : vector<2x32xf32>
    %633 = vector.extract_strided_slice %626 {offsets = [0, 32], sizes = [2, 32], strides = [1, 1]} : vector<2x128xf32> to vector<2x32xf32>
    %634 = arith.negf %633 : vector<2x32xf32>
    %635 = math.exp %634 : vector<2x32xf32>
    %cst_195 = arith.constant 1.000000e+00 : f32
    %636 = vector.broadcast %cst_195 : f32 to vector<2x32xf32>
    %637 = arith.addf %636, %635 : vector<2x32xf32>
    %638 = arith.divf %636, %637 : vector<2x32xf32>
    %639 = vector.extract_strided_slice %626 {offsets = [0, 64], sizes = [2, 32], strides = [1, 1]} : vector<2x128xf32> to vector<2x32xf32>
    %640 = math.tanh %639 : vector<2x32xf32>
    %641 = vector.extract_strided_slice %626 {offsets = [0, 96], sizes = [2, 32], strides = [1, 1]} : vector<2x128xf32> to vector<2x32xf32>
    %642 = arith.negf %641 : vector<2x32xf32>
    %643 = math.exp %642 : vector<2x32xf32>
    %cst_196 = arith.constant 1.000000e+00 : f32
    %644 = vector.broadcast %cst_196 : f32 to vector<2x32xf32>
    %645 = arith.addf %644, %643 : vector<2x32xf32>
    %646 = arith.divf %644, %645 : vector<2x32xf32>
    %647 = arith.mulf %638, %619 : vector<2x32xf32>
    %648 = arith.mulf %632, %640 : vector<2x32xf32>
    %649 = arith.addf %647, %648 : vector<2x32xf32>
    %650 = math.tanh %649 : vector<2x32xf32>
    %651 = arith.mulf %646, %650 : vector<2x32xf32>
    %c3_i32_197 = arith.constant 3 : i32
    %c2_i32_198 = arith.constant 2 : i32
    %652 = arith.muli %c3_i32_197, %c2_i32_198 : i32
    %653 = arith.index_cast %652 : i32 to index
    %c0_199 = arith.constant 0 : index
    %654 = vector.load %arg18[%653, %c0_199] : memref<16x128xf32, #tpu.memory_space<vmem>>, vector<2x128xf32>
    %cst_200 = arith.constant dense<0.000000e+00> : vector<2x128xf32>
    %655 = tpu.matmul %651, %560, %cst_200 {dimension_numbers = #tpu.dot_dimension_numbers<[1], [0], [0], [1], [0, 0, 1, 1], [], []>} : vector<2x32xf32>, vector<32x128xf32>, vector<2x128xf32> -> vector<2x128xf32>
    %656 = arith.addf %654, %655 : vector<2x128xf32>
    %657 = vector.extract_strided_slice %656 {offsets = [0, 0], sizes = [2, 32], strides = [1, 1]} : vector<2x128xf32> to vector<2x32xf32>
    %658 = arith.negf %657 : vector<2x32xf32>
    %659 = math.exp %658 : vector<2x32xf32>
    %cst_201 = arith.constant 1.000000e+00 : f32
    %660 = vector.broadcast %cst_201 : f32 to vector<2x32xf32>
    %661 = arith.addf %660, %659 : vector<2x32xf32>
    %662 = arith.divf %660, %661 : vector<2x32xf32>
    %663 = vector.extract_strided_slice %656 {offsets = [0, 32], sizes = [2, 32], strides = [1, 1]} : vector<2x128xf32> to vector<2x32xf32>
    %664 = arith.negf %663 : vector<2x32xf32>
    %665 = math.exp %664 : vector<2x32xf32>
    %cst_202 = arith.constant 1.000000e+00 : f32
    %666 = vector.broadcast %cst_202 : f32 to vector<2x32xf32>
    %667 = arith.addf %666, %665 : vector<2x32xf32>
    %668 = arith.divf %666, %667 : vector<2x32xf32>
    %669 = vector.extract_strided_slice %656 {offsets = [0, 64], sizes = [2, 32], strides = [1, 1]} : vector<2x128xf32> to vector<2x32xf32>
    %670 = math.tanh %669 : vector<2x32xf32>
    %671 = vector.extract_strided_slice %656 {offsets = [0, 96], sizes = [2, 32], strides = [1, 1]} : vector<2x128xf32> to vector<2x32xf32>
    %672 = arith.negf %671 : vector<2x32xf32>
    %673 = math.exp %672 : vector<2x32xf32>
    %cst_203 = arith.constant 1.000000e+00 : f32
    %674 = vector.broadcast %cst_203 : f32 to vector<2x32xf32>
    %675 = arith.addf %674, %673 : vector<2x32xf32>
    %676 = arith.divf %674, %675 : vector<2x32xf32>
    %677 = arith.mulf %668, %649 : vector<2x32xf32>
    %678 = arith.mulf %662, %670 : vector<2x32xf32>
    %679 = arith.addf %677, %678 : vector<2x32xf32>
    %680 = math.tanh %679 : vector<2x32xf32>
    %681 = arith.mulf %676, %680 : vector<2x32xf32>
    %c4_i32_204 = arith.constant 4 : i32
    %c2_i32_205 = arith.constant 2 : i32
    %682 = arith.muli %c4_i32_204, %c2_i32_205 : i32
    %683 = arith.index_cast %682 : i32 to index
    %c0_206 = arith.constant 0 : index
    %684 = vector.load %arg18[%683, %c0_206] : memref<16x128xf32, #tpu.memory_space<vmem>>, vector<2x128xf32>
    %cst_207 = arith.constant dense<0.000000e+00> : vector<2x128xf32>
    %685 = tpu.matmul %681, %560, %cst_207 {dimension_numbers = #tpu.dot_dimension_numbers<[1], [0], [0], [1], [0, 0, 1, 1], [], []>} : vector<2x32xf32>, vector<32x128xf32>, vector<2x128xf32> -> vector<2x128xf32>
    %686 = arith.addf %684, %685 : vector<2x128xf32>
    %687 = vector.extract_strided_slice %686 {offsets = [0, 0], sizes = [2, 32], strides = [1, 1]} : vector<2x128xf32> to vector<2x32xf32>
    %688 = arith.negf %687 : vector<2x32xf32>
    %689 = math.exp %688 : vector<2x32xf32>
    %cst_208 = arith.constant 1.000000e+00 : f32
    %690 = vector.broadcast %cst_208 : f32 to vector<2x32xf32>
    %691 = arith.addf %690, %689 : vector<2x32xf32>
    %692 = arith.divf %690, %691 : vector<2x32xf32>
    %693 = vector.extract_strided_slice %686 {offsets = [0, 32], sizes = [2, 32], strides = [1, 1]} : vector<2x128xf32> to vector<2x32xf32>
    %694 = arith.negf %693 : vector<2x32xf32>
    %695 = math.exp %694 : vector<2x32xf32>
    %cst_209 = arith.constant 1.000000e+00 : f32
    %696 = vector.broadcast %cst_209 : f32 to vector<2x32xf32>
    %697 = arith.addf %696, %695 : vector<2x32xf32>
    %698 = arith.divf %696, %697 : vector<2x32xf32>
    %699 = vector.extract_strided_slice %686 {offsets = [0, 64], sizes = [2, 32], strides = [1, 1]} : vector<2x128xf32> to vector<2x32xf32>
    %700 = math.tanh %699 : vector<2x32xf32>
    %701 = vector.extract_strided_slice %686 {offsets = [0, 96], sizes = [2, 32], strides = [1, 1]} : vector<2x128xf32> to vector<2x32xf32>
    %702 = arith.negf %701 : vector<2x32xf32>
    %703 = math.exp %702 : vector<2x32xf32>
    %cst_210 = arith.constant 1.000000e+00 : f32
    %704 = vector.broadcast %cst_210 : f32 to vector<2x32xf32>
    %705 = arith.addf %704, %703 : vector<2x32xf32>
    %706 = arith.divf %704, %705 : vector<2x32xf32>
    %707 = arith.mulf %698, %679 : vector<2x32xf32>
    %708 = arith.mulf %692, %700 : vector<2x32xf32>
    %709 = arith.addf %707, %708 : vector<2x32xf32>
    %710 = math.tanh %709 : vector<2x32xf32>
    %711 = arith.mulf %706, %710 : vector<2x32xf32>
    %c5_i32_211 = arith.constant 5 : i32
    %c2_i32_212 = arith.constant 2 : i32
    %712 = arith.muli %c5_i32_211, %c2_i32_212 : i32
    %713 = arith.index_cast %712 : i32 to index
    %c0_213 = arith.constant 0 : index
    %714 = vector.load %arg18[%713, %c0_213] : memref<16x128xf32, #tpu.memory_space<vmem>>, vector<2x128xf32>
    %cst_214 = arith.constant dense<0.000000e+00> : vector<2x128xf32>
    %715 = tpu.matmul %711, %560, %cst_214 {dimension_numbers = #tpu.dot_dimension_numbers<[1], [0], [0], [1], [0, 0, 1, 1], [], []>} : vector<2x32xf32>, vector<32x128xf32>, vector<2x128xf32> -> vector<2x128xf32>
    %716 = arith.addf %714, %715 : vector<2x128xf32>
    %717 = vector.extract_strided_slice %716 {offsets = [0, 0], sizes = [2, 32], strides = [1, 1]} : vector<2x128xf32> to vector<2x32xf32>
    %718 = arith.negf %717 : vector<2x32xf32>
    %719 = math.exp %718 : vector<2x32xf32>
    %cst_215 = arith.constant 1.000000e+00 : f32
    %720 = vector.broadcast %cst_215 : f32 to vector<2x32xf32>
    %721 = arith.addf %720, %719 : vector<2x32xf32>
    %722 = arith.divf %720, %721 : vector<2x32xf32>
    %723 = vector.extract_strided_slice %716 {offsets = [0, 32], sizes = [2, 32], strides = [1, 1]} : vector<2x128xf32> to vector<2x32xf32>
    %724 = arith.negf %723 : vector<2x32xf32>
    %725 = math.exp %724 : vector<2x32xf32>
    %cst_216 = arith.constant 1.000000e+00 : f32
    %726 = vector.broadcast %cst_216 : f32 to vector<2x32xf32>
    %727 = arith.addf %726, %725 : vector<2x32xf32>
    %728 = arith.divf %726, %727 : vector<2x32xf32>
    %729 = vector.extract_strided_slice %716 {offsets = [0, 64], sizes = [2, 32], strides = [1, 1]} : vector<2x128xf32> to vector<2x32xf32>
    %730 = math.tanh %729 : vector<2x32xf32>
    %731 = vector.extract_strided_slice %716 {offsets = [0, 96], sizes = [2, 32], strides = [1, 1]} : vector<2x128xf32> to vector<2x32xf32>
    %732 = arith.negf %731 : vector<2x32xf32>
    %733 = math.exp %732 : vector<2x32xf32>
    %cst_217 = arith.constant 1.000000e+00 : f32
    %734 = vector.broadcast %cst_217 : f32 to vector<2x32xf32>
    %735 = arith.addf %734, %733 : vector<2x32xf32>
    %736 = arith.divf %734, %735 : vector<2x32xf32>
    %737 = arith.mulf %728, %709 : vector<2x32xf32>
    %738 = arith.mulf %722, %730 : vector<2x32xf32>
    %739 = arith.addf %737, %738 : vector<2x32xf32>
    %740 = math.tanh %739 : vector<2x32xf32>
    %741 = arith.mulf %736, %740 : vector<2x32xf32>
    %c6_i32_218 = arith.constant 6 : i32
    %c2_i32_219 = arith.constant 2 : i32
    %742 = arith.muli %c6_i32_218, %c2_i32_219 : i32
    %743 = arith.index_cast %742 : i32 to index
    %c0_220 = arith.constant 0 : index
    %744 = vector.load %arg18[%743, %c0_220] : memref<16x128xf32, #tpu.memory_space<vmem>>, vector<2x128xf32>
    %cst_221 = arith.constant dense<0.000000e+00> : vector<2x128xf32>
    %745 = tpu.matmul %741, %560, %cst_221 {dimension_numbers = #tpu.dot_dimension_numbers<[1], [0], [0], [1], [0, 0, 1, 1], [], []>} : vector<2x32xf32>, vector<32x128xf32>, vector<2x128xf32> -> vector<2x128xf32>
    %746 = arith.addf %744, %745 : vector<2x128xf32>
    %747 = vector.extract_strided_slice %746 {offsets = [0, 0], sizes = [2, 32], strides = [1, 1]} : vector<2x128xf32> to vector<2x32xf32>
    %748 = arith.negf %747 : vector<2x32xf32>
    %749 = math.exp %748 : vector<2x32xf32>
    %cst_222 = arith.constant 1.000000e+00 : f32
    %750 = vector.broadcast %cst_222 : f32 to vector<2x32xf32>
    %751 = arith.addf %750, %749 : vector<2x32xf32>
    %752 = arith.divf %750, %751 : vector<2x32xf32>
    %753 = vector.extract_strided_slice %746 {offsets = [0, 32], sizes = [2, 32], strides = [1, 1]} : vector<2x128xf32> to vector<2x32xf32>
    %754 = arith.negf %753 : vector<2x32xf32>
    %755 = math.exp %754 : vector<2x32xf32>
    %cst_223 = arith.constant 1.000000e+00 : f32
    %756 = vector.broadcast %cst_223 : f32 to vector<2x32xf32>
    %757 = arith.addf %756, %755 : vector<2x32xf32>
    %758 = arith.divf %756, %757 : vector<2x32xf32>
    %759 = vector.extract_strided_slice %746 {offsets = [0, 64], sizes = [2, 32], strides = [1, 1]} : vector<2x128xf32> to vector<2x32xf32>
    %760 = math.tanh %759 : vector<2x32xf32>
    %761 = vector.extract_strided_slice %746 {offsets = [0, 96], sizes = [2, 32], strides = [1, 1]} : vector<2x128xf32> to vector<2x32xf32>
    %762 = arith.negf %761 : vector<2x32xf32>
    %763 = math.exp %762 : vector<2x32xf32>
    %cst_224 = arith.constant 1.000000e+00 : f32
    %764 = vector.broadcast %cst_224 : f32 to vector<2x32xf32>
    %765 = arith.addf %764, %763 : vector<2x32xf32>
    %766 = arith.divf %764, %765 : vector<2x32xf32>
    %767 = arith.mulf %758, %739 : vector<2x32xf32>
    %768 = arith.mulf %752, %760 : vector<2x32xf32>
    %769 = arith.addf %767, %768 : vector<2x32xf32>
    %770 = math.tanh %769 : vector<2x32xf32>
    %771 = arith.mulf %766, %770 : vector<2x32xf32>
    %c7_i32_225 = arith.constant 7 : i32
    %c2_i32_226 = arith.constant 2 : i32
    %772 = arith.muli %c7_i32_225, %c2_i32_226 : i32
    %773 = arith.index_cast %772 : i32 to index
    %c0_227 = arith.constant 0 : index
    %774 = vector.load %arg18[%773, %c0_227] : memref<16x128xf32, #tpu.memory_space<vmem>>, vector<2x128xf32>
    %cst_228 = arith.constant dense<0.000000e+00> : vector<2x128xf32>
    %775 = tpu.matmul %771, %560, %cst_228 {dimension_numbers = #tpu.dot_dimension_numbers<[1], [0], [0], [1], [0, 0, 1, 1], [], []>} : vector<2x32xf32>, vector<32x128xf32>, vector<2x128xf32> -> vector<2x128xf32>
    %776 = arith.addf %774, %775 : vector<2x128xf32>
    %777 = vector.extract_strided_slice %776 {offsets = [0, 0], sizes = [2, 32], strides = [1, 1]} : vector<2x128xf32> to vector<2x32xf32>
    %778 = arith.negf %777 : vector<2x32xf32>
    %779 = math.exp %778 : vector<2x32xf32>
    %cst_229 = arith.constant 1.000000e+00 : f32
    %780 = vector.broadcast %cst_229 : f32 to vector<2x32xf32>
    %781 = arith.addf %780, %779 : vector<2x32xf32>
    %782 = arith.divf %780, %781 : vector<2x32xf32>
    %783 = vector.extract_strided_slice %776 {offsets = [0, 32], sizes = [2, 32], strides = [1, 1]} : vector<2x128xf32> to vector<2x32xf32>
    %784 = arith.negf %783 : vector<2x32xf32>
    %785 = math.exp %784 : vector<2x32xf32>
    %cst_230 = arith.constant 1.000000e+00 : f32
    %786 = vector.broadcast %cst_230 : f32 to vector<2x32xf32>
    %787 = arith.addf %786, %785 : vector<2x32xf32>
    %788 = arith.divf %786, %787 : vector<2x32xf32>
    %789 = vector.extract_strided_slice %776 {offsets = [0, 64], sizes = [2, 32], strides = [1, 1]} : vector<2x128xf32> to vector<2x32xf32>
    %790 = math.tanh %789 : vector<2x32xf32>
    %791 = vector.extract_strided_slice %776 {offsets = [0, 96], sizes = [2, 32], strides = [1, 1]} : vector<2x128xf32> to vector<2x32xf32>
    %792 = arith.negf %791 : vector<2x32xf32>
    %793 = math.exp %792 : vector<2x32xf32>
    %cst_231 = arith.constant 1.000000e+00 : f32
    %794 = vector.broadcast %cst_231 : f32 to vector<2x32xf32>
    %795 = arith.addf %794, %793 : vector<2x32xf32>
    %796 = arith.divf %794, %795 : vector<2x32xf32>
    %797 = arith.mulf %788, %769 : vector<2x32xf32>
    %798 = arith.mulf %782, %790 : vector<2x32xf32>
    %799 = arith.addf %797, %798 : vector<2x32xf32>
    %800 = math.tanh %799 : vector<2x32xf32>
    %801 = arith.mulf %796, %800 : vector<2x32xf32>
    %c8_i32_232 = arith.constant 8 : i32
    %c0_233 = arith.constant 0 : index
    %c0_234 = arith.constant 0 : index
    %802 = vector.load %arg11[%c0_233, %c0_234] : memref<32x128xf32, #tpu.memory_space<vmem>>, vector<32x128xf32>
    %cst_235 = arith.constant 0.000000e+00 : f32
    %803 = vector.broadcast %cst_235 : f32 to vector<2x32xf32>
    %c0_i32_236 = arith.constant 0 : i32
    %c7_i32_237 = arith.constant 7 : i32
    %804 = arith.subi %c7_i32_237, %c0_i32_236 : i32
    %c2_i32_238 = arith.constant 2 : i32
    %805 = arith.muli %804, %c2_i32_238 : i32
    %806 = arith.index_cast %805 : i32 to index
    %c0_239 = arith.constant 0 : index
    %807 = vector.load %arg19[%806, %c0_239] : memref<16x128xf32, #tpu.memory_space<vmem>>, vector<2x128xf32>
    %cst_240 = arith.constant dense<0.000000e+00> : vector<2x128xf32>
    %808 = tpu.matmul %803, %802, %cst_240 {dimension_numbers = #tpu.dot_dimension_numbers<[1], [0], [0], [1], [0, 0, 1, 1], [], []>} : vector<2x32xf32>, vector<32x128xf32>, vector<2x128xf32> -> vector<2x128xf32>
    %809 = arith.addf %807, %808 : vector<2x128xf32>
    %810 = vector.extract_strided_slice %809 {offsets = [0, 0], sizes = [2, 32], strides = [1, 1]} : vector<2x128xf32> to vector<2x32xf32>
    %811 = arith.negf %810 : vector<2x32xf32>
    %812 = math.exp %811 : vector<2x32xf32>
    %cst_241 = arith.constant 1.000000e+00 : f32
    %813 = vector.broadcast %cst_241 : f32 to vector<2x32xf32>
    %814 = arith.addf %813, %812 : vector<2x32xf32>
    %815 = arith.divf %813, %814 : vector<2x32xf32>
    %816 = vector.extract_strided_slice %809 {offsets = [0, 32], sizes = [2, 32], strides = [1, 1]} : vector<2x128xf32> to vector<2x32xf32>
    %817 = arith.negf %816 : vector<2x32xf32>
    %818 = math.exp %817 : vector<2x32xf32>
    %cst_242 = arith.constant 1.000000e+00 : f32
    %819 = vector.broadcast %cst_242 : f32 to vector<2x32xf32>
    %820 = arith.addf %819, %818 : vector<2x32xf32>
    %821 = arith.divf %819, %820 : vector<2x32xf32>
    %822 = vector.extract_strided_slice %809 {offsets = [0, 64], sizes = [2, 32], strides = [1, 1]} : vector<2x128xf32> to vector<2x32xf32>
    %823 = math.tanh %822 : vector<2x32xf32>
    %824 = vector.extract_strided_slice %809 {offsets = [0, 96], sizes = [2, 32], strides = [1, 1]} : vector<2x128xf32> to vector<2x32xf32>
    %825 = arith.negf %824 : vector<2x32xf32>
    %826 = math.exp %825 : vector<2x32xf32>
    %cst_243 = arith.constant 1.000000e+00 : f32
    %827 = vector.broadcast %cst_243 : f32 to vector<2x32xf32>
    %828 = arith.addf %827, %826 : vector<2x32xf32>
    %829 = arith.divf %827, %828 : vector<2x32xf32>
    %830 = arith.mulf %821, %803 : vector<2x32xf32>
    %831 = arith.mulf %815, %823 : vector<2x32xf32>
    %832 = arith.addf %830, %831 : vector<2x32xf32>
    %833 = math.tanh %832 : vector<2x32xf32>
    %834 = arith.mulf %829, %833 : vector<2x32xf32>
    %c1_i32_244 = arith.constant 1 : i32
    %c7_i32_245 = arith.constant 7 : i32
    %835 = arith.subi %c7_i32_245, %c1_i32_244 : i32
    %c2_i32_246 = arith.constant 2 : i32
    %836 = arith.muli %835, %c2_i32_246 : i32
    %837 = arith.index_cast %836 : i32 to index
    %c0_247 = arith.constant 0 : index
    %838 = vector.load %arg19[%837, %c0_247] : memref<16x128xf32, #tpu.memory_space<vmem>>, vector<2x128xf32>
    %cst_248 = arith.constant dense<0.000000e+00> : vector<2x128xf32>
    %839 = tpu.matmul %834, %802, %cst_248 {dimension_numbers = #tpu.dot_dimension_numbers<[1], [0], [0], [1], [0, 0, 1, 1], [], []>} : vector<2x32xf32>, vector<32x128xf32>, vector<2x128xf32> -> vector<2x128xf32>
    %840 = arith.addf %838, %839 : vector<2x128xf32>
    %841 = vector.extract_strided_slice %840 {offsets = [0, 0], sizes = [2, 32], strides = [1, 1]} : vector<2x128xf32> to vector<2x32xf32>
    %842 = arith.negf %841 : vector<2x32xf32>
    %843 = math.exp %842 : vector<2x32xf32>
    %cst_249 = arith.constant 1.000000e+00 : f32
    %844 = vector.broadcast %cst_249 : f32 to vector<2x32xf32>
    %845 = arith.addf %844, %843 : vector<2x32xf32>
    %846 = arith.divf %844, %845 : vector<2x32xf32>
    %847 = vector.extract_strided_slice %840 {offsets = [0, 32], sizes = [2, 32], strides = [1, 1]} : vector<2x128xf32> to vector<2x32xf32>
    %848 = arith.negf %847 : vector<2x32xf32>
    %849 = math.exp %848 : vector<2x32xf32>
    %cst_250 = arith.constant 1.000000e+00 : f32
    %850 = vector.broadcast %cst_250 : f32 to vector<2x32xf32>
    %851 = arith.addf %850, %849 : vector<2x32xf32>
    %852 = arith.divf %850, %851 : vector<2x32xf32>
    %853 = vector.extract_strided_slice %840 {offsets = [0, 64], sizes = [2, 32], strides = [1, 1]} : vector<2x128xf32> to vector<2x32xf32>
    %854 = math.tanh %853 : vector<2x32xf32>
    %855 = vector.extract_strided_slice %840 {offsets = [0, 96], sizes = [2, 32], strides = [1, 1]} : vector<2x128xf32> to vector<2x32xf32>
    %856 = arith.negf %855 : vector<2x32xf32>
    %857 = math.exp %856 : vector<2x32xf32>
    %cst_251 = arith.constant 1.000000e+00 : f32
    %858 = vector.broadcast %cst_251 : f32 to vector<2x32xf32>
    %859 = arith.addf %858, %857 : vector<2x32xf32>
    %860 = arith.divf %858, %859 : vector<2x32xf32>
    %861 = arith.mulf %852, %832 : vector<2x32xf32>
    %862 = arith.mulf %846, %854 : vector<2x32xf32>
    %863 = arith.addf %861, %862 : vector<2x32xf32>
    %864 = math.tanh %863 : vector<2x32xf32>
    %865 = arith.mulf %860, %864 : vector<2x32xf32>
    %c2_i32_252 = arith.constant 2 : i32
    %c7_i32_253 = arith.constant 7 : i32
    %866 = arith.subi %c7_i32_253, %c2_i32_252 : i32
    %c2_i32_254 = arith.constant 2 : i32
    %867 = arith.muli %866, %c2_i32_254 : i32
    %868 = arith.index_cast %867 : i32 to index
    %c0_255 = arith.constant 0 : index
    %869 = vector.load %arg19[%868, %c0_255] : memref<16x128xf32, #tpu.memory_space<vmem>>, vector<2x128xf32>
    %cst_256 = arith.constant dense<0.000000e+00> : vector<2x128xf32>
    %870 = tpu.matmul %865, %802, %cst_256 {dimension_numbers = #tpu.dot_dimension_numbers<[1], [0], [0], [1], [0, 0, 1, 1], [], []>} : vector<2x32xf32>, vector<32x128xf32>, vector<2x128xf32> -> vector<2x128xf32>
    %871 = arith.addf %869, %870 : vector<2x128xf32>
    %872 = vector.extract_strided_slice %871 {offsets = [0, 0], sizes = [2, 32], strides = [1, 1]} : vector<2x128xf32> to vector<2x32xf32>
    %873 = arith.negf %872 : vector<2x32xf32>
    %874 = math.exp %873 : vector<2x32xf32>
    %cst_257 = arith.constant 1.000000e+00 : f32
    %875 = vector.broadcast %cst_257 : f32 to vector<2x32xf32>
    %876 = arith.addf %875, %874 : vector<2x32xf32>
    %877 = arith.divf %875, %876 : vector<2x32xf32>
    %878 = vector.extract_strided_slice %871 {offsets = [0, 32], sizes = [2, 32], strides = [1, 1]} : vector<2x128xf32> to vector<2x32xf32>
    %879 = arith.negf %878 : vector<2x32xf32>
    %880 = math.exp %879 : vector<2x32xf32>
    %cst_258 = arith.constant 1.000000e+00 : f32
    %881 = vector.broadcast %cst_258 : f32 to vector<2x32xf32>
    %882 = arith.addf %881, %880 : vector<2x32xf32>
    %883 = arith.divf %881, %882 : vector<2x32xf32>
    %884 = vector.extract_strided_slice %871 {offsets = [0, 64], sizes = [2, 32], strides = [1, 1]} : vector<2x128xf32> to vector<2x32xf32>
    %885 = math.tanh %884 : vector<2x32xf32>
    %886 = vector.extract_strided_slice %871 {offsets = [0, 96], sizes = [2, 32], strides = [1, 1]} : vector<2x128xf32> to vector<2x32xf32>
    %887 = arith.negf %886 : vector<2x32xf32>
    %888 = math.exp %887 : vector<2x32xf32>
    %cst_259 = arith.constant 1.000000e+00 : f32
    %889 = vector.broadcast %cst_259 : f32 to vector<2x32xf32>
    %890 = arith.addf %889, %888 : vector<2x32xf32>
    %891 = arith.divf %889, %890 : vector<2x32xf32>
    %892 = arith.mulf %883, %863 : vector<2x32xf32>
    %893 = arith.mulf %877, %885 : vector<2x32xf32>
    %894 = arith.addf %892, %893 : vector<2x32xf32>
    %895 = math.tanh %894 : vector<2x32xf32>
    %896 = arith.mulf %891, %895 : vector<2x32xf32>
    %c3_i32_260 = arith.constant 3 : i32
    %c7_i32_261 = arith.constant 7 : i32
    %897 = arith.subi %c7_i32_261, %c3_i32_260 : i32
    %c2_i32_262 = arith.constant 2 : i32
    %898 = arith.muli %897, %c2_i32_262 : i32
    %899 = arith.index_cast %898 : i32 to index
    %c0_263 = arith.constant 0 : index
    %900 = vector.load %arg19[%899, %c0_263] : memref<16x128xf32, #tpu.memory_space<vmem>>, vector<2x128xf32>
    %cst_264 = arith.constant dense<0.000000e+00> : vector<2x128xf32>
    %901 = tpu.matmul %896, %802, %cst_264 {dimension_numbers = #tpu.dot_dimension_numbers<[1], [0], [0], [1], [0, 0, 1, 1], [], []>} : vector<2x32xf32>, vector<32x128xf32>, vector<2x128xf32> -> vector<2x128xf32>
    %902 = arith.addf %900, %901 : vector<2x128xf32>
    %903 = vector.extract_strided_slice %902 {offsets = [0, 0], sizes = [2, 32], strides = [1, 1]} : vector<2x128xf32> to vector<2x32xf32>
    %904 = arith.negf %903 : vector<2x32xf32>
    %905 = math.exp %904 : vector<2x32xf32>
    %cst_265 = arith.constant 1.000000e+00 : f32
    %906 = vector.broadcast %cst_265 : f32 to vector<2x32xf32>
    %907 = arith.addf %906, %905 : vector<2x32xf32>
    %908 = arith.divf %906, %907 : vector<2x32xf32>
    %909 = vector.extract_strided_slice %902 {offsets = [0, 32], sizes = [2, 32], strides = [1, 1]} : vector<2x128xf32> to vector<2x32xf32>
    %910 = arith.negf %909 : vector<2x32xf32>
    %911 = math.exp %910 : vector<2x32xf32>
    %cst_266 = arith.constant 1.000000e+00 : f32
    %912 = vector.broadcast %cst_266 : f32 to vector<2x32xf32>
    %913 = arith.addf %912, %911 : vector<2x32xf32>
    %914 = arith.divf %912, %913 : vector<2x32xf32>
    %915 = vector.extract_strided_slice %902 {offsets = [0, 64], sizes = [2, 32], strides = [1, 1]} : vector<2x128xf32> to vector<2x32xf32>
    %916 = math.tanh %915 : vector<2x32xf32>
    %917 = vector.extract_strided_slice %902 {offsets = [0, 96], sizes = [2, 32], strides = [1, 1]} : vector<2x128xf32> to vector<2x32xf32>
    %918 = arith.negf %917 : vector<2x32xf32>
    %919 = math.exp %918 : vector<2x32xf32>
    %cst_267 = arith.constant 1.000000e+00 : f32
    %920 = vector.broadcast %cst_267 : f32 to vector<2x32xf32>
    %921 = arith.addf %920, %919 : vector<2x32xf32>
    %922 = arith.divf %920, %921 : vector<2x32xf32>
    %923 = arith.mulf %914, %894 : vector<2x32xf32>
    %924 = arith.mulf %908, %916 : vector<2x32xf32>
    %925 = arith.addf %923, %924 : vector<2x32xf32>
    %926 = math.tanh %925 : vector<2x32xf32>
    %927 = arith.mulf %922, %926 : vector<2x32xf32>
    %c4_i32_268 = arith.constant 4 : i32
    %c7_i32_269 = arith.constant 7 : i32
    %928 = arith.subi %c7_i32_269, %c4_i32_268 : i32
    %c2_i32_270 = arith.constant 2 : i32
    %929 = arith.muli %928, %c2_i32_270 : i32
    %930 = arith.index_cast %929 : i32 to index
    %c0_271 = arith.constant 0 : index
    %931 = vector.load %arg19[%930, %c0_271] : memref<16x128xf32, #tpu.memory_space<vmem>>, vector<2x128xf32>
    %cst_272 = arith.constant dense<0.000000e+00> : vector<2x128xf32>
    %932 = tpu.matmul %927, %802, %cst_272 {dimension_numbers = #tpu.dot_dimension_numbers<[1], [0], [0], [1], [0, 0, 1, 1], [], []>} : vector<2x32xf32>, vector<32x128xf32>, vector<2x128xf32> -> vector<2x128xf32>
    %933 = arith.addf %931, %932 : vector<2x128xf32>
    %934 = vector.extract_strided_slice %933 {offsets = [0, 0], sizes = [2, 32], strides = [1, 1]} : vector<2x128xf32> to vector<2x32xf32>
    %935 = arith.negf %934 : vector<2x32xf32>
    %936 = math.exp %935 : vector<2x32xf32>
    %cst_273 = arith.constant 1.000000e+00 : f32
    %937 = vector.broadcast %cst_273 : f32 to vector<2x32xf32>
    %938 = arith.addf %937, %936 : vector<2x32xf32>
    %939 = arith.divf %937, %938 : vector<2x32xf32>
    %940 = vector.extract_strided_slice %933 {offsets = [0, 32], sizes = [2, 32], strides = [1, 1]} : vector<2x128xf32> to vector<2x32xf32>
    %941 = arith.negf %940 : vector<2x32xf32>
    %942 = math.exp %941 : vector<2x32xf32>
    %cst_274 = arith.constant 1.000000e+00 : f32
    %943 = vector.broadcast %cst_274 : f32 to vector<2x32xf32>
    %944 = arith.addf %943, %942 : vector<2x32xf32>
    %945 = arith.divf %943, %944 : vector<2x32xf32>
    %946 = vector.extract_strided_slice %933 {offsets = [0, 64], sizes = [2, 32], strides = [1, 1]} : vector<2x128xf32> to vector<2x32xf32>
    %947 = math.tanh %946 : vector<2x32xf32>
    %948 = vector.extract_strided_slice %933 {offsets = [0, 96], sizes = [2, 32], strides = [1, 1]} : vector<2x128xf32> to vector<2x32xf32>
    %949 = arith.negf %948 : vector<2x32xf32>
    %950 = math.exp %949 : vector<2x32xf32>
    %cst_275 = arith.constant 1.000000e+00 : f32
    %951 = vector.broadcast %cst_275 : f32 to vector<2x32xf32>
    %952 = arith.addf %951, %950 : vector<2x32xf32>
    %953 = arith.divf %951, %952 : vector<2x32xf32>
    %954 = arith.mulf %945, %925 : vector<2x32xf32>
    %955 = arith.mulf %939, %947 : vector<2x32xf32>
    %956 = arith.addf %954, %955 : vector<2x32xf32>
    %957 = math.tanh %956 : vector<2x32xf32>
    %958 = arith.mulf %953, %957 : vector<2x32xf32>
    %c5_i32_276 = arith.constant 5 : i32
    %c7_i32_277 = arith.constant 7 : i32
    %959 = arith.subi %c7_i32_277, %c5_i32_276 : i32
    %c2_i32_278 = arith.constant 2 : i32
    %960 = arith.muli %959, %c2_i32_278 : i32
    %961 = arith.index_cast %960 : i32 to index
    %c0_279 = arith.constant 0 : index
    %962 = vector.load %arg19[%961, %c0_279] : memref<16x128xf32, #tpu.memory_space<vmem>>, vector<2x128xf32>
    %cst_280 = arith.constant dense<0.000000e+00> : vector<2x128xf32>
    %963 = tpu.matmul %958, %802, %cst_280 {dimension_numbers = #tpu.dot_dimension_numbers<[1], [0], [0], [1], [0, 0, 1, 1], [], []>} : vector<2x32xf32>, vector<32x128xf32>, vector<2x128xf32> -> vector<2x128xf32>
    %964 = arith.addf %962, %963 : vector<2x128xf32>
    %965 = vector.extract_strided_slice %964 {offsets = [0, 0], sizes = [2, 32], strides = [1, 1]} : vector<2x128xf32> to vector<2x32xf32>
    %966 = arith.negf %965 : vector<2x32xf32>
    %967 = math.exp %966 : vector<2x32xf32>
    %cst_281 = arith.constant 1.000000e+00 : f32
    %968 = vector.broadcast %cst_281 : f32 to vector<2x32xf32>
    %969 = arith.addf %968, %967 : vector<2x32xf32>
    %970 = arith.divf %968, %969 : vector<2x32xf32>
    %971 = vector.extract_strided_slice %964 {offsets = [0, 32], sizes = [2, 32], strides = [1, 1]} : vector<2x128xf32> to vector<2x32xf32>
    %972 = arith.negf %971 : vector<2x32xf32>
    %973 = math.exp %972 : vector<2x32xf32>
    %cst_282 = arith.constant 1.000000e+00 : f32
    %974 = vector.broadcast %cst_282 : f32 to vector<2x32xf32>
    %975 = arith.addf %974, %973 : vector<2x32xf32>
    %976 = arith.divf %974, %975 : vector<2x32xf32>
    %977 = vector.extract_strided_slice %964 {offsets = [0, 64], sizes = [2, 32], strides = [1, 1]} : vector<2x128xf32> to vector<2x32xf32>
    %978 = math.tanh %977 : vector<2x32xf32>
    %979 = vector.extract_strided_slice %964 {offsets = [0, 96], sizes = [2, 32], strides = [1, 1]} : vector<2x128xf32> to vector<2x32xf32>
    %980 = arith.negf %979 : vector<2x32xf32>
    %981 = math.exp %980 : vector<2x32xf32>
    %cst_283 = arith.constant 1.000000e+00 : f32
    %982 = vector.broadcast %cst_283 : f32 to vector<2x32xf32>
    %983 = arith.addf %982, %981 : vector<2x32xf32>
    %984 = arith.divf %982, %983 : vector<2x32xf32>
    %985 = arith.mulf %976, %956 : vector<2x32xf32>
    %986 = arith.mulf %970, %978 : vector<2x32xf32>
    %987 = arith.addf %985, %986 : vector<2x32xf32>
    %988 = math.tanh %987 : vector<2x32xf32>
    %989 = arith.mulf %984, %988 : vector<2x32xf32>
    %c6_i32_284 = arith.constant 6 : i32
    %c7_i32_285 = arith.constant 7 : i32
    %990 = arith.subi %c7_i32_285, %c6_i32_284 : i32
    %c2_i32_286 = arith.constant 2 : i32
    %991 = arith.muli %990, %c2_i32_286 : i32
    %992 = arith.index_cast %991 : i32 to index
    %c0_287 = arith.constant 0 : index
    %993 = vector.load %arg19[%992, %c0_287] : memref<16x128xf32, #tpu.memory_space<vmem>>, vector<2x128xf32>
    %cst_288 = arith.constant dense<0.000000e+00> : vector<2x128xf32>
    %994 = tpu.matmul %989, %802, %cst_288 {dimension_numbers = #tpu.dot_dimension_numbers<[1], [0], [0], [1], [0, 0, 1, 1], [], []>} : vector<2x32xf32>, vector<32x128xf32>, vector<2x128xf32> -> vector<2x128xf32>
    %995 = arith.addf %993, %994 : vector<2x128xf32>
    %996 = vector.extract_strided_slice %995 {offsets = [0, 0], sizes = [2, 32], strides = [1, 1]} : vector<2x128xf32> to vector<2x32xf32>
    %997 = arith.negf %996 : vector<2x32xf32>
    %998 = math.exp %997 : vector<2x32xf32>
    %cst_289 = arith.constant 1.000000e+00 : f32
    %999 = vector.broadcast %cst_289 : f32 to vector<2x32xf32>
    %1000 = arith.addf %999, %998 : vector<2x32xf32>
    %1001 = arith.divf %999, %1000 : vector<2x32xf32>
    %1002 = vector.extract_strided_slice %995 {offsets = [0, 32], sizes = [2, 32], strides = [1, 1]} : vector<2x128xf32> to vector<2x32xf32>
    %1003 = arith.negf %1002 : vector<2x32xf32>
    %1004 = math.exp %1003 : vector<2x32xf32>
    %cst_290 = arith.constant 1.000000e+00 : f32
    %1005 = vector.broadcast %cst_290 : f32 to vector<2x32xf32>
    %1006 = arith.addf %1005, %1004 : vector<2x32xf32>
    %1007 = arith.divf %1005, %1006 : vector<2x32xf32>
    %1008 = vector.extract_strided_slice %995 {offsets = [0, 64], sizes = [2, 32], strides = [1, 1]} : vector<2x128xf32> to vector<2x32xf32>
    %1009 = math.tanh %1008 : vector<2x32xf32>
    %1010 = vector.extract_strided_slice %995 {offsets = [0, 96], sizes = [2, 32], strides = [1, 1]} : vector<2x128xf32> to vector<2x32xf32>
    %1011 = arith.negf %1010 : vector<2x32xf32>
    %1012 = math.exp %1011 : vector<2x32xf32>
    %cst_291 = arith.constant 1.000000e+00 : f32
    %1013 = vector.broadcast %cst_291 : f32 to vector<2x32xf32>
    %1014 = arith.addf %1013, %1012 : vector<2x32xf32>
    %1015 = arith.divf %1013, %1014 : vector<2x32xf32>
    %1016 = arith.mulf %1007, %987 : vector<2x32xf32>
    %1017 = arith.mulf %1001, %1009 : vector<2x32xf32>
    %1018 = arith.addf %1016, %1017 : vector<2x32xf32>
    %1019 = math.tanh %1018 : vector<2x32xf32>
    %1020 = arith.mulf %1015, %1019 : vector<2x32xf32>
    %c7_i32_292 = arith.constant 7 : i32
    %c7_i32_293 = arith.constant 7 : i32
    %1021 = arith.subi %c7_i32_293, %c7_i32_292 : i32
    %c2_i32_294 = arith.constant 2 : i32
    %1022 = arith.muli %1021, %c2_i32_294 : i32
    %1023 = arith.index_cast %1022 : i32 to index
    %c0_295 = arith.constant 0 : index
    %1024 = vector.load %arg19[%1023, %c0_295] : memref<16x128xf32, #tpu.memory_space<vmem>>, vector<2x128xf32>
    %cst_296 = arith.constant dense<0.000000e+00> : vector<2x128xf32>
    %1025 = tpu.matmul %1020, %802, %cst_296 {dimension_numbers = #tpu.dot_dimension_numbers<[1], [0], [0], [1], [0, 0, 1, 1], [], []>} : vector<2x32xf32>, vector<32x128xf32>, vector<2x128xf32> -> vector<2x128xf32>
    %1026 = arith.addf %1024, %1025 : vector<2x128xf32>
    %1027 = vector.extract_strided_slice %1026 {offsets = [0, 0], sizes = [2, 32], strides = [1, 1]} : vector<2x128xf32> to vector<2x32xf32>
    %1028 = arith.negf %1027 : vector<2x32xf32>
    %1029 = math.exp %1028 : vector<2x32xf32>
    %cst_297 = arith.constant 1.000000e+00 : f32
    %1030 = vector.broadcast %cst_297 : f32 to vector<2x32xf32>
    %1031 = arith.addf %1030, %1029 : vector<2x32xf32>
    %1032 = arith.divf %1030, %1031 : vector<2x32xf32>
    %1033 = vector.extract_strided_slice %1026 {offsets = [0, 32], sizes = [2, 32], strides = [1, 1]} : vector<2x128xf32> to vector<2x32xf32>
    %1034 = arith.negf %1033 : vector<2x32xf32>
    %1035 = math.exp %1034 : vector<2x32xf32>
    %cst_298 = arith.constant 1.000000e+00 : f32
    %1036 = vector.broadcast %cst_298 : f32 to vector<2x32xf32>
    %1037 = arith.addf %1036, %1035 : vector<2x32xf32>
    %1038 = arith.divf %1036, %1037 : vector<2x32xf32>
    %1039 = vector.extract_strided_slice %1026 {offsets = [0, 64], sizes = [2, 32], strides = [1, 1]} : vector<2x128xf32> to vector<2x32xf32>
    %1040 = math.tanh %1039 : vector<2x32xf32>
    %1041 = vector.extract_strided_slice %1026 {offsets = [0, 96], sizes = [2, 32], strides = [1, 1]} : vector<2x128xf32> to vector<2x32xf32>
    %1042 = arith.negf %1041 : vector<2x32xf32>
    %1043 = math.exp %1042 : vector<2x32xf32>
    %cst_299 = arith.constant 1.000000e+00 : f32
    %1044 = vector.broadcast %cst_299 : f32 to vector<2x32xf32>
    %1045 = arith.addf %1044, %1043 : vector<2x32xf32>
    %1046 = arith.divf %1044, %1045 : vector<2x32xf32>
    %1047 = arith.mulf %1038, %1018 : vector<2x32xf32>
    %1048 = arith.mulf %1032, %1040 : vector<2x32xf32>
    %1049 = arith.addf %1047, %1048 : vector<2x32xf32>
    %1050 = math.tanh %1049 : vector<2x32xf32>
    %1051 = arith.mulf %1046, %1050 : vector<2x32xf32>
    %c8_i32_300 = arith.constant 8 : i32
    %c0_301 = arith.constant 0 : index
    %c0_302 = arith.constant 0 : index
    %1052 = vector.load %arg12[%c0_301, %c0_302] : memref<1x32xf32, #tpu.memory_space<vmem>>, vector<1x32xf32>
    %1053 = vector.broadcast %1052 : vector<1x32xf32> to vector<2x32xf32>
    %1054 = arith.mulf %801, %1053 : vector<2x32xf32>
    %cst_303 = arith.constant dense<0.000000e+00> : vector<2xf32>
    %1055 = vector.multi_reduction <add>, %1054, %cst_303 [1] : vector<2x32xf32> to vector<2xf32>
    %1056 = vector.shape_cast %1055 : vector<2xf32> to vector<2x1xf32>
    %c0_304 = arith.constant 0 : index
    %c0_305 = arith.constant 0 : index
    %1057 = vector.load %arg13[%c0_304, %c0_305] : memref<1x32xf32, #tpu.memory_space<vmem>>, vector<1x32xf32>
    %1058 = vector.broadcast %1057 : vector<1x32xf32> to vector<2x32xf32>
    %1059 = arith.mulf %1051, %1058 : vector<2x32xf32>
    %cst_306 = arith.constant dense<0.000000e+00> : vector<2xf32>
    %1060 = vector.multi_reduction <add>, %1059, %cst_306 [1] : vector<2x32xf32> to vector<2xf32>
    %1061 = vector.shape_cast %1060 : vector<2xf32> to vector<2x1xf32>
    %1062 = arith.addf %1056, %1061 : vector<2x1xf32>
    %c0_307 = arith.constant 0 : index
    %c0_308 = arith.constant 0 : index
    %1063 = vector.load %arg14[%c0_307, %c0_308] : memref<1x1xf32, #tpu.memory_space<vmem>>, vector<1x1xf32>
    %1064 = vector.broadcast %1063 : vector<1x1xf32> to vector<2x1xf32>
    %1065 = arith.addf %1062, %1064 : vector<2x1xf32>
    %c0_309 = arith.constant 0 : index
    %c0_310 = arith.constant 0 : index
    %1066 = vector.load %arg15[%c0_309, %c0_310] : memref<2x1xf32, #tpu.memory_space<vmem>>, vector<2x1xf32>
    tpu.vector_store %arg15[%c0_309, %c0_310], %1065 {strides = array<i32>} : memref<2x1xf32, #tpu.memory_space<vmem>>, vector<2x1xf32>,
    return
  }
}

</mosaic_0001>

<llo_original>
// kernel: tpu_custom_call.1
$region0: #{tpu_custom_call.1}
  #allocation0 [shape = 'u32[]', space=smem, size = 0x4, offset = 0x4, fixed_abs, tag = 'smem constant byte address 0x4 - core index']
  #allocation1 [shape = 'u32[144,128]{1,0:T(1,128)}', space=vmem, size = 0x12000, scoped, tag = 'internal scratch']
  #allocation2 [shape = 'f32[16,32]{1,0:T(8,128)}', space=vmem, size = 0x2000, scoped, tag = 'scratch operand']
  #allocation3 [shape = 'f32[16,32]{1,0:T(8,128)}', space=vmem, size = 0x2000, scoped, tag = 'scratch operand']
  #allocation4 [shape = 'f32[16,128]{1,0:T(8,128)}', space=vmem, size = 0x2000, scoped, tag = 'scratch operand']
  #allocation5 [shape = 'f32[16,128]{1,0:T(8,128)}', space=vmem, size = 0x2000, scoped, tag = 'scratch operand']
  #allocation6 [shape = 'f32[1,1]{1,0:T(1,128)S(1)}', space=vmem, size = 0x200, scoped, tag = 'scoped memory for tpu_custom_call.1']
  %s0 = inlined_call_operand.hbm [shape: f32[16,128], index: 0, kind: input, shape index: {}]
  %s1 = inlined_call_operand.hbm [shape: f32[16,128], index: 1, kind: input, shape index: {}]
  %s2 = inlined_call_operand.hbm [shape: f32[32,128], index: 2, kind: input, shape index: {}]
  %s3 = inlined_call_operand.hbm [shape: f32[32,128], index: 3, kind: input, shape index: {}]
  %s4 = inlined_call_operand.hbm [shape: f32[32,128], index: 4, kind: input, shape index: {}]
  %s5 = inlined_call_operand.hbm [shape: f32[32,128], index: 5, kind: input, shape index: {}]
  %s6 = inlined_call_operand.vmem [shape: f32[1,128], index: 6, kind: input, shape index: {}]
  %s7 = inlined_call_operand.hbm [shape: f32[32,128], index: 7, kind: input, shape index: {}]
  %s8 = inlined_call_operand.hbm [shape: f32[32,128], index: 8, kind: input, shape index: {}]
  %s9 = inlined_call_operand.hbm [shape: f32[32,128], index: 9, kind: input, shape index: {}]
  %s10 = inlined_call_operand.vmem [shape: f32[1,128], index: 10, kind: input, shape index: {}]
  %s11 = inlined_call_operand.hbm [shape: f32[32,128], index: 11, kind: input, shape index: {}]
  %s12 = inlined_call_operand.vmem [shape: f32[1,32], index: 12, kind: input, shape index: {}]
  %s13 = inlined_call_operand.vmem [shape: f32[1,32], index: 13, kind: input, shape index: {}]
  %s14 = inlined_call_operand.<no memory space> [shape: f32[1,1], index: 14, kind: input, shape index: {}]
  %s15 = inlined_call_operand.vmem [shape: f32[2,1], index: 15, kind: output, shape index: {}]
  %s16 = sld [smem:[#allocation0]]
  $region110: #{tpu_custom_call.1} parent=0
    _
  %s18 = ssub.s32 1, %s16
  %s19 = scalar_select 0, %s18, %s16
  %v20 = vstv %s14
  %21 = vst [vmem:[#allocation6] sm:$0x1] %v20
  $region1: #{tpu_custom_call.1} parent=0
    #allocation7 [shape = 'u8[8192]{0}', space=vmem, size = 0x2000, scoped, tag = 'input window, operand 0, single buffered']
    #allocation8 [shape = 's32[1]{0}', space=sflag, size = 0x4, scoped, tag = 'scoped memory for tpu_custom_call.1']
    #allocation9 [shape = 'u8[8192]{0}', space=vmem, size = 0x2000, scoped, tag = 'input window, operand 1, single buffered']
    #allocation10 [shape = 's32[1]{0}', space=sflag, size = 0x4, scoped, tag = 'scoped memory for tpu_custom_call.1']
    #allocation11 [shape = 'u8[16384]{0}', space=vmem, size = 0x4000, scoped, tag = 'input window, operand 2, single buffered']
    #allocation12 [shape = 'u8[16384]{0}', space=vmem, size = 0x4000, scoped, tag = 'input window, operand 3, single buffered']
    #allocation13 [shape = 's32[1]{0}', space=sflag, size = 0x4, scoped, tag = 'scoped memory for tpu_custom_call.1']
    #allocation14 [shape = 'u8[16384]{0}', space=vmem, size = 0x4000, scoped, tag = 'input window, operand 4, single buffered']
    #allocation15 [shape = 'u8[16384]{0}', space=vmem, size = 0x4000, scoped, tag = 'input window, operand 5, single buffered']
    #allocation16 [shape = 's32[1]{0}', space=sflag, size = 0x4, scoped, tag = 'scoped memory for tpu_custom_call.1']
    #allocation17 [shape = 'u8[16384]{0}', space=vmem, size = 0x4000, scoped, tag = 'input window, operand 7, single buffered']
    #allocation18 [shape = 'u8[16384]{0}', space=vmem, size = 0x4000, scoped, tag = 'input window, operand 8, single buffered']
    #allocation19 [shape = 's32[1]{0}', space=sflag, size = 0x4, scoped, tag = 'scoped memory for tpu_custom_call.1']
    #allocation20 [shape = 'u8[16384]{0}', space=vmem, size = 0x4000, scoped, tag = 'input window, operand 9, single buffered']
    #allocation21 [shape = 'u8[16384]{0}', space=vmem, size = 0x4000, scoped, tag = 'input window, operand 11, single buffered']
    #allocation22 [shape = 's32[1]{0}', space=sflag, size = 0x4, scoped, tag = 'scoped memory for tpu_custom_call.1']
    %22 = vsyncpa [#allocation8], 0
    %23 = vsyncpa [#allocation10], 0
    %24 = vsyncpa [#allocation13], 0
    %25 = vsyncpa [#allocation16], 0
    %26 = vsyncpa [#allocation19], 0
    %27 = vsyncpa [#allocation22], 0
    // Predicated region
    $region2: #{tpu_custom_call.1} parent=1 // pred_check
      _
    $region3: #{tpu_custom_call.1} parent=1 // pred_check_branch
      %29 = sbr.rel (0) target = $region5
    $region4: #{tpu_custom_call.1} parent=1 // pred_region
      %s31 = ssub.s32 256, 256
      %32 = vsyncadd [#allocation8], %s31
      %s33 = sshll.u32 [#allocation7], 4
      %s34 = int_to_ptr.vmem [resolvable:$true] %s33
      %39 = dma.hbm_to_vmem [thread:$0]  %s0, 256, %s34, [#allocation8], 128, 128, 8
    $region5: #{tpu_custom_call.1} parent=1 // pred_fallthru
      _
    // Predicated region
    $region6: #{tpu_custom_call.1} parent=1 // pred_check
      _
    $region7: #{tpu_custom_call.1} parent=1 // pred_check_branch
      %41 = sbr.rel (0) target = $region9
    $region8: #{tpu_custom_call.1} parent=1 // pred_region
      %s43 = ssub.s32 256, 256
      %44 = vsyncadd [#allocation10], %s43
      %s45 = sshll.u32 [#allocation9], 4
      %s46 = int_to_ptr.vmem [resolvable:$true] %s45
      %51 = dma.hbm_to_vmem [thread:$0]  %s1, 256, %s46, [#allocation10], 128, 128, 8
    $region9: #{tpu_custom_call.1} parent=1 // pred_fallthru
      _
    // Predicated region
    $region10: #{tpu_custom_call.1} parent=1 // pred_check
      _
    $region11: #{tpu_custom_call.1} parent=1 // pred_check_branch
      %53 = sbr.rel (0) target = $region13
    $region12: #{tpu_custom_call.1} parent=1 // pred_region
      %s55 = ssub.s32 512, 512
      %56 = vsyncadd [#allocation10], %s55
      %s57 = sshll.u32 [#allocation11], 4
      %s58 = int_to_ptr.vmem [resolvable:$true] %s57
      %63 = dma.hbm_to_vmem [thread:$0]  %s2, 512, %s58, [#allocation10], 128, 128, 8
    $region13: #{tpu_custom_call.1} parent=1 // pred_fallthru
      _
    // Predicated region
    $region14: #{tpu_custom_call.1} parent=1 // pred_check
      _
    $region15: #{tpu_custom_call.1} parent=1 // pred_check_branch
      %65 = sbr.rel (0) target = $region17
    $region16: #{tpu_custom_call.1} parent=1 // pred_region
      %s67 = ssub.s32 512, 512
      %68 = vsyncadd [#allocation13], %s67
      %s69 = sshll.u32 [#allocation12], 4
      %s70 = int_to_ptr.vmem [resolvable:$true] %s69
      %75 = dma.hbm_to_vmem [thread:$0]  %s3, 512, %s70, [#allocation13], 128, 128, 8
    $region17: #{tpu_custom_call.1} parent=1 // pred_fallthru
      _
    // Predicated region
    $region18: #{tpu_custom_call.1} parent=1 // pred_check
      _
    $region19: #{tpu_custom_call.1} parent=1 // pred_check_branch
      %77 = sbr.rel (0) target = $region21
    $region20: #{tpu_custom_call.1} parent=1 // pred_region
      %s79 = ssub.s32 512, 512
      %80 = vsyncadd [#allocation13], %s79
      %s81 = sshll.u32 [#allocation14], 4
      %s82 = int_to_ptr.vmem [resolvable:$true] %s81
      %87 = dma.hbm_to_vmem [thread:$0]  %s4, 512, %s82, [#allocation13], 128, 128, 8
    $region21: #{tpu_custom_call.1} parent=1 // pred_fallthru
      _
    // Predicated region
    $region22: #{tpu_custom_call.1} parent=1 // pred_check
      _
    $region23: #{tpu_custom_call.1} parent=1 // pred_check_branch
      %89 = sbr.rel (0) target = $region25
    $region24: #{tpu_custom_call.1} parent=1 // pred_region
      %s91 = ssub.s32 512, 512
      %92 = vsyncadd [#allocation16], %s91
      %s93 = sshll.u32 [#allocation15], 4
      %s94 = int_to_ptr.vmem [resolvable:$true] %s93
      %99 = dma.hbm_to_vmem [thread:$0]  %s5, 512, %s94, [#allocation16], 128, 128, 8
    $region25: #{tpu_custom_call.1} parent=1 // pred_fallthru
      _
    // Predicated region
    $region26: #{tpu_custom_call.1} parent=1 // pred_check
      _
    $region27: #{tpu_custom_call.1} parent=1 // pred_check_branch
      %101 = sbr.rel (0) target = $region29
    $region28: #{tpu_custom_call.1} parent=1 // pred_region
      _
    $region29: #{tpu_custom_call.1} parent=1 // pred_fallthru
      _
    // Predicated region
    $region30: #{tpu_custom_call.1} parent=1 // pred_check
      _
    $region31: #{tpu_custom_call.1} parent=1 // pred_check_branch
      %103 = sbr.rel (0) target = $region33
    $region32: #{tpu_custom_call.1} parent=1 // pred_region
      %s105 = ssub.s32 512, 512
      %106 = vsyncadd [#allocation16], %s105
      %s107 = sshll.u32 [#allocation17], 4
      %s108 = int_to_ptr.vmem [resolvable:$true] %s107
      %113 = dma.hbm_to_vmem [thread:$0]  %s7, 512, %s108, [#allocation16], 128, 128, 8
    $region33: #{tpu_custom_call.1} parent=1 // pred_fallthru
      _
    // Predicated region
    $region34: #{tpu_custom_call.1} parent=1 // pred_check
      _
    $region35: #{tpu_custom_call.1} parent=1 // pred_check_branch
      %115 = sbr.rel (0) target = $region37
    $region36: #{tpu_custom_call.1} parent=1 // pred_region
      %s117 = ssub.s32 512, 512
      %118 = vsyncadd [#allocation19], %s117
      %s119 = sshll.u32 [#allocation18], 4
      %s120 = int_to_ptr.vmem [resolvable:$true] %s119
      %125 = dma.hbm_to_vmem [thread:$0]  %s8, 512, %s120, [#allocation19], 128, 128, 8
    $region37: #{tpu_custom_call.1} parent=1 // pred_fallthru
      _
    // Predicated region
    $region38: #{tpu_custom_call.1} parent=1 // pred_check
      _
    $region39: #{tpu_custom_call.1} parent=1 // pred_check_branch
      %127 = sbr.rel (0) target = $region41
    $region40: #{tpu_custom_call.1} parent=1 // pred_region
      %s129 = ssub.s32 512, 512
      %130 = vsyncadd [#allocation19], %s129
      %s131 = sshll.u32 [#allocation20], 4
      %s132 = int_to_ptr.vmem [resolvable:$true] %s131
      %137 = dma.hbm_to_vmem [thread:$0]  %s9, 512, %s132, [#allocation19], 128, 128, 8
    $region41: #{tpu_custom_call.1} parent=1 // pred_fallthru
      _
    // Predicated region
    $region42: #{tpu_custom_call.1} parent=1 // pred_check
      _
    $region43: #{tpu_custom_call.1} parent=1 // pred_check_branch
      %139 = sbr.rel (0) target = $region45
    $region44: #{tpu_custom_call.1} parent=1 // pred_region
      _
    $region45: #{tpu_custom_call.1} parent=1 // pred_fallthru
      _
    // Predicated region
    $region46: #{tpu_custom_call.1} parent=1 // pred_check
      _
    $region47: #{tpu_custom_call.1} parent=1 // pred_check_branch
      %141 = sbr.rel (0) target = $region49
    $region48: #{tpu_custom_call.1} parent=1 // pred_region
      %s143 = ssub.s32 512, 512
      %144 = vsyncadd [#allocation22], %s143
      %s145 = sshll.u32 [#allocation21], 4
      %s146 = int_to_ptr.vmem [resolvable:$true] %s145
      %151 = dma.hbm_to_vmem [thread:$0]  %s11, 512, %s146, [#allocation22], 128, 128, 8
    $region49: #{tpu_custom_call.1} parent=1 // pred_fallthru
      _
    // Predicated region
    $region50: #{tpu_custom_call.1} parent=1 // pred_check
      _
    $region51: #{tpu_custom_call.1} parent=1 // pred_check_branch
      %153 = sbr.rel (0) target = $region53
    $region52: #{tpu_custom_call.1} parent=1 // pred_region
      _
    $region53: #{tpu_custom_call.1} parent=1 // pred_fallthru
      _
    // Predicated region
    $region54: #{tpu_custom_call.1} parent=1 // pred_check
      _
    $region55: #{tpu_custom_call.1} parent=1 // pred_check_branch
      %155 = sbr.rel (0) target = $region57
    $region56: #{tpu_custom_call.1} parent=1 // pred_region
      _
    $region57: #{tpu_custom_call.1} parent=1 // pred_fallthru
      _
    // Predicated region
    $region58: #{tpu_custom_call.1} parent=1 // pred_check
      _
    $region59: #{tpu_custom_call.1} parent=1 // pred_check_branch
      %157 = sbr.rel (0) target = $region61
    $region60: #{tpu_custom_call.1} parent=1 // pred_region
      _
    $region61: #{tpu_custom_call.1} parent=1 // pred_fallthru
      _
    // Predicated region
    $region62: #{tpu_custom_call.1} parent=1 // pred_check
      _
    $region63: #{tpu_custom_call.1} parent=1 // pred_check_branch
      %159 = sbr.rel (0) target = $region65
    $region64: #{tpu_custom_call.1} parent=1 // pred_region
      %160 = dma.done [#allocation8], 256
    $region65: #{tpu_custom_call.1} parent=1 // pred_fallthru
      _
    // Predicated region
    $region66: #{tpu_custom_call.1} parent=1 // pred_check
      _
    $region67: #{tpu_custom_call.1} parent=1 // pred_check_branch
      %162 = sbr.rel (0) target = $region69
    $region68: #{tpu_custom_call.1} parent=1 // pred_region
      %163 = dma.done [#allocation10], 256
    $region69: #{tpu_custom_call.1} parent=1 // pred_fallthru
      _
    // Predicated region
    $region70: #{tpu_custom_call.1} parent=1 // pred_check
      _
    $region71: #{tpu_custom_call.1} parent=1 // pred_check_branch
      %165 = sbr.rel (0) target = $region73
    $region72: #{tpu_custom_call.1} parent=1 // pred_region
      %166 = dma.done [#allocation10], 512
    $region73: #{tpu_custom_call.1} parent=1 // pred_fallthru
      _
    // Predicated region
    $region74: #{tpu_custom_call.1} parent=1 // pred_check
      _
    $region75: #{tpu_custom_call.1} parent=1 // pred_check_branch
      %168 = sbr.rel (0) target = $region77
    $region76: #{tpu_custom_call.1} parent=1 // pred_region
      %169 = dma.done [#allocation13], 512
    $region77: #{tpu_custom_call.1} parent=1 // pred_fallthru
      _
    // Predicated region
    $region78: #{tpu_custom_call.1} parent=1 // pred_check
      _
    $region79: #{tpu_custom_call.1} parent=1 // pred_check_branch
      %171 = sbr.rel (0) target = $region81
    $region80: #{tpu_custom_call.1} parent=1 // pred_region
      %172 = dma.done [#allocation13], 512
    $region81: #{tpu_custom_call.1} parent=1 // pred_fallthru
      _
    // Predicated region
    $region82: #{tpu_custom_call.1} parent=1 // pred_check
      _
    $region83: #{tpu_custom_call.1} parent=1 // pred_check_branch
      %174 = sbr.rel (0) target = $region85
    $region84: #{tpu_custom_call.1} parent=1 // pred_region
      %175 = dma.done [#allocation16], 512
    $region85: #{tpu_custom_call.1} parent=1 // pred_fallthru
      _
    // Predicated region
    $region86: #{tpu_custom_call.1} parent=1 // pred_check
      _
    $region87: #{tpu_custom_call.1} parent=1 // pred_check_branch
      %177 = sbr.rel (0) target = $region89
    $region88: #{tpu_custom_call.1} parent=1 // pred_region
      %178 = dma.done [#allocation16], 512
    $region89: #{tpu_custom_call.1} parent=1 // pred_fallthru
      _
    // Predicated region
    $region90: #{tpu_custom_call.1} parent=1 // pred_check
      _
    $region91: #{tpu_custom_call.1} parent=1 // pred_check_branch
      %180 = sbr.rel (0) target = $region93
    $region92: #{tpu_custom_call.1} parent=1 // pred_region
      %181 = dma.done [#allocation19], 512
    $region93: #{tpu_custom_call.1} parent=1 // pred_fallthru
      _
    // Predicated region
    $region94: #{tpu_custom_call.1} parent=1 // pred_check
      _
    $region95: #{tpu_custom_call.1} parent=1 // pred_check_branch
      %183 = sbr.rel (0) target = $region97
    $region96: #{tpu_custom_call.1} parent=1 // pred_region
      %184 = dma.done [#allocation19], 512
    $region97: #{tpu_custom_call.1} parent=1 // pred_fallthru
      _
    // Predicated region
    $region98: #{tpu_custom_call.1} parent=1 // pred_check
      _
    $region99: #{tpu_custom_call.1} parent=1 // pred_check_branch
      %186 = sbr.rel (0) target = $region101
    $region100: #{tpu_custom_call.1} parent=1 // pred_region
      %187 = dma.done [#allocation22], 512
    $region101: #{tpu_custom_call.1} parent=1 // pred_fallthru
      _
    %v188 = vld [vmem:[#allocation11] sm:$0xff]
    %v189 = vld [vmem:[#allocation11 + $0x8] sm:$0xff]
    %v190 = vld [vmem:[#allocation11 + $0x10] sm:$0xff]
    %v191 = vld [vmem:[#allocation11 + $0x18] sm:$0xff]
    %v192 = vld [vmem:[#allocation7] sm:$0x3]
    %vm193 = vcmask 261120
    %v195 = vsel %vm193, 0.0, 0
    %197 = vmatprep.subr.mxu0 0.0
    %198 = vmatpush1.msra.mxu0 0.0
    %199 = vmatprep.subr.mxu0 0.0
    %200 = vmatpush1.msra.mxu0 0.0
    %201 = vmatprep.subr.mxu0 0.0
    %202 = vmatpush1.msra.mxu0 0.0
    %203 = vmatprep.subr.mxu0 0.0
    %204 = vmatpush1.msra.mxu0 0.0
    %205 = vmatprep.subr.mxu0 0.0
    %206 = vmatpush1.msra.mxu0 0.0
    %207 = vmatprep.subr.mxu0 0.0
    %208 = vmatpush1.msra.mxu0 0.0
    %209 = vmatprep.subr.mxu0 0.0
    %210 = vmatpush1.msra.mxu0 0.0
    %211 = vmatprep.subr.mxu0 0.0
    %212 = vmatpush1.msra.mxu0 0.0
    %213 = vmatprep.subr.mxu0 0.0
    %214 = vmatpush1.msra.mxu0 0.0
    %215 = vmatprep.subr.mxu0 0.0
    %216 = vmatpush1.msra.mxu0 0.0
    %217 = vmatprep.subr.mxu0 0.0
    %218 = vmatpush1.msra.mxu0 0.0
    %219 = vmatprep.subr.mxu0 0.0
    %220 = vmatpush1.msra.mxu0 0.0
    %221 = vmatprep.subr.mxu0 0.0
    %222 = vmatpush1.msra.mxu0 %v191
    %223 = vmatprep.subr.mxu0 0.0
    %224 = vmatpush1.msra.mxu0 %v190
    %225 = vmatprep.subr.mxu0 0.0
    %226 = vmatpush1.msra.mxu0 %v189
    %227 = vmatprep.subr.mxu0 0.0
    %228 = vmatpush1.msra.mxu0 %v188
    %229 = vmatprep.subr.mxu0 0.0
    %230 = vmatpush2.msra.mxu0 0.0
    %231 = vmatprep.subr.mxu0 0.0
    %232 = vmatpush2.msra.mxu0 0.0
    %233 = vmatprep.subr.mxu0 0.0
    %234 = vmatpush2.msra.mxu0 0.0
    %235 = vmatprep.subr.mxu0 0.0
    %236 = vmatpush2.msra.mxu0 0.0
    %237 = vmatprep.subr.mxu0 0.0
    %238 = vmatpush2.msra.mxu0 0.0
    %239 = vmatprep.subr.mxu0 0.0
    %240 = vmatpush2.msra.mxu0 0.0
    %241 = vmatprep.subr.mxu0 0.0
    %242 = vmatpush2.msra.mxu0 0.0
    %243 = vmatprep.subr.mxu0 0.0
    %244 = vmatpush2.msra.mxu0 0.0
    %245 = vmatprep.subr.mxu0 0.0
    %246 = vmatpush2.msra.mxu0 0.0
    %247 = vmatprep.subr.mxu0 0.0
    %248 = vmatpush2.msra.mxu0 0.0
    %249 = vmatprep.subr.mxu0 0.0
    %250 = vmatpush2.msra.mxu0 0.0
    %251 = vmatprep.subr.mxu0 0.0
    %252 = vmatpush2.msra.mxu0 0.0
    %253 = vmatprep.subr.mxu0 0.0
    %254 = vmatpush2.msra.mxu0 0.0
    %255 = vmatprep.subr.mxu0 0.0
    %256 = vmatpush2.msra.mxu0 0.0
    %257 = vmatprep.subr.mxu0 0.0
    %258 = vmatpush2.msra.mxu0 0.0
    %259 = vmatprep.subr.mxu0 0.0
    %260 = vmatpush2.msra.mxu0 0.0
    %261 = vmatprep.mubr.f32.mxu0 0.0
    %262 = vmatmul.mubr.f32.gmra.mxu0 %v195
    %v263 = vpop.f32.mrf.mxu0
    %v264 = vadd.f32 0.0, %v263
    %v265 = vpop.f32.mrf.mxu0
    %266 = vdwg.mxu0
    %v267 = vadd.f32 %v192, %v264
    %v268 = vxor.u32 %v267, 2147483648
    %v269 = vmul.f32 %v268, 1.442695
    %v270 = vpow.pop %v269
    %v271 = vadd.f32 %v270, 1.0
    %v272 = vrcp.pop %v271
    %v273 = vmul.f32 1.0, %v272
    %v274 = vtanh.pop %v267
    %v275 = vmul.f32 %v273, 0.0
    %277 = vrot.lane.b32.xlu0 %v274, 64
    %v278 = vpop.permute.xlu0 %277
    %v280 = vmul.f32 %v273, %v278
    %282 = vrot.lane.b32.xlu0 %v280, 32
    %v283 = vpop.permute.xlu0 %282
    %v285 = vadd.f32 %v275, %v283
    %v286 = vtanh.pop %v285
    %288 = vrot.lane.b32.xlu0 %v286, 64
    %v289 = vpop.permute.xlu0 %288
    %v291 = vmul.f32 %v273, %v289
    %293 = vrot.lane.b32.xlu0 %v291, 32
    %v294 = vpop.permute.xlu0 %293
    %vm296 = vcmask 254976
    %297 = vst.msk [vmem:[#allocation2] sm:$0x3] %vm296, %v294
    %v298 = vld [vmem:[#allocation7 + $0x2] sm:$0x3]
    %v299 = vsel %vm193, %v294, 0
    %301 = vmatprep.subr.mxu0 0.0
    %302 = vmatpush1.msra.mxu0 0.0
    %303 = vmatprep.subr.mxu0 0.0
    %304 = vmatpush1.msra.mxu0 0.0
    %305 = vmatprep.subr.mxu0 0.0
    %306 = vmatpush1.msra.mxu0 0.0
    %307 = vmatprep.subr.mxu0 0.0
    %308 = vmatpush1.msra.mxu0 0.0
    %309 = vmatprep.subr.mxu0 0.0
    %310 = vmatpush1.msra.mxu0 0.0
    %311 = vmatprep.subr.mxu0 0.0
    %312 = vmatpush1.msra.mxu0 0.0
    %313 = vmatprep.subr.mxu0 0.0
    %314 = vmatpush1.msra.mxu0 0.0
    %315 = vmatprep.subr.mxu0 0.0
    %316 = vmatpush1.msra.mxu0 0.0
    %317 = vmatprep.subr.mxu0 0.0
    %318 = vmatpush1.msra.mxu0 0.0
    %319 = vmatprep.subr.mxu0 0.0
    %320 = vmatpush1.msra.mxu0 0.0
    %321 = vmatprep.subr.mxu0 0.0
    %322 = vmatpush1.msra.mxu0 0.0
    %323 = vmatprep.subr.mxu0 0.0
    %324 = vmatpush1.msra.mxu0 0.0
    %325 = vmatprep.subr.mxu0 0.0
    %326 = vmatpush1.msra.mxu0 %v191
    %327 = vmatprep.subr.mxu0 0.0
    %328 = vmatpush1.msra.mxu0 %v190
    %329 = vmatprep.subr.mxu0 0.0
    %330 = vmatpush1.msra.mxu0 %v189
    %331 = vmatprep.subr.mxu0 0.0
    %332 = vmatpush1.msra.mxu0 %v188
    %333 = vmatprep.subr.mxu0 0.0
    %334 = vmatpush2.msra.mxu0 0.0
    %335 = vmatprep.subr.mxu0 0.0
    %336 = vmatpush2.msra.mxu0 0.0
    %337 = vmatprep.subr.mxu0 0.0
    %338 = vmatpush2.msra.mxu0 0.0
    %339 = vmatprep.subr.mxu0 0.0
    %340 = vmatpush2.msra.mxu0 0.0
    %341 = vmatprep.subr.mxu0 0.0
    %342 = vmatpush2.msra.mxu0 0.0
    %343 = vmatprep.subr.mxu0 0.0
    %344 = vmatpush2.msra.mxu0 0.0
    %345 = vmatprep.subr.mxu0 0.0
    %346 = vmatpush2.msra.mxu0 0.0
    %347 = vmatprep.subr.mxu0 0.0
    %348 = vmatpush2.msra.mxu0 0.0
    %349 = vmatprep.subr.mxu0 0.0
    %350 = vmatpush2.msra.mxu0 0.0
    %351 = vmatprep.subr.mxu0 0.0
    %352 = vmatpush2.msra.mxu0 0.0
    %353 = vmatprep.subr.mxu0 0.0
    %354 = vmatpush2.msra.mxu0 0.0
    %355 = vmatprep.subr.mxu0 0.0
    %356 = vmatpush2.msra.mxu0 0.0
    %357 = vmatprep.subr.mxu0 0.0
    %358 = vmatpush2.msra.mxu0 0.0
    %359 = vmatprep.subr.mxu0 0.0
    %360 = vmatpush2.msra.mxu0 0.0
    %361 = vmatprep.subr.mxu0 0.0
    %362 = vmatpush2.msra.mxu0 0.0
    %363 = vmatprep.subr.mxu0 0.0
    %364 = vmatpush2.msra.mxu0 0.0
    %365 = vmatprep.mubr.f32.mxu0 0.0
    %366 = vmatmul.mubr.f32.gmra.mxu0 %v299
    %v367 = vpop.f32.mrf.mxu0
    %v368 = vadd.f32 0.0, %v367
    %v369 = vpop.f32.mrf.mxu0
    %370 = vdwg.mxu0
    %v371 = vadd.f32 %v298, %v368
    %v372 = vxor.u32 %v371, 2147483648
    %v373 = vmul.f32 %v372, 1.442695
    %v374 = vpow.pop %v373
    %v375 = vadd.f32 %v374, 1.0
    %v376 = vrcp.pop %v375
    %v377 = vmul.f32 1.0, %v376
    %v378 = vtanh.pop %v371
    %v379 = vmul.f32 %v377, %v285
    %381 = vrot.lane.b32.xlu0 %v378, 64
    %v382 = vpop.permute.xlu0 %381
    %v384 = vmul.f32 %v377, %v382
    %386 = vrot.lane.b32.xlu0 %v384, 32
    %v387 = vpop.permute.xlu0 %386
    %v389 = vadd.f32 %v379, %v387
    %v390 = vtanh.pop %v389
    %392 = vrot.lane.b32.xlu0 %v390, 64
    %v393 = vpop.permute.xlu0 %392
    %v395 = vmul.f32 %v377, %v393
    %397 = vrot.lane.b32.xlu0 %v395, 32
    %v398 = vpop.permute.xlu0 %397
    %400 = vst.msk [vmem:[#allocation2 + $0x2] sm:$0x3] %vm296, %v398
    %v401 = vld [vmem:[#allocation7 + $0x4] sm:$0x3]
    %v402 = vsel %vm193, %v398, 0
    %404 = vmatprep.subr.mxu0 0.0
    %405 = vmatpush1.msra.mxu0 0.0
    %406 = vmatprep.subr.mxu0 0.0
    %407 = vmatpush1.msra.mxu0 0.0
    %408 = vmatprep.subr.mxu0 0.0
    %409 = vmatpush1.msra.mxu0 0.0
    %410 = vmatprep.subr.mxu0 0.0
    %411 = vmatpush1.msra.mxu0 0.0
    %412 = vmatprep.subr.mxu0 0.0
    %413 = vmatpush1.msra.mxu0 0.0
    %414 = vmatprep.subr.mxu0 0.0
    %415 = vmatpush1.msra.mxu0 0.0
    %416 = vmatprep.subr.mxu0 0.0
    %417 = vmatpush1.msra.mxu0 0.0
    %418 = vmatprep.subr.mxu0 0.0
    %419 = vmatpush1.msra.mxu0 0.0
    %420 = vmatprep.subr.mxu0 0.0
    %421 = vmatpush1.msra.mxu0 0.0
    %422 = vmatprep.subr.mxu0 0.0
    %423 = vmatpush1.msra.mxu0 0.0
    %424 = vmatprep.subr.mxu0 0.0
    %425 = vmatpush1.msra.mxu0 0.0
    %426 = vmatprep.subr.mxu0 0.0
    %427 = vmatpush1.msra.mxu0 0.0
    %428 = vmatprep.subr.mxu0 0.0
    %429 = vmatpush1.msra.mxu0 %v191
    %430 = vmatprep.subr.mxu0 0.0
    %431 = vmatpush1.msra.mxu0 %v190
    %432 = vmatprep.subr.mxu0 0.0
    %433 = vmatpush1.msra.mxu0 %v189
    %434 = vmatprep.subr.mxu0 0.0
    %435 = vmatpush1.msra.mxu0 %v188
    %436 = vmatprep.subr.mxu0 0.0
    %437 = vmatpush2.msra.mxu0 0.0
    %438 = vmatprep.subr.mxu0 0.0
    %439 = vmatpush2.msra.mxu0 0.0
    %440 = vmatprep.subr.mxu0 0.0
    %441 = vmatpush2.msra.mxu0 0.0
    %442 = vmatprep.subr.mxu0 0.0
    %443 = vmatpush2.msra.mxu0 0.0
    %444 = vmatprep.subr.mxu0 0.0
    %445 = vmatpush2.msra.mxu0 0.0
    %446 = vmatprep.subr.mxu0 0.0
    %447 = vmatpush2.msra.mxu0 0.0
    %448 = vmatprep.subr.mxu0 0.0
    %449 = vmatpush2.msra.mxu0 0.0
    %450 = vmatprep.subr.mxu0 0.0
    %451 = vmatpush2.msra.mxu0 0.0
    %452 = vmatprep.subr.mxu0 0.0
    %453 = vmatpush2.msra.mxu0 0.0
    %454 = vmatprep.subr.mxu0 0.0
    %455 = vmatpush2.msra.mxu0 0.0
    %456 = vmatprep.subr.mxu0 0.0
    %457 = vmatpush2.msra.mxu0 0.0
    %458 = vmatprep.subr.mxu0 0.0
    %459 = vmatpush2.msra.mxu0 0.0
    %460 = vmatprep.subr.mxu0 0.0
    %461 = vmatpush2.msra.mxu0 0.0
    %462 = vmatprep.subr.mxu0 0.0
    %463 = vmatpush2.msra.mxu0 0.0
    %464 = vmatprep.subr.mxu0 0.0
    %465 = vmatpush2.msra.mxu0 0.0
    %466 = vmatprep.subr.mxu0 0.0
    %467 = vmatpush2.msra.mxu0 0.0
    %468 = vmatprep.mubr.f32.mxu0 0.0
    %469 = vmatmul.mubr.f32.gmra.mxu0 %v402
    %v470 = vpop.f32.mrf.mxu0
    %v471 = vadd.f32 0.0, %v470
    %v472 = vpop.f32.mrf.mxu0
    %473 = vdwg.mxu0
    %v474 = vadd.f32 %v401, %v471
    %v475 = vxor.u32 %v474, 2147483648
    %v476 = vmul.f32 %v475, 1.442695
    %v477 = vpow.pop %v476
    %v478 = vadd.f32 %v477, 1.0
    %v479 = vrcp.pop %v478
    %v480 = vmul.f32 1.0, %v479
    %v481 = vtanh.pop %v474
    %v482 = vmul.f32 %v480, %v389
    %484 = vrot.lane.b32.xlu0 %v481, 64
    %v485 = vpop.permute.xlu0 %484
    %v487 = vmul.f32 %v480, %v485
    %489 = vrot.lane.b32.xlu0 %v487, 32
    %v490 = vpop.permute.xlu0 %489
    %v492 = vadd.f32 %v482, %v490
    %v493 = vtanh.pop %v492
    %495 = vrot.lane.b32.xlu0 %v493, 64
    %v496 = vpop.permute.xlu0 %495
    %v498 = vmul.f32 %v480, %v496
    %500 = vrot.lane.b32.xlu0 %v498, 32
    %v501 = vpop.permute.xlu0 %500
    %503 = vst.msk [vmem:[#allocation2 + $0x4] sm:$0x3] %vm296, %v501
    %v504 = vld [vmem:[#allocation7 + $0x6] sm:$0x3]
    %v505 = vsel %vm193, %v501, 0
    %507 = vmatprep.subr.mxu0 0.0
    %508 = vmatpush1.msra.mxu0 0.0
    %509 = vmatprep.subr.mxu0 0.0
    %510 = vmatpush1.msra.mxu0 0.0
    %511 = vmatprep.subr.mxu0 0.0
    %512 = vmatpush1.msra.mxu0 0.0
    %513 = vmatprep.subr.mxu0 0.0
    %514 = vmatpush1.msra.mxu0 0.0
    %515 = vmatprep.subr.mxu0 0.0
    %516 = vmatpush1.msra.mxu0 0.0
    %517 = vmatprep.subr.mxu0 0.0
    %518 = vmatpush1.msra.mxu0 0.0
    %519 = vmatprep.subr.mxu0 0.0
    %520 = vmatpush1.msra.mxu0 0.0
    %521 = vmatprep.subr.mxu0 0.0
    %522 = vmatpush1.msra.mxu0 0.0
    %523 = vmatprep.subr.mxu0 0.0
    %524 = vmatpush1.msra.mxu0 0.0
    %525 = vmatprep.subr.mxu0 0.0
    %526 = vmatpush1.msra.mxu0 0.0
    %527 = vmatprep.subr.mxu0 0.0
    %528 = vmatpush1.msra.mxu0 0.0
    %529 = vmatprep.subr.mxu0 0.0
    %530 = vmatpush1.msra.mxu0 0.0
    %531 = vmatprep.subr.mxu0 0.0
    %532 = vmatpush1.msra.mxu0 %v191
    %533 = vmatprep.subr.mxu0 0.0
    %534 = vmatpush1.msra.mxu0 %v190
    %535 = vmatprep.subr.mxu0 0.0
    %536 = vmatpush1.msra.mxu0 %v189
    %537 = vmatprep.subr.mxu0 0.0
    %538 = vmatpush1.msra.mxu0 %v188
    %539 = vmatprep.subr.mxu0 0.0
    %540 = vmatpush2.msra.mxu0 0.0
    %541 = vmatprep.subr.mxu0 0.0
    %542 = vmatpush2.msra.mxu0 0.0
    %543 = vmatprep.subr.mxu0 0.0
    %544 = vmatpush2.msra.mxu0 0.0
    %545 = vmatprep.subr.mxu0 0.0
    %546 = vmatpush2.msra.mxu0 0.0
    %547 = vmatprep.subr.mxu0 0.0
    %548 = vmatpush2.msra.mxu0 0.0
    %549 = vmatprep.subr.mxu0 0.0
    %550 = vmatpush2.msra.mxu0 0.0
    %551 = vmatprep.subr.mxu0 0.0
    %552 = vmatpush2.msra.mxu0 0.0
    %553 = vmatprep.subr.mxu0 0.0
    %554 = vmatpush2.msra.mxu0 0.0
    %555 = vmatprep.subr.mxu0 0.0
    %556 = vmatpush2.msra.mxu0 0.0
    %557 = vmatprep.subr.mxu0 0.0
    %558 = vmatpush2.msra.mxu0 0.0
    %559 = vmatprep.subr.mxu0 0.0
    %560 = vmatpush2.msra.mxu0 0.0
    %561 = vmatprep.subr.mxu0 0.0
    %562 = vmatpush2.msra.mxu0 0.0
    %563 = vmatprep.subr.mxu0 0.0
    %564 = vmatpush2.msra.mxu0 0.0
    %565 = vmatprep.subr.mxu0 0.0
    %566 = vmatpush2.msra.mxu0 0.0
    %567 = vmatprep.subr.mxu0 0.0
    %568 = vmatpush2.msra.mxu0 0.0
    %569 = vmatprep.subr.mxu0 0.0
    %570 = vmatpush2.msra.mxu0 0.0
    %571 = vmatprep.mubr.f32.mxu0 0.0
    %572 = vmatmul.mubr.f32.gmra.mxu0 %v505
    %v573 = vpop.f32.mrf.mxu0
    %v574 = vadd.f32 0.0, %v573
    %v575 = vpop.f32.mrf.mxu0
    %576 = vdwg.mxu0
    %v577 = vadd.f32 %v504, %v574
    %v578 = vxor.u32 %v577, 2147483648
    %v579 = vmul.f32 %v578, 1.442695
    %v580 = vpow.pop %v579
    %v581 = vadd.f32 %v580, 1.0
    %v582 = vrcp.pop %v581
    %v583 = vmul.f32 1.0, %v582
    %v584 = vtanh.pop %v577
    %v585 = vmul.f32 %v583, %v492
    %587 = vrot.lane.b32.xlu0 %v584, 64
    %v588 = vpop.permute.xlu0 %587
    %v590 = vmul.f32 %v583, %v588
    %592 = vrot.lane.b32.xlu0 %v590, 32
    %v593 = vpop.permute.xlu0 %592
    %v595 = vadd.f32 %v585, %v593
    %v596 = vtanh.pop %v595
    %598 = vrot.lane.b32.xlu0 %v596, 64
    %v599 = vpop.permute.xlu0 %598
    %v601 = vmul.f32 %v583, %v599
    %603 = vrot.lane.b32.xlu0 %v601, 32
    %v604 = vpop.permute.xlu0 %603
    %606 = vst.msk [vmem:[#allocation2 + $0x6] sm:$0x3] %vm296, %v604
    %v607 = vld [vmem:[#allocation7 + $0x8] sm:$0x3]
    %v608 = vsel %vm193, %v604, 0
    %610 = vmatprep.subr.mxu0 0.0
    %611 = vmatpush1.msra.mxu0 0.0
    %612 = vmatprep.subr.mxu0 0.0
    %613 = vmatpush1.msra.mxu0 0.0
    %614 = vmatprep.subr.mxu0 0.0
    %615 = vmatpush1.msra.mxu0 0.0
    %616 = vmatprep.subr.mxu0 0.0
    %617 = vmatpush1.msra.mxu0 0.0
    %618 = vmatprep.subr.mxu0 0.0
    %619 = vmatpush1.msra.mxu0 0.0
    %620 = vmatprep.subr.mxu0 0.0
    %621 = vmatpush1.msra.mxu0 0.0
    %622 = vmatprep.subr.mxu0 0.0
    %623 = vmatpush1.msra.mxu0 0.0
    %624 = vmatprep.subr.mxu0 0.0
    %625 = vmatpush1.msra.mxu0 0.0
    %626 = vmatprep.subr.mxu0 0.0
    %627 = vmatpush1.msra.mxu0 0.0
    %628 = vmatprep.subr.mxu0 0.0
    %629 = vmatpush1.msra.mxu0 0.0
    %630 = vmatprep.subr.mxu0 0.0
    %631 = vmatpush1.msra.mxu0 0.0
    %632 = vmatprep.subr.mxu0 0.0
    %633 = vmatpush1.msra.mxu0 0.0
    %634 = vmatprep.subr.mxu0 0.0
    %635 = vmatpush1.msra.mxu0 %v191
    %636 = vmatprep.subr.mxu0 0.0
    %637 = vmatpush1.msra.mxu0 %v190
    %638 = vmatprep.subr.mxu0 0.0
    %639 = vmatpush1.msra.mxu0 %v189
    %640 = vmatprep.subr.mxu0 0.0
    %641 = vmatpush1.msra.mxu0 %v188
    %642 = vmatprep.subr.mxu0 0.0
    %643 = vmatpush2.msra.mxu0 0.0
    %644 = vmatprep.subr.mxu0 0.0
    %645 = vmatpush2.msra.mxu0 0.0
    %646 = vmatprep.subr.mxu0 0.0
    %647 = vmatpush2.msra.mxu0 0.0
    %648 = vmatprep.subr.mxu0 0.0
    %649 = vmatpush2.msra.mxu0 0.0
    %650 = vmatprep.subr.mxu0 0.0
    %651 = vmatpush2.msra.mxu0 0.0
    %652 = vmatprep.subr.mxu0 0.0
    %653 = vmatpush2.msra.mxu0 0.0
    %654 = vmatprep.subr.mxu0 0.0
    %655 = vmatpush2.msra.mxu0 0.0
    %656 = vmatprep.subr.mxu0 0.0
    %657 = vmatpush2.msra.mxu0 0.0
    %658 = vmatprep.subr.mxu0 0.0
    %659 = vmatpush2.msra.mxu0 0.0
    %660 = vmatprep.subr.mxu0 0.0
    %661 = vmatpush2.msra.mxu0 0.0
    %662 = vmatprep.subr.mxu0 0.0
    %663 = vmatpush2.msra.mxu0 0.0
    %664 = vmatprep.subr.mxu0 0.0
    %665 = vmatpush2.msra.mxu0 0.0
    %666 = vmatprep.subr.mxu0 0.0
    %667 = vmatpush2.msra.mxu0 0.0
    %668 = vmatprep.subr.mxu0 0.0
    %669 = vmatpush2.msra.mxu0 0.0
    %670 = vmatprep.subr.mxu0 0.0
    %671 = vmatpush2.msra.mxu0 0.0
    %672 = vmatprep.subr.mxu0 0.0
    %673 = vmatpush2.msra.mxu0 0.0
    %674 = vmatprep.mubr.f32.mxu0 0.0
    %675 = vmatmul.mubr.f32.gmra.mxu0 %v608
    %v676 = vpop.f32.mrf.mxu0
    %v677 = vadd.f32 0.0, %v676
    %v678 = vpop.f32.mrf.mxu0
    %679 = vdwg.mxu0
    %v680 = vadd.f32 %v607, %v677
    %v681 = vxor.u32 %v680, 2147483648
    %v682 = vmul.f32 %v681, 1.442695
    %v683 = vpow.pop %v682
    %v684 = vadd.f32 %v683, 1.0
    %v685 = vrcp.pop %v684
    %v686 = vmul.f32 1.0, %v685
    %v687 = vtanh.pop %v680
    %v688 = vmul.f32 %v686, %v595
    %690 = vrot.lane.b32.xlu0 %v687, 64
    %v691 = vpop.permute.xlu0 %690
    %v693 = vmul.f32 %v686, %v691
    %695 = vrot.lane.b32.xlu0 %v693, 32
    %v696 = vpop.permute.xlu0 %695
    %v698 = vadd.f32 %v688, %v696
    %v699 = vtanh.pop %v698
    %701 = vrot.lane.b32.xlu0 %v699, 64
    %v702 = vpop.permute.xlu0 %701
    %v704 = vmul.f32 %v686, %v702
    %706 = vrot.lane.b32.xlu0 %v704, 32
    %v707 = vpop.permute.xlu0 %706
    %709 = vst.msk [vmem:[#allocation2 + $0x8] sm:$0x3] %vm296, %v707
    %v710 = vld [vmem:[#allocation7 + $0xa] sm:$0x3]
    %v711 = vsel %vm193, %v707, 0
    %713 = vmatprep.subr.mxu0 0.0
    %714 = vmatpush1.msra.mxu0 0.0
    %715 = vmatprep.subr.mxu0 0.0
    %716 = vmatpush1.msra.mxu0 0.0
    %717 = vmatprep.subr.mxu0 0.0
    %718 = vmatpush1.msra.mxu0 0.0
    %719 = vmatprep.subr.mxu0 0.0
    %720 = vmatpush1.msra.mxu0 0.0
    %721 = vmatprep.subr.mxu0 0.0
    %722 = vmatpush1.msra.mxu0 0.0
    %723 = vmatprep.subr.mxu0 0.0
    %724 = vmatpush1.msra.mxu0 0.0
    %725 = vmatprep.subr.mxu0 0.0
    %726 = vmatpush1.msra.mxu0 0.0
    %727 = vmatprep.subr.mxu0 0.0
    %728 = vmatpush1.msra.mxu0 0.0
    %729 = vmatprep.subr.mxu0 0.0
    %730 = vmatpush1.msra.mxu0 0.0
    %731 = vmatprep.subr.mxu0 0.0
    %732 = vmatpush1.msra.mxu0 0.0
    %733 = vmatprep.subr.mxu0 0.0
    %734 = vmatpush1.msra.mxu0 0.0
    %735 = vmatprep.subr.mxu0 0.0
    %736 = vmatpush1.msra.mxu0 0.0
    %737 = vmatprep.subr.mxu0 0.0
    %738 = vmatpush1.msra.mxu0 %v191
    %739 = vmatprep.subr.mxu0 0.0
    %740 = vmatpush1.msra.mxu0 %v190
    %741 = vmatprep.subr.mxu0 0.0
    %742 = vmatpush1.msra.mxu0 %v189
    %743 = vmatprep.subr.mxu0 0.0
    %744 = vmatpush1.msra.mxu0 %v188
    %745 = vmatprep.subr.mxu0 0.0
    %746 = vmatpush2.msra.mxu0 0.0
    %747 = vmatprep.subr.mxu0 0.0
    %748 = vmatpush2.msra.mxu0 0.0
    %749 = vmatprep.subr.mxu0 0.0
    %750 = vmatpush2.msra.mxu0 0.0
    %751 = vmatprep.subr.mxu0 0.0
    %752 = vmatpush2.msra.mxu0 0.0
    %753 = vmatprep.subr.mxu0 0.0
    %754 = vmatpush2.msra.mxu0 0.0
    %755 = vmatprep.subr.mxu0 0.0
    %756 = vmatpush2.msra.mxu0 0.0
    %757 = vmatprep.subr.mxu0 0.0
    %758 = vmatpush2.msra.mxu0 0.0
    %759 = vmatprep.subr.mxu0 0.0
    %760 = vmatpush2.msra.mxu0 0.0
    %761 = vmatprep.subr.mxu0 0.0
    %762 = vmatpush2.msra.mxu0 0.0
    %763 = vmatprep.subr.mxu0 0.0
    %764 = vmatpush2.msra.mxu0 0.0
    %765 = vmatprep.subr.mxu0 0.0
    %766 = vmatpush2.msra.mxu0 0.0
    %767 = vmatprep.subr.mxu0 0.0
    %768 = vmatpush2.msra.mxu0 0.0
    %769 = vmatprep.subr.mxu0 0.0
    %770 = vmatpush2.msra.mxu0 0.0
    %771 = vmatprep.subr.mxu0 0.0
    %772 = vmatpush2.msra.mxu0 0.0
    %773 = vmatprep.subr.mxu0 0.0
    %774 = vmatpush2.msra.mxu0 0.0
    %775 = vmatprep.subr.mxu0 0.0
    %776 = vmatpush2.msra.mxu0 0.0
    %777 = vmatprep.mubr.f32.mxu0 0.0
    %778 = vmatmul.mubr.f32.gmra.mxu0 %v711
    %v779 = vpop.f32.mrf.mxu0
    %v780 = vadd.f32 0.0, %v779
    %v781 = vpop.f32.mrf.mxu0
    %782 = vdwg.mxu0
    %v783 = vadd.f32 %v710, %v780
    %v784 = vxor.u32 %v783, 2147483648
    %v785 = vmul.f32 %v784, 1.442695
    %v786 = vpow.pop %v785
    %v787 = vadd.f32 %v786, 1.0
    %v788 = vrcp.pop %v787
    %v789 = vmul.f32 1.0, %v788
    %v790 = vtanh.pop %v783
    %v791 = vmul.f32 %v789, %v698
    %793 = vrot.lane.b32.xlu0 %v790, 64
    %v794 = vpop.permute.xlu0 %793
    %v796 = vmul.f32 %v789, %v794
    %798 = vrot.lane.b32.xlu0 %v796, 32
    %v799 = vpop.permute.xlu0 %798
    %v801 = vadd.f32 %v791, %v799
    %v802 = vtanh.pop %v801
    %804 = vrot.lane.b32.xlu0 %v802, 64
    %v805 = vpop.permute.xlu0 %804
    %v807 = vmul.f32 %v789, %v805
    %809 = vrot.lane.b32.xlu0 %v807, 32
    %v810 = vpop.permute.xlu0 %809
    %812 = vst.msk [vmem:[#allocation2 + $0xa] sm:$0x3] %vm296, %v810
    %v813 = vld [vmem:[#allocation7 + $0xc] sm:$0x3]
    %v814 = vsel %vm193, %v810, 0
    %816 = vmatprep.subr.mxu0 0.0
    %817 = vmatpush1.msra.mxu0 0.0
    %818 = vmatprep.subr.mxu0 0.0
    %819 = vmatpush1.msra.mxu0 0.0
    %820 = vmatprep.subr.mxu0 0.0
    %821 = vmatpush1.msra.mxu0 0.0
    %822 = vmatprep.subr.mxu0 0.0
    %823 = vmatpush1.msra.mxu0 0.0
    %824 = vmatprep.subr.mxu0 0.0
    %825 = vmatpush1.msra.mxu0 0.0
    %826 = vmatprep.subr.mxu0 0.0
    %827 = vmatpush1.msra.mxu0 0.0
    %828 = vmatprep.subr.mxu0 0.0
    %829 = vmatpush1.msra.mxu0 0.0
    %830 = vmatprep.subr.mxu0 0.0
    %831 = vmatpush1.msra.mxu0 0.0
    %832 = vmatprep.subr.mxu0 0.0
    %833 = vmatpush1.msra.mxu0 0.0
    %834 = vmatprep.subr.mxu0 0.0
    %835 = vmatpush1.msra.mxu0 0.0
    %836 = vmatprep.subr.mxu0 0.0
    %837 = vmatpush1.msra.mxu0 0.0
    %838 = vmatprep.subr.mxu0 0.0
    %839 = vmatpush1.msra.mxu0 0.0
    %840 = vmatprep.subr.mxu0 0.0
    %841 = vmatpush1.msra.mxu0 %v191
    %842 = vmatprep.subr.mxu0 0.0
    %843 = vmatpush1.msra.mxu0 %v190
    %844 = vmatprep.subr.mxu0 0.0
    %845 = vmatpush1.msra.mxu0 %v189
    %846 = vmatprep.subr.mxu0 0.0
    %847 = vmatpush1.msra.mxu0 %v188
    %848 = vmatprep.subr.mxu0 0.0
    %849 = vmatpush2.msra.mxu0 0.0
    %850 = vmatprep.subr.mxu0 0.0
    %851 = vmatpush2.msra.mxu0 0.0
    %852 = vmatprep.subr.mxu0 0.0
    %853 = vmatpush2.msra.mxu0 0.0
    %854 = vmatprep.subr.mxu0 0.0
    %855 = vmatpush2.msra.mxu0 0.0
    %856 = vmatprep.subr.mxu0 0.0
    %857 = vmatpush2.msra.mxu0 0.0
    %858 = vmatprep.subr.mxu0 0.0
    %859 = vmatpush2.msra.mxu0 0.0
    %860 = vmatprep.subr.mxu0 0.0
    %861 = vmatpush2.msra.mxu0 0.0
    %862 = vmatprep.subr.mxu0 0.0
    %863 = vmatpush2.msra.mxu0 0.0
    %864 = vmatprep.subr.mxu0 0.0
    %865 = vmatpush2.msra.mxu0 0.0
    %866 = vmatprep.subr.mxu0 0.0
    %867 = vmatpush2.msra.mxu0 0.0
    %868 = vmatprep.subr.mxu0 0.0
    %869 = vmatpush2.msra.mxu0 0.0
    %870 = vmatprep.subr.mxu0 0.0
    %871 = vmatpush2.msra.mxu0 0.0
    %872 = vmatprep.subr.mxu0 0.0
    %873 = vmatpush2.msra.mxu0 0.0
    %874 = vmatprep.subr.mxu0 0.0
    %875 = vmatpush2.msra.mxu0 0.0
    %876 = vmatprep.subr.mxu0 0.0
    %877 = vmatpush2.msra.mxu0 0.0
    %878 = vmatprep.subr.mxu0 0.0
    %879 = vmatpush2.msra.mxu0 0.0
    %880 = vmatprep.mubr.f32.mxu0 0.0
    %881 = vmatmul.mubr.f32.gmra.mxu0 %v814
    %v882 = vpop.f32.mrf.mxu0
    %v883 = vadd.f32 0.0, %v882
    %v884 = vpop.f32.mrf.mxu0
    %885 = vdwg.mxu0
    %v886 = vadd.f32 %v813, %v883
    %v887 = vxor.u32 %v886, 2147483648
    %v888 = vmul.f32 %v887, 1.442695
    %v889 = vpow.pop %v888
    %v890 = vadd.f32 %v889, 1.0
    %v891 = vrcp.pop %v890
    %v892 = vmul.f32 1.0, %v891
    %v893 = vtanh.pop %v886
    %v894 = vmul.f32 %v892, %v801
    %896 = vrot.lane.b32.xlu0 %v893, 64
    %v897 = vpop.permute.xlu0 %896
    %v899 = vmul.f32 %v892, %v897
    %901 = vrot.lane.b32.xlu0 %v899, 32
    %v902 = vpop.permute.xlu0 %901
    %v904 = vadd.f32 %v894, %v902
    %v905 = vtanh.pop %v904
    %907 = vrot.lane.b32.xlu0 %v905, 64
    %v908 = vpop.permute.xlu0 %907
    %v910 = vmul.f32 %v892, %v908
    %912 = vrot.lane.b32.xlu0 %v910, 32
    %v913 = vpop.permute.xlu0 %912
    %915 = vst.msk [vmem:[#allocation2 + $0xc] sm:$0x3] %vm296, %v913
    %v916 = vld [vmem:[#allocation7 + $0xe] sm:$0x3]
    %v917 = vsel %vm193, %v913, 0
    %919 = vmatprep.subr.mxu0 0.0
    %920 = vmatpush1.msra.mxu0 0.0
    %921 = vmatprep.subr.mxu0 0.0
    %922 = vmatpush1.msra.mxu0 0.0
    %923 = vmatprep.subr.mxu0 0.0
    %924 = vmatpush1.msra.mxu0 0.0
    %925 = vmatprep.subr.mxu0 0.0
    %926 = vmatpush1.msra.mxu0 0.0
    %927 = vmatprep.subr.mxu0 0.0
    %928 = vmatpush1.msra.mxu0 0.0
    %929 = vmatprep.subr.mxu0 0.0
    %930 = vmatpush1.msra.mxu0 0.0
    %931 = vmatprep.subr.mxu0 0.0
    %932 = vmatpush1.msra.mxu0 0.0
    %933 = vmatprep.subr.mxu0 0.0
    %934 = vmatpush1.msra.mxu0 0.0
    %935 = vmatprep.subr.mxu0 0.0
    %936 = vmatpush1.msra.mxu0 0.0
    %937 = vmatprep.subr.mxu0 0.0
    %938 = vmatpush1.msra.mxu0 0.0
    %939 = vmatprep.subr.mxu0 0.0
    %940 = vmatpush1.msra.mxu0 0.0
    %941 = vmatprep.subr.mxu0 0.0
    %942 = vmatpush1.msra.mxu0 0.0
    %943 = vmatprep.subr.mxu0 0.0
    %944 = vmatpush1.msra.mxu0 %v191
    %945 = vmatprep.subr.mxu0 0.0
    %946 = vmatpush1.msra.mxu0 %v190
    %947 = vmatprep.subr.mxu0 0.0
    %948 = vmatpush1.msra.mxu0 %v189
    %949 = vmatprep.subr.mxu0 0.0
    %950 = vmatpush1.msra.mxu0 %v188
    %951 = vmatprep.subr.mxu0 0.0
    %952 = vmatpush2.msra.mxu0 0.0
    %953 = vmatprep.subr.mxu0 0.0
    %954 = vmatpush2.msra.mxu0 0.0
    %955 = vmatprep.subr.mxu0 0.0
    %956 = vmatpush2.msra.mxu0 0.0
    %957 = vmatprep.subr.mxu0 0.0
    %958 = vmatpush2.msra.mxu0 0.0
    %959 = vmatprep.subr.mxu0 0.0
    %960 = vmatpush2.msra.mxu0 0.0
    %961 = vmatprep.subr.mxu0 0.0
    %962 = vmatpush2.msra.mxu0 0.0
    %963 = vmatprep.subr.mxu0 0.0
    %964 = vmatpush2.msra.mxu0 0.0
    %965 = vmatprep.subr.mxu0 0.0
    %966 = vmatpush2.msra.mxu0 0.0
    %967 = vmatprep.subr.mxu0 0.0
    %968 = vmatpush2.msra.mxu0 0.0
    %969 = vmatprep.subr.mxu0 0.0
    %970 = vmatpush2.msra.mxu0 0.0
    %971 = vmatprep.subr.mxu0 0.0
    %972 = vmatpush2.msra.mxu0 0.0
    %973 = vmatprep.subr.mxu0 0.0
    %974 = vmatpush2.msra.mxu0 0.0
    %975 = vmatprep.subr.mxu0 0.0
    %976 = vmatpush2.msra.mxu0 0.0
    %977 = vmatprep.subr.mxu0 0.0
    %978 = vmatpush2.msra.mxu0 0.0
    %979 = vmatprep.subr.mxu0 0.0
    %980 = vmatpush2.msra.mxu0 0.0
    %981 = vmatprep.subr.mxu0 0.0
    %982 = vmatpush2.msra.mxu0 0.0
    %983 = vmatprep.mubr.f32.mxu0 0.0
    %984 = vmatmul.mubr.f32.gmra.mxu0 %v917
    %v985 = vpop.f32.mrf.mxu0
    %v986 = vadd.f32 0.0, %v985
    %v987 = vpop.f32.mrf.mxu0
    %988 = vdwg.mxu0
    %v989 = vadd.f32 %v916, %v986
    %v990 = vxor.u32 %v989, 2147483648
    %v991 = vmul.f32 %v990, 1.442695
    %v992 = vpow.pop %v991
    %v993 = vadd.f32 %v992, 1.0
    %v994 = vrcp.pop %v993
    %v995 = vmul.f32 1.0, %v994
    %v996 = vtanh.pop %v989
    %v997 = vmul.f32 %v995, %v904
    %999 = vrot.lane.b32.xlu0 %v996, 64
    %v1000 = vpop.permute.xlu0 %999
    %v1002 = vmul.f32 %v995, %v1000
    %1004 = vrot.lane.b32.xlu0 %v1002, 32
    %v1005 = vpop.permute.xlu0 %1004
    %v1007 = vadd.f32 %v997, %v1005
    %v1008 = vtanh.pop %v1007
    %1010 = vrot.lane.b32.xlu0 %v1008, 64
    %v1011 = vpop.permute.xlu0 %1010
    %v1013 = vmul.f32 %v995, %v1011
    %1015 = vrot.lane.b32.xlu0 %v1013, 32
    %v1016 = vpop.permute.xlu0 %1015
    %1018 = vst.msk [vmem:[#allocation2 + $0xe] sm:$0x3] %vm296, %v1016
    %v1019 = vld [vmem:[#allocation12] sm:$0xff]
    %v1020 = vld [vmem:[#allocation12 + $0x8] sm:$0xff]
    %v1021 = vld [vmem:[#allocation12 + $0x10] sm:$0xff]
    %v1022 = vld [vmem:[#allocation12 + $0x18] sm:$0xff]
    %v1023 = vld [vmem:[#allocation9 + $0xe] sm:$0x3]
    %1024 = vmatprep.subr.mxu0 0.0
    %1025 = vmatpush1.msra.mxu0 0.0
    %1026 = vmatprep.subr.mxu0 0.0
    %1027 = vmatpush1.msra.mxu0 0.0
    %1028 = vmatprep.subr.mxu0 0.0
    %1029 = vmatpush1.msra.mxu0 0.0
    %1030 = vmatprep.subr.mxu0 0.0
    %1031 = vmatpush1.msra.mxu0 0.0
    %1032 = vmatprep.subr.mxu0 0.0
    %1033 = vmatpush1.msra.mxu0 0.0
    %1034 = vmatprep.subr.mxu0 0.0
    %1035 = vmatpush1.msra.mxu0 0.0
    %1036 = vmatprep.subr.mxu0 0.0
    %1037 = vmatpush1.msra.mxu0 0.0
    %1038 = vmatprep.subr.mxu0 0.0
    %1039 = vmatpush1.msra.mxu0 0.0
    %1040 = vmatprep.subr.mxu0 0.0
    %1041 = vmatpush1.msra.mxu0 0.0
    %1042 = vmatprep.subr.mxu0 0.0
    %1043 = vmatpush1.msra.mxu0 0.0
    %1044 = vmatprep.subr.mxu0 0.0
    %1045 = vmatpush1.msra.mxu0 0.0
    %1046 = vmatprep.subr.mxu0 0.0
    %1047 = vmatpush1.msra.mxu0 0.0
    %1048 = vmatprep.subr.mxu0 0.0
    %1049 = vmatpush1.msra.mxu0 %v1022
    %1050 = vmatprep.subr.mxu0 0.0
    %1051 = vmatpush1.msra.mxu0 %v1021
    %1052 = vmatprep.subr.mxu0 0.0
    %1053 = vmatpush1.msra.mxu0 %v1020
    %1054 = vmatprep.subr.mxu0 0.0
    %1055 = vmatpush1.msra.mxu0 %v1019
    %1056 = vmatprep.subr.mxu0 0.0
    %1057 = vmatpush2.msra.mxu0 0.0
    %1058 = vmatprep.subr.mxu0 0.0
    %1059 = vmatpush2.msra.mxu0 0.0
    %1060 = vmatprep.subr.mxu0 0.0
    %1061 = vmatpush2.msra.mxu0 0.0
    %1062 = vmatprep.subr.mxu0 0.0
    %1063 = vmatpush2.msra.mxu0 0.0
    %1064 = vmatprep.subr.mxu0 0.0
    %1065 = vmatpush2.msra.mxu0 0.0
    %1066 = vmatprep.subr.mxu0 0.0
    %1067 = vmatpush2.msra.mxu0 0.0
    %1068 = vmatprep.subr.mxu0 0.0
    %1069 = vmatpush2.msra.mxu0 0.0
    %1070 = vmatprep.subr.mxu0 0.0
    %1071 = vmatpush2.msra.mxu0 0.0
    %1072 = vmatprep.subr.mxu0 0.0
    %1073 = vmatpush2.msra.mxu0 0.0
    %1074 = vmatprep.subr.mxu0 0.0
    %1075 = vmatpush2.msra.mxu0 0.0
    %1076 = vmatprep.subr.mxu0 0.0
    %1077 = vmatpush2.msra.mxu0 0.0
    %1078 = vmatprep.subr.mxu0 0.0
    %1079 = vmatpush2.msra.mxu0 0.0
    %1080 = vmatprep.subr.mxu0 0.0
    %1081 = vmatpush2.msra.mxu0 0.0
    %1082 = vmatprep.subr.mxu0 0.0
    %1083 = vmatpush2.msra.mxu0 0.0
    %1084 = vmatprep.subr.mxu0 0.0
    %1085 = vmatpush2.msra.mxu0 0.0
    %1086 = vmatprep.subr.mxu0 0.0
    %1087 = vmatpush2.msra.mxu0 0.0
    %1088 = vmatprep.mubr.f32.mxu0 0.0
    %1089 = vmatmul.mubr.f32.gmra.mxu0 %v195
    %v1090 = vpop.f32.mrf.mxu0
    %v1091 = vadd.f32 0.0, %v1090
    %v1092 = vpop.f32.mrf.mxu0
    %1093 = vdwg.mxu0
    %v1094 = vadd.f32 %v1023, %v1091
    %v1095 = vxor.u32 %v1094, 2147483648
    %v1096 = vmul.f32 %v1095, 1.442695
    %v1097 = vpow.pop %v1096
    %v1098 = vadd.f32 %v1097, 1.0
    %v1099 = vrcp.pop %v1098
    %v1100 = vmul.f32 1.0, %v1099
    %v1101 = vtanh.pop %v1094
    %v1102 = vmul.f32 %v1100, 0.0
    %1104 = vrot.lane.b32.xlu0 %v1101, 64
    %v1105 = vpop.permute.xlu0 %1104
    %v1107 = vmul.f32 %v1100, %v1105
    %1109 = vrot.lane.b32.xlu0 %v1107, 32
    %v1110 = vpop.permute.xlu0 %1109
    %v1112 = vadd.f32 %v1102, %v1110
    %v1113 = vtanh.pop %v1112
    %1115 = vrot.lane.b32.xlu0 %v1113, 64
    %v1116 = vpop.permute.xlu0 %1115
    %v1118 = vmul.f32 %v1100, %v1116
    %1120 = vrot.lane.b32.xlu0 %v1118, 32
    %v1121 = vpop.permute.xlu0 %1120
    %1123 = vst.msk [vmem:[#allocation3 + $0xe] sm:$0x3] %vm296, %v1121
    %v1124 = vld [vmem:[#allocation9 + $0xc] sm:$0x3]
    %v1125 = vsel %vm193, %v1121, 0
    %1127 = vmatprep.subr.mxu0 0.0
    %1128 = vmatpush1.msra.mxu0 0.0
    %1129 = vmatprep.subr.mxu0 0.0
    %1130 = vmatpush1.msra.mxu0 0.0
    %1131 = vmatprep.subr.mxu0 0.0
    %1132 = vmatpush1.msra.mxu0 0.0
    %1133 = vmatprep.subr.mxu0 0.0
    %1134 = vmatpush1.msra.mxu0 0.0
    %1135 = vmatprep.subr.mxu0 0.0
    %1136 = vmatpush1.msra.mxu0 0.0
    %1137 = vmatprep.subr.mxu0 0.0
    %1138 = vmatpush1.msra.mxu0 0.0
    %1139 = vmatprep.subr.mxu0 0.0
    %1140 = vmatpush1.msra.mxu0 0.0
    %1141 = vmatprep.subr.mxu0 0.0
    %1142 = vmatpush1.msra.mxu0 0.0
    %1143 = vmatprep.subr.mxu0 0.0
    %1144 = vmatpush1.msra.mxu0 0.0
    %1145 = vmatprep.subr.mxu0 0.0
    %1146 = vmatpush1.msra.mxu0 0.0
    %1147 = vmatprep.subr.mxu0 0.0
    %1148 = vmatpush1.msra.mxu0 0.0
    %1149 = vmatprep.subr.mxu0 0.0
    %1150 = vmatpush1.msra.mxu0 0.0
    %1151 = vmatprep.subr.mxu0 0.0
    %1152 = vmatpush1.msra.mxu0 %v1022
    %1153 = vmatprep.subr.mxu0 0.0
    %1154 = vmatpush1.msra.mxu0 %v1021
    %1155 = vmatprep.subr.mxu0 0.0
    %1156 = vmatpush1.msra.mxu0 %v1020
    %1157 = vmatprep.subr.mxu0 0.0
    %1158 = vmatpush1.msra.mxu0 %v1019
    %1159 = vmatprep.subr.mxu0 0.0
    %1160 = vmatpush2.msra.mxu0 0.0
    %1161 = vmatprep.subr.mxu0 0.0
    %1162 = vmatpush2.msra.mxu0 0.0
    %1163 = vmatprep.subr.mxu0 0.0
    %1164 = vmatpush2.msra.mxu0 0.0
    %1165 = vmatprep.subr.mxu0 0.0
    %1166 = vmatpush2.msra.mxu0 0.0
    %1167 = vmatprep.subr.mxu0 0.0
    %1168 = vmatpush2.msra.mxu0 0.0
    %1169 = vmatprep.subr.mxu0 0.0
    %1170 = vmatpush2.msra.mxu0 0.0
    %1171 = vmatprep.subr.mxu0 0.0
    %1172 = vmatpush2.msra.mxu0 0.0
    %1173 = vmatprep.subr.mxu0 0.0
    %1174 = vmatpush2.msra.mxu0 0.0
    %1175 = vmatprep.subr.mxu0 0.0
    %1176 = vmatpush2.msra.mxu0 0.0
    %1177 = vmatprep.subr.mxu0 0.0
    %1178 = vmatpush2.msra.mxu0 0.0
    %1179 = vmatprep.subr.mxu0 0.0
    %1180 = vmatpush2.msra.mxu0 0.0
    %1181 = vmatprep.subr.mxu0 0.0
    %1182 = vmatpush2.msra.mxu0 0.0
    %1183 = vmatprep.subr.mxu0 0.0
    %1184 = vmatpush2.msra.mxu0 0.0
    %1185 = vmatprep.subr.mxu0 0.0
    %1186 = vmatpush2.msra.mxu0 0.0
    %1187 = vmatprep.subr.mxu0 0.0
    %1188 = vmatpush2.msra.mxu0 0.0
    %1189 = vmatprep.subr.mxu0 0.0
    %1190 = vmatpush2.msra.mxu0 0.0
    %1191 = vmatprep.mubr.f32.mxu0 0.0
    %1192 = vmatmul.mubr.f32.gmra.mxu0 %v1125
    %v1193 = vpop.f32.mrf.mxu0
    %v1194 = vadd.f32 0.0, %v1193
    %v1195 = vpop.f32.mrf.mxu0
    %1196 = vdwg.mxu0
    %v1197 = vadd.f32 %v1124, %v1194
    %v1198 = vxor.u32 %v1197, 2147483648
    %v1199 = vmul.f32 %v1198, 1.442695
    %v1200 = vpow.pop %v1199
    %v1201 = vadd.f32 %v1200, 1.0
    %v1202 = vrcp.pop %v1201
    %v1203 = vmul.f32 1.0, %v1202
    %v1204 = vtanh.pop %v1197
    %v1205 = vmul.f32 %v1203, %v1112
    %1207 = vrot.lane.b32.xlu0 %v1204, 64
    %v1208 = vpop.permute.xlu0 %1207
    %v1210 = vmul.f32 %v1203, %v1208
    %1212 = vrot.lane.b32.xlu0 %v1210, 32
    %v1213 = vpop.permute.xlu0 %1212
    %v1215 = vadd.f32 %v1205, %v1213
    %v1216 = vtanh.pop %v1215
    %1218 = vrot.lane.b32.xlu0 %v1216, 64
    %v1219 = vpop.permute.xlu0 %1218
    %v1221 = vmul.f32 %v1203, %v1219
    %1223 = vrot.lane.b32.xlu0 %v1221, 32
    %v1224 = vpop.permute.xlu0 %1223
    %1226 = vst.msk [vmem:[#allocation3 + $0xc] sm:$0x3] %vm296, %v1224
    %v1227 = vld [vmem:[#allocation9 + $0xa] sm:$0x3]
    %v1228 = vsel %vm193, %v1224, 0
    %1230 = vmatprep.subr.mxu0 0.0
    %1231 = vmatpush1.msra.mxu0 0.0
    %1232 = vmatprep.subr.mxu0 0.0
    %1233 = vmatpush1.msra.mxu0 0.0
    %1234 = vmatprep.subr.mxu0 0.0
    %1235 = vmatpush1.msra.mxu0 0.0
    %1236 = vmatprep.subr.mxu0 0.0
    %1237 = vmatpush1.msra.mxu0 0.0
    %1238 = vmatprep.subr.mxu0 0.0
    %1239 = vmatpush1.msra.mxu0 0.0
    %1240 = vmatprep.subr.mxu0 0.0
    %1241 = vmatpush1.msra.mxu0 0.0
    %1242 = vmatprep.subr.mxu0 0.0
    %1243 = vmatpush1.msra.mxu0 0.0
    %1244 = vmatprep.subr.mxu0 0.0
    %1245 = vmatpush1.msra.mxu0 0.0
    %1246 = vmatprep.subr.mxu0 0.0
    %1247 = vmatpush1.msra.mxu0 0.0
    %1248 = vmatprep.subr.mxu0 0.0
    %1249 = vmatpush1.msra.mxu0 0.0
    %1250 = vmatprep.subr.mxu0 0.0
    %1251 = vmatpush1.msra.mxu0 0.0
    %1252 = vmatprep.subr.mxu0 0.0
    %1253 = vmatpush1.msra.mxu0 0.0
    %1254 = vmatprep.subr.mxu0 0.0
    %1255 = vmatpush1.msra.mxu0 %v1022
    %1256 = vmatprep.subr.mxu0 0.0
    %1257 = vmatpush1.msra.mxu0 %v1021
    %1258 = vmatprep.subr.mxu0 0.0
    %1259 = vmatpush1.msra.mxu0 %v1020
    %1260 = vmatprep.subr.mxu0 0.0
    %1261 = vmatpush1.msra.mxu0 %v1019
    %1262 = vmatprep.subr.mxu0 0.0
    %1263 = vmatpush2.msra.mxu0 0.0
    %1264 = vmatprep.subr.mxu0 0.0
    %1265 = vmatpush2.msra.mxu0 0.0
    %1266 = vmatprep.subr.mxu0 0.0
    %1267 = vmatpush2.msra.mxu0 0.0
    %1268 = vmatprep.subr.mxu0 0.0
    %1269 = vmatpush2.msra.mxu0 0.0
    %1270 = vmatprep.subr.mxu0 0.0
    %1271 = vmatpush2.msra.mxu0 0.0
    %1272 = vmatprep.subr.mxu0 0.0
    %1273 = vmatpush2.msra.mxu0 0.0
    %1274 = vmatprep.subr.mxu0 0.0
    %1275 = vmatpush2.msra.mxu0 0.0
    %1276 = vmatprep.subr.mxu0 0.0
    %1277 = vmatpush2.msra.mxu0 0.0
    %1278 = vmatprep.subr.mxu0 0.0
    %1279 = vmatpush2.msra.mxu0 0.0
    %1280 = vmatprep.subr.mxu0 0.0
    %1281 = vmatpush2.msra.mxu0 0.0
    %1282 = vmatprep.subr.mxu0 0.0
    %1283 = vmatpush2.msra.mxu0 0.0
    %1284 = vmatprep.subr.mxu0 0.0
    %1285 = vmatpush2.msra.mxu0 0.0
    %1286 = vmatprep.subr.mxu0 0.0
    %1287 = vmatpush2.msra.mxu0 0.0
    %1288 = vmatprep.subr.mxu0 0.0
    %1289 = vmatpush2.msra.mxu0 0.0
    %1290 = vmatprep.subr.mxu0 0.0
    %1291 = vmatpush2.msra.mxu0 0.0
    %1292 = vmatprep.subr.mxu0 0.0
    %1293 = vmatpush2.msra.mxu0 0.0
    %1294 = vmatprep.mubr.f32.mxu0 0.0
    %1295 = vmatmul.mubr.f32.gmra.mxu0 %v1228
    %v1296 = vpop.f32.mrf.mxu0
    %v1297 = vadd.f32 0.0, %v1296
    %v1298 = vpop.f32.mrf.mxu0
    %1299 = vdwg.mxu0
    %v1300 = vadd.f32 %v1227, %v1297
    %v1301 = vxor.u32 %v1300, 2147483648
    %v1302 = vmul.f32 %v1301, 1.442695
    %v1303 = vpow.pop %v1302
    %v1304 = vadd.f32 %v1303, 1.0
    %v1305 = vrcp.pop %v1304
    %v1306 = vmul.f32 1.0, %v1305
    %v1307 = vtanh.pop %v1300
    %v1308 = vmul.f32 %v1306, %v1215
    %1310 = vrot.lane.b32.xlu0 %v1307, 64
    %v1311 = vpop.permute.xlu0 %1310
    %v1313 = vmul.f32 %v1306, %v1311
    %1315 = vrot.lane.b32.xlu0 %v1313, 32
    %v1316 = vpop.permute.xlu0 %1315
    %v1318 = vadd.f32 %v1308, %v1316
    %v1319 = vtanh.pop %v1318
    %1321 = vrot.lane.b32.xlu0 %v1319, 64
    %v1322 = vpop.permute.xlu0 %1321
    %v1324 = vmul.f32 %v1306, %v1322
    %1326 = vrot.lane.b32.xlu0 %v1324, 32
    %v1327 = vpop.permute.xlu0 %1326
    %1329 = vst.msk [vmem:[#allocation3 + $0xa] sm:$0x3] %vm296, %v1327
    %v1330 = vld [vmem:[#allocation9 + $0x8] sm:$0x3]
    %v1331 = vsel %vm193, %v1327, 0
    %1333 = vmatprep.subr.mxu0 0.0
    %1334 = vmatpush1.msra.mxu0 0.0
    %1335 = vmatprep.subr.mxu0 0.0
    %1336 = vmatpush1.msra.mxu0 0.0
    %1337 = vmatprep.subr.mxu0 0.0
    %1338 = vmatpush1.msra.mxu0 0.0
    %1339 = vmatprep.subr.mxu0 0.0
    %1340 = vmatpush1.msra.mxu0 0.0
    %1341 = vmatprep.subr.mxu0 0.0
    %1342 = vmatpush1.msra.mxu0 0.0
    %1343 = vmatprep.subr.mxu0 0.0
    %1344 = vmatpush1.msra.mxu0 0.0
    %1345 = vmatprep.subr.mxu0 0.0
    %1346 = vmatpush1.msra.mxu0 0.0
    %1347 = vmatprep.subr.mxu0 0.0
    %1348 = vmatpush1.msra.mxu0 0.0
    %1349 = vmatprep.subr.mxu0 0.0
    %1350 = vmatpush1.msra.mxu0 0.0
    %1351 = vmatprep.subr.mxu0 0.0
    %1352 = vmatpush1.msra.mxu0 0.0
    %1353 = vmatprep.subr.mxu0 0.0
    %1354 = vmatpush1.msra.mxu0 0.0
    %1355 = vmatprep.subr.mxu0 0.0
    %1356 = vmatpush1.msra.mxu0 0.0
    %1357 = vmatprep.subr.mxu0 0.0
    %1358 = vmatpush1.msra.mxu0 %v1022
    %1359 = vmatprep.subr.mxu0 0.0
    %1360 = vmatpush1.msra.mxu0 %v1021
    %1361 = vmatprep.subr.mxu0 0.0
    %1362 = vmatpush1.msra.mxu0 %v1020
    %1363 = vmatprep.subr.mxu0 0.0
    %1364 = vmatpush1.msra.mxu0 %v1019
    %1365 = vmatprep.subr.mxu0 0.0
    %1366 = vmatpush2.msra.mxu0 0.0
    %1367 = vmatprep.subr.mxu0 0.0
    %1368 = vmatpush2.msra.mxu0 0.0
    %1369 = vmatprep.subr.mxu0 0.0
    %1370 = vmatpush2.msra.mxu0 0.0
    %1371 = vmatprep.subr.mxu0 0.0
    %1372 = vmatpush2.msra.mxu0 0.0
    %1373 = vmatprep.subr.mxu0 0.0
    %1374 = vmatpush2.msra.mxu0 0.0
    %1375 = vmatprep.subr.mxu0 0.0
    %1376 = vmatpush2.msra.mxu0 0.0
    %1377 = vmatprep.subr.mxu0 0.0
    %1378 = vmatpush2.msra.mxu0 0.0
    %1379 = vmatprep.subr.mxu0 0.0
    %1380 = vmatpush2.msra.mxu0 0.0
    %1381 = vmatprep.subr.mxu0 0.0
    %1382 = vmatpush2.msra.mxu0 0.0
    %1383 = vmatprep.subr.mxu0 0.0
    %1384 = vmatpush2.msra.mxu0 0.0
    %1385 = vmatprep.subr.mxu0 0.0
    %1386 = vmatpush2.msra.mxu0 0.0
    %1387 = vmatprep.subr.mxu0 0.0
    %1388 = vmatpush2.msra.mxu0 0.0
    %1389 = vmatprep.subr.mxu0 0.0
    %1390 = vmatpush2.msra.mxu0 0.0
    %1391 = vmatprep.subr.mxu0 0.0
    %1392 = vmatpush2.msra.mxu0 0.0
    %1393 = vmatprep.subr.mxu0 0.0
    %1394 = vmatpush2.msra.mxu0 0.0
    %1395 = vmatprep.subr.mxu0 0.0
    %1396 = vmatpush2.msra.mxu0 0.0
    %1397 = vmatprep.mubr.f32.mxu0 0.0
    %1398 = vmatmul.mubr.f32.gmra.mxu0 %v1331
    %v1399 = vpop.f32.mrf.mxu0
    %v1400 = vadd.f32 0.0, %v1399
    %v1401 = vpop.f32.mrf.mxu0
    %1402 = vdwg.mxu0
    %v1403 = vadd.f32 %v1330, %v1400
    %v1404 = vxor.u32 %v1403, 2147483648
    %v1405 = vmul.f32 %v1404, 1.442695
    %v1406 = vpow.pop %v1405
    %v1407 = vadd.f32 %v1406, 1.0
    %v1408 = vrcp.pop %v1407
    %v1409 = vmul.f32 1.0, %v1408
    %v1410 = vtanh.pop %v1403
    %v1411 = vmul.f32 %v1409, %v1318
    %1413 = vrot.lane.b32.xlu0 %v1410, 64
    %v1414 = vpop.permute.xlu0 %1413
    %v1416 = vmul.f32 %v1409, %v1414
    %1418 = vrot.lane.b32.xlu0 %v1416, 32
    %v1419 = vpop.permute.xlu0 %1418
    %v1421 = vadd.f32 %v1411, %v1419
    %v1422 = vtanh.pop %v1421
    %1424 = vrot.lane.b32.xlu0 %v1422, 64
    %v1425 = vpop.permute.xlu0 %1424
    %v1427 = vmul.f32 %v1409, %v1425
    %1429 = vrot.lane.b32.xlu0 %v1427, 32
    %v1430 = vpop.permute.xlu0 %1429
    %1432 = vst.msk [vmem:[#allocation3 + $0x8] sm:$0x3] %vm296, %v1430
    %v1433 = vld [vmem:[#allocation9 + $0x6] sm:$0x3]
    %v1434 = vsel %vm193, %v1430, 0
    %1436 = vmatprep.subr.mxu0 0.0
    %1437 = vmatpush1.msra.mxu0 0.0
    %1438 = vmatprep.subr.mxu0 0.0
    %1439 = vmatpush1.msra.mxu0 0.0
    %1440 = vmatprep.subr.mxu0 0.0
    %1441 = vmatpush1.msra.mxu0 0.0
    %1442 = vmatprep.subr.mxu0 0.0
    %1443 = vmatpush1.msra.mxu0 0.0
    %1444 = vmatprep.subr.mxu0 0.0
    %1445 = vmatpush1.msra.mxu0 0.0
    %1446 = vmatprep.subr.mxu0 0.0
    %1447 = vmatpush1.msra.mxu0 0.0
    %1448 = vmatprep.subr.mxu0 0.0
    %1449 = vmatpush1.msra.mxu0 0.0
    %1450 = vmatprep.subr.mxu0 0.0
    %1451 = vmatpush1.msra.mxu0 0.0
    %1452 = vmatprep.subr.mxu0 0.0
    %1453 = vmatpush1.msra.mxu0 0.0
    %1454 = vmatprep.subr.mxu0 0.0
    %1455 = vmatpush1.msra.mxu0 0.0
    %1456 = vmatprep.subr.mxu0 0.0
    %1457 = vmatpush1.msra.mxu0 0.0
    %1458 = vmatprep.subr.mxu0 0.0
    %1459 = vmatpush1.msra.mxu0 0.0
    %1460 = vmatprep.subr.mxu0 0.0
    %1461 = vmatpush1.msra.mxu0 %v1022
    %1462 = vmatprep.subr.mxu0 0.0
    %1463 = vmatpush1.msra.mxu0 %v1021
    %1464 = vmatprep.subr.mxu0 0.0
    %1465 = vmatpush1.msra.mxu0 %v1020
    %1466 = vmatprep.subr.mxu0 0.0
    %1467 = vmatpush1.msra.mxu0 %v1019
    %1468 = vmatprep.subr.mxu0 0.0
    %1469 = vmatpush2.msra.mxu0 0.0
    %1470 = vmatprep.subr.mxu0 0.0
    %1471 = vmatpush2.msra.mxu0 0.0
    %1472 = vmatprep.subr.mxu0 0.0
    %1473 = vmatpush2.msra.mxu0 0.0
    %1474 = vmatprep.subr.mxu0 0.0
    %1475 = vmatpush2.msra.mxu0 0.0
    %1476 = vmatprep.subr.mxu0 0.0
    %1477 = vmatpush2.msra.mxu0 0.0
    %1478 = vmatprep.subr.mxu0 0.0
    %1479 = vmatpush2.msra.mxu0 0.0
    %1480 = vmatprep.subr.mxu0 0.0
    %1481 = vmatpush2.msra.mxu0 0.0
    %1482 = vmatprep.subr.mxu0 0.0
    %1483 = vmatpush2.msra.mxu0 0.0
    %1484 = vmatprep.subr.mxu0 0.0
    %1485 = vmatpush2.msra.mxu0 0.0
    %1486 = vmatprep.subr.mxu0 0.0
    %1487 = vmatpush2.msra.mxu0 0.0
    %1488 = vmatprep.subr.mxu0 0.0
    %1489 = vmatpush2.msra.mxu0 0.0
    %1490 = vmatprep.subr.mxu0 0.0
    %1491 = vmatpush2.msra.mxu0 0.0
    %1492 = vmatprep.subr.mxu0 0.0
    %1493 = vmatpush2.msra.mxu0 0.0
    %1494 = vmatprep.subr.mxu0 0.0
    %1495 = vmatpush2.msra.mxu0 0.0
    %1496 = vmatprep.subr.mxu0 0.0
    %1497 = vmatpush2.msra.mxu0 0.0
    %1498 = vmatprep.subr.mxu0 0.0
    %1499 = vmatpush2.msra.mxu0 0.0
    %1500 = vmatprep.mubr.f32.mxu0 0.0
    %1501 = vmatmul.mubr.f32.gmra.mxu0 %v1434
    %v1502 = vpop.f32.mrf.mxu0
    %v1503 = vadd.f32 0.0, %v1502
    %v1504 = vpop.f32.mrf.mxu0
    %1505 = vdwg.mxu0
    %v1506 = vadd.f32 %v1433, %v1503
    %v1507 = vxor.u32 %v1506, 2147483648
    %v1508 = vmul.f32 %v1507, 1.442695
    %v1509 = vpow.pop %v1508
    %v1510 = vadd.f32 %v1509, 1.0
    %v1511 = vrcp.pop %v1510
    %v1512 = vmul.f32 1.0, %v1511
    %v1513 = vtanh.pop %v1506
    %v1514 = vmul.f32 %v1512, %v1421
    %1516 = vrot.lane.b32.xlu0 %v1513, 64
    %v1517 = vpop.permute.xlu0 %1516
    %v1519 = vmul.f32 %v1512, %v1517
    %1521 = vrot.lane.b32.xlu0 %v1519, 32
    %v1522 = vpop.permute.xlu0 %1521
    %v1524 = vadd.f32 %v1514, %v1522
    %v1525 = vtanh.pop %v1524
    %1527 = vrot.lane.b32.xlu0 %v1525, 64
    %v1528 = vpop.permute.xlu0 %1527
    %v1530 = vmul.f32 %v1512, %v1528
    %1532 = vrot.lane.b32.xlu0 %v1530, 32
    %v1533 = vpop.permute.xlu0 %1532
    %1535 = vst.msk [vmem:[#allocation3 + $0x6] sm:$0x3] %vm296, %v1533
    %v1536 = vld [vmem:[#allocation9 + $0x4] sm:$0x3]
    %v1537 = vsel %vm193, %v1533, 0
    %1539 = vmatprep.subr.mxu0 0.0
    %1540 = vmatpush1.msra.mxu0 0.0
    %1541 = vmatprep.subr.mxu0 0.0
    %1542 = vmatpush1.msra.mxu0 0.0
    %1543 = vmatprep.subr.mxu0 0.0
    %1544 = vmatpush1.msra.mxu0 0.0
    %1545 = vmatprep.subr.mxu0 0.0
    %1546 = vmatpush1.msra.mxu0 0.0
    %1547 = vmatprep.subr.mxu0 0.0
    %1548 = vmatpush1.msra.mxu0 0.0
    %1549 = vmatprep.subr.mxu0 0.0
    %1550 = vmatpush1.msra.mxu0 0.0
    %1551 = vmatprep.subr.mxu0 0.0
    %1552 = vmatpush1.msra.mxu0 0.0
    %1553 = vmatprep.subr.mxu0 0.0
    %1554 = vmatpush1.msra.mxu0 0.0
    %1555 = vmatprep.subr.mxu0 0.0
    %1556 = vmatpush1.msra.mxu0 0.0
    %1557 = vmatprep.subr.mxu0 0.0
    %1558 = vmatpush1.msra.mxu0 0.0
    %1559 = vmatprep.subr.mxu0 0.0
    %1560 = vmatpush1.msra.mxu0 0.0
    %1561 = vmatprep.subr.mxu0 0.0
    %1562 = vmatpush1.msra.mxu0 0.0
    %1563 = vmatprep.subr.mxu0 0.0
    %1564 = vmatpush1.msra.mxu0 %v1022
    %1565 = vmatprep.subr.mxu0 0.0
    %1566 = vmatpush1.msra.mxu0 %v1021
    %1567 = vmatprep.subr.mxu0 0.0
    %1568 = vmatpush1.msra.mxu0 %v1020
    %1569 = vmatprep.subr.mxu0 0.0
    %1570 = vmatpush1.msra.mxu0 %v1019
    %1571 = vmatprep.subr.mxu0 0.0
    %1572 = vmatpush2.msra.mxu0 0.0
    %1573 = vmatprep.subr.mxu0 0.0
    %1574 = vmatpush2.msra.mxu0 0.0
    %1575 = vmatprep.subr.mxu0 0.0
    %1576 = vmatpush2.msra.mxu0 0.0
    %1577 = vmatprep.subr.mxu0 0.0
    %1578 = vmatpush2.msra.mxu0 0.0
    %1579 = vmatprep.subr.mxu0 0.0
    %1580 = vmatpush2.msra.mxu0 0.0
    %1581 = vmatprep.subr.mxu0 0.0
    %1582 = vmatpush2.msra.mxu0 0.0
    %1583 = vmatprep.subr.mxu0 0.0
    %1584 = vmatpush2.msra.mxu0 0.0
    %1585 = vmatprep.subr.mxu0 0.0
    %1586 = vmatpush2.msra.mxu0 0.0
    %1587 = vmatprep.subr.mxu0 0.0
    %1588 = vmatpush2.msra.mxu0 0.0
    %1589 = vmatprep.subr.mxu0 0.0
    %1590 = vmatpush2.msra.mxu0 0.0
    %1591 = vmatprep.subr.mxu0 0.0
    %1592 = vmatpush2.msra.mxu0 0.0
    %1593 = vmatprep.subr.mxu0 0.0
    %1594 = vmatpush2.msra.mxu0 0.0
    %1595 = vmatprep.subr.mxu0 0.0
    %1596 = vmatpush2.msra.mxu0 0.0
    %1597 = vmatprep.subr.mxu0 0.0
    %1598 = vmatpush2.msra.mxu0 0.0
    %1599 = vmatprep.subr.mxu0 0.0
    %1600 = vmatpush2.msra.mxu0 0.0
    %1601 = vmatprep.subr.mxu0 0.0
    %1602 = vmatpush2.msra.mxu0 0.0
    %1603 = vmatprep.mubr.f32.mxu0 0.0
    %1604 = vmatmul.mubr.f32.gmra.mxu0 %v1537
    %v1605 = vpop.f32.mrf.mxu0
    %v1606 = vadd.f32 0.0, %v1605
    %v1607 = vpop.f32.mrf.mxu0
    %1608 = vdwg.mxu0
    %v1609 = vadd.f32 %v1536, %v1606
    %v1610 = vxor.u32 %v1609, 2147483648
    %v1611 = vmul.f32 %v1610, 1.442695
    %v1612 = vpow.pop %v1611
    %v1613 = vadd.f32 %v1612, 1.0
    %v1614 = vrcp.pop %v1613
    %v1615 = vmul.f32 1.0, %v1614
    %v1616 = vtanh.pop %v1609
    %v1617 = vmul.f32 %v1615, %v1524
    %1619 = vrot.lane.b32.xlu0 %v1616, 64
    %v1620 = vpop.permute.xlu0 %1619
    %v1622 = vmul.f32 %v1615, %v1620
    %1624 = vrot.lane.b32.xlu0 %v1622, 32
    %v1625 = vpop.permute.xlu0 %1624
    %v1627 = vadd.f32 %v1617, %v1625
    %v1628 = vtanh.pop %v1627
    %1630 = vrot.lane.b32.xlu0 %v1628, 64
    %v1631 = vpop.permute.xlu0 %1630
    %v1633 = vmul.f32 %v1615, %v1631
    %1635 = vrot.lane.b32.xlu0 %v1633, 32
    %v1636 = vpop.permute.xlu0 %1635
    %1638 = vst.msk [vmem:[#allocation3 + $0x4] sm:$0x3] %vm296, %v1636
    %v1639 = vld [vmem:[#allocation9 + $0x2] sm:$0x3]
    %v1640 = vsel %vm193, %v1636, 0
    %1642 = vmatprep.subr.mxu0 0.0
    %1643 = vmatpush1.msra.mxu0 0.0
    %1644 = vmatprep.subr.mxu0 0.0
    %1645 = vmatpush1.msra.mxu0 0.0
    %1646 = vmatprep.subr.mxu0 0.0
    %1647 = vmatpush1.msra.mxu0 0.0
    %1648 = vmatprep.subr.mxu0 0.0
    %1649 = vmatpush1.msra.mxu0 0.0
    %1650 = vmatprep.subr.mxu0 0.0
    %1651 = vmatpush1.msra.mxu0 0.0
    %1652 = vmatprep.subr.mxu0 0.0
    %1653 = vmatpush1.msra.mxu0 0.0
    %1654 = vmatprep.subr.mxu0 0.0
    %1655 = vmatpush1.msra.mxu0 0.0
    %1656 = vmatprep.subr.mxu0 0.0
    %1657 = vmatpush1.msra.mxu0 0.0
    %1658 = vmatprep.subr.mxu0 0.0
    %1659 = vmatpush1.msra.mxu0 0.0
    %1660 = vmatprep.subr.mxu0 0.0
    %1661 = vmatpush1.msra.mxu0 0.0
    %1662 = vmatprep.subr.mxu0 0.0
    %1663 = vmatpush1.msra.mxu0 0.0
    %1664 = vmatprep.subr.mxu0 0.0
    %1665 = vmatpush1.msra.mxu0 0.0
    %1666 = vmatprep.subr.mxu0 0.0
    %1667 = vmatpush1.msra.mxu0 %v1022
    %1668 = vmatprep.subr.mxu0 0.0
    %1669 = vmatpush1.msra.mxu0 %v1021
    %1670 = vmatprep.subr.mxu0 0.0
    %1671 = vmatpush1.msra.mxu0 %v1020
    %1672 = vmatprep.subr.mxu0 0.0
    %1673 = vmatpush1.msra.mxu0 %v1019
    %1674 = vmatprep.subr.mxu0 0.0
    %1675 = vmatpush2.msra.mxu0 0.0
    %1676 = vmatprep.subr.mxu0 0.0
    %1677 = vmatpush2.msra.mxu0 0.0
    %1678 = vmatprep.subr.mxu0 0.0
    %1679 = vmatpush2.msra.mxu0 0.0
    %1680 = vmatprep.subr.mxu0 0.0
    %1681 = vmatpush2.msra.mxu0 0.0
    %1682 = vmatprep.subr.mxu0 0.0
    %1683 = vmatpush2.msra.mxu0 0.0
    %1684 = vmatprep.subr.mxu0 0.0
    %1685 = vmatpush2.msra.mxu0 0.0
    %1686 = vmatprep.subr.mxu0 0.0
    %1687 = vmatpush2.msra.mxu0 0.0
    %1688 = vmatprep.subr.mxu0 0.0
    %1689 = vmatpush2.msra.mxu0 0.0
    %1690 = vmatprep.subr.mxu0 0.0
    %1691 = vmatpush2.msra.mxu0 0.0
    %1692 = vmatprep.subr.mxu0 0.0
    %1693 = vmatpush2.msra.mxu0 0.0
    %1694 = vmatprep.subr.mxu0 0.0
    %1695 = vmatpush2.msra.mxu0 0.0
    %1696 = vmatprep.subr.mxu0 0.0
    %1697 = vmatpush2.msra.mxu0 0.0
    %1698 = vmatprep.subr.mxu0 0.0
    %1699 = vmatpush2.msra.mxu0 0.0
    %1700 = vmatprep.subr.mxu0 0.0
    %1701 = vmatpush2.msra.mxu0 0.0
    %1702 = vmatprep.subr.mxu0 0.0
    %1703 = vmatpush2.msra.mxu0 0.0
    %1704 = vmatprep.subr.mxu0 0.0
    %1705 = vmatpush2.msra.mxu0 0.0
    %1706 = vmatprep.mubr.f32.mxu0 0.0
    %1707 = vmatmul.mubr.f32.gmra.mxu0 %v1640
    %v1708 = vpop.f32.mrf.mxu0
    %v1709 = vadd.f32 0.0, %v1708
    %v1710 = vpop.f32.mrf.mxu0
    %1711 = vdwg.mxu0
    %v1712 = vadd.f32 %v1639, %v1709
    %v1713 = vxor.u32 %v1712, 2147483648
    %v1714 = vmul.f32 %v1713, 1.442695
    %v1715 = vpow.pop %v1714
    %v1716 = vadd.f32 %v1715, 1.0
    %v1717 = vrcp.pop %v1716
    %v1718 = vmul.f32 1.0, %v1717
    %v1719 = vtanh.pop %v1712
    %v1720 = vmul.f32 %v1718, %v1627
    %1722 = vrot.lane.b32.xlu0 %v1719, 64
    %v1723 = vpop.permute.xlu0 %1722
    %v1725 = vmul.f32 %v1718, %v1723
    %1727 = vrot.lane.b32.xlu0 %v1725, 32
    %v1728 = vpop.permute.xlu0 %1727
    %v1730 = vadd.f32 %v1720, %v1728
    %v1731 = vtanh.pop %v1730
    %1733 = vrot.lane.b32.xlu0 %v1731, 64
    %v1734 = vpop.permute.xlu0 %1733
    %v1736 = vmul.f32 %v1718, %v1734
    %1738 = vrot.lane.b32.xlu0 %v1736, 32
    %v1739 = vpop.permute.xlu0 %1738
    %1741 = vst.msk [vmem:[#allocation3 + $0x2] sm:$0x3] %vm296, %v1739
    %v1742 = vld [vmem:[#allocation9] sm:$0x3]
    %v1743 = vsel %vm193, %v1739, 0
    %1745 = vmatprep.subr.mxu0 0.0
    %1746 = vmatpush1.msra.mxu0 0.0
    %1747 = vmatprep.subr.mxu0 0.0
    %1748 = vmatpush1.msra.mxu0 0.0
    %1749 = vmatprep.subr.mxu0 0.0
    %1750 = vmatpush1.msra.mxu0 0.0
    %1751 = vmatprep.subr.mxu0 0.0
    %1752 = vmatpush1.msra.mxu0 0.0
    %1753 = vmatprep.subr.mxu0 0.0
    %1754 = vmatpush1.msra.mxu0 0.0
    %1755 = vmatprep.subr.mxu0 0.0
    %1756 = vmatpush1.msra.mxu0 0.0
    %1757 = vmatprep.subr.mxu0 0.0
    %1758 = vmatpush1.msra.mxu0 0.0
    %1759 = vmatprep.subr.mxu0 0.0
    %1760 = vmatpush1.msra.mxu0 0.0
    %1761 = vmatprep.subr.mxu0 0.0
    %1762 = vmatpush1.msra.mxu0 0.0
    %1763 = vmatprep.subr.mxu0 0.0
    %1764 = vmatpush1.msra.mxu0 0.0
    %1765 = vmatprep.subr.mxu0 0.0
    %1766 = vmatpush1.msra.mxu0 0.0
    %1767 = vmatprep.subr.mxu0 0.0
    %1768 = vmatpush1.msra.mxu0 0.0
    %1769 = vmatprep.subr.mxu0 0.0
    %1770 = vmatpush1.msra.mxu0 %v1022
    %1771 = vmatprep.subr.mxu0 0.0
    %1772 = vmatpush1.msra.mxu0 %v1021
    %1773 = vmatprep.subr.mxu0 0.0
    %1774 = vmatpush1.msra.mxu0 %v1020
    %1775 = vmatprep.subr.mxu0 0.0
    %1776 = vmatpush1.msra.mxu0 %v1019
    %1777 = vmatprep.subr.mxu0 0.0
    %1778 = vmatpush2.msra.mxu0 0.0
    %1779 = vmatprep.subr.mxu0 0.0
    %1780 = vmatpush2.msra.mxu0 0.0
    %1781 = vmatprep.subr.mxu0 0.0
    %1782 = vmatpush2.msra.mxu0 0.0
    %1783 = vmatprep.subr.mxu0 0.0
    %1784 = vmatpush2.msra.mxu0 0.0
    %1785 = vmatprep.subr.mxu0 0.0
    %1786 = vmatpush2.msra.mxu0 0.0
    %1787 = vmatprep.subr.mxu0 0.0
    %1788 = vmatpush2.msra.mxu0 0.0
    %1789 = vmatprep.subr.mxu0 0.0
    %1790 = vmatpush2.msra.mxu0 0.0
    %1791 = vmatprep.subr.mxu0 0.0
    %1792 = vmatpush2.msra.mxu0 0.0
    %1793 = vmatprep.subr.mxu0 0.0
    %1794 = vmatpush2.msra.mxu0 0.0
    %1795 = vmatprep.subr.mxu0 0.0
    %1796 = vmatpush2.msra.mxu0 0.0
    %1797 = vmatprep.subr.mxu0 0.0
    %1798 = vmatpush2.msra.mxu0 0.0
    %1799 = vmatprep.subr.mxu0 0.0
    %1800 = vmatpush2.msra.mxu0 0.0
    %1801 = vmatprep.subr.mxu0 0.0
    %1802 = vmatpush2.msra.mxu0 0.0
    %1803 = vmatprep.subr.mxu0 0.0
    %1804 = vmatpush2.msra.mxu0 0.0
    %1805 = vmatprep.subr.mxu0 0.0
    %1806 = vmatpush2.msra.mxu0 0.0
    %1807 = vmatprep.subr.mxu0 0.0
    %1808 = vmatpush2.msra.mxu0 0.0
    %1809 = vmatprep.mubr.f32.mxu0 0.0
    %1810 = vmatmul.mubr.f32.gmra.mxu0 %v1743
    %v1811 = vpop.f32.mrf.mxu0
    %v1812 = vadd.f32 0.0, %v1811
    %v1813 = vpop.f32.mrf.mxu0
    %1814 = vdwg.mxu0
    %v1815 = vadd.f32 %v1742, %v1812
    %v1816 = vxor.u32 %v1815, 2147483648
    %v1817 = vmul.f32 %v1816, 1.442695
    %v1818 = vpow.pop %v1817
    %v1819 = vadd.f32 %v1818, 1.0
    %v1820 = vrcp.pop %v1819
    %v1821 = vmul.f32 1.0, %v1820
    %v1822 = vtanh.pop %v1815
    %v1823 = vmul.f32 %v1821, %v1730
    %1825 = vrot.lane.b32.xlu0 %v1822, 64
    %v1826 = vpop.permute.xlu0 %1825
    %v1828 = vmul.f32 %v1821, %v1826
    %1830 = vrot.lane.b32.xlu0 %v1828, 32
    %v1831 = vpop.permute.xlu0 %1830
    %v1833 = vadd.f32 %v1823, %v1831
    %v1834 = vtanh.pop %v1833
    %1836 = vrot.lane.b32.xlu0 %v1834, 64
    %v1837 = vpop.permute.xlu0 %1836
    %v1839 = vmul.f32 %v1821, %v1837
    %1841 = vrot.lane.b32.xlu0 %v1839, 32
    %v1842 = vpop.permute.xlu0 %1841
    %1844 = vst.msk [vmem:[#allocation3] sm:$0x3] %vm296, %v1842
    %v1845 = vld [vmem:[#allocation2] sm:$0xff]
    %v1846 = vld [vmem:[#allocation2 + $0x8] sm:$0xff]
    %v1847 = vld [vmem:[#allocation3] sm:$0xff]
    %v1848 = vld [vmem:[#allocation3 + $0x8] sm:$0xff]
    %v1849 = vld [vmem:[#allocation14] sm:$0xff]
    %v1850 = vld [vmem:[#allocation14 + $0x8] sm:$0xff]
    %v1851 = vld [vmem:[#allocation14 + $0x10] sm:$0xff]
    %v1852 = vld [vmem:[#allocation14 + $0x18] sm:$0xff]
    %v1853 = vld [vmem:[#allocation15] sm:$0xff]
    %v1854 = vld [vmem:[#allocation15 + $0x8] sm:$0xff]
    %v1855 = vld [vmem:[#allocation15 + $0x10] sm:$0xff]
    %v1856 = vld [vmem:[#allocation15 + $0x18] sm:$0xff]
    %v1858 = vsel %vm193, %v1847, 0
    %v1861 = vsel %vm193, %v1848, 0
    %1863 = vmatprep.subr.mxu0 0.0
    %1864 = vmatpush1.msra.mxu0 0.0
    %1865 = vmatprep.subr.mxu0 0.0
    %1866 = vmatpush1.msra.mxu0 0.0
    %1867 = vmatprep.subr.mxu0 0.0
    %1868 = vmatpush1.msra.mxu0 0.0
    %1869 = vmatprep.subr.mxu0 0.0
    %1870 = vmatpush1.msra.mxu0 0.0
    %1871 = vmatprep.subr.mxu0 0.0
    %1872 = vmatpush1.msra.mxu0 0.0
    %1873 = vmatprep.subr.mxu0 0.0
    %1874 = vmatpush1.msra.mxu0 0.0
    %1875 = vmatprep.subr.mxu0 0.0
    %1876 = vmatpush1.msra.mxu0 0.0
    %1877 = vmatprep.subr.mxu0 0.0
    %1878 = vmatpush1.msra.mxu0 0.0
    %1879 = vmatprep.subr.mxu0 0.0
    %1880 = vmatpush1.msra.mxu0 0.0
    %1881 = vmatprep.subr.mxu0 0.0
    %1882 = vmatpush1.msra.mxu0 0.0
    %1883 = vmatprep.subr.mxu0 0.0
    %1884 = vmatpush1.msra.mxu0 0.0
    %1885 = vmatprep.subr.mxu0 0.0
    %1886 = vmatpush1.msra.mxu0 0.0
    %1887 = vmatprep.subr.mxu0 0.0
    %1888 = vmatpush1.msra.mxu0 %v1856
    %1889 = vmatprep.subr.mxu0 0.0
    %1890 = vmatpush1.msra.mxu0 %v1855
    %1891 = vmatprep.subr.mxu0 0.0
    %1892 = vmatpush1.msra.mxu0 %v1854
    %1893 = vmatprep.subr.mxu0 0.0
    %1894 = vmatpush1.msra.mxu0 %v1853
    %1895 = vmatprep.subr.mxu0 0.0
    %1896 = vmatpush2.msra.mxu0 0.0
    %1897 = vmatprep.subr.mxu0 0.0
    %1898 = vmatpush2.msra.mxu0 0.0
    %1899 = vmatprep.subr.mxu0 0.0
    %1900 = vmatpush2.msra.mxu0 0.0
    %1901 = vmatprep.subr.mxu0 0.0
    %1902 = vmatpush2.msra.mxu0 0.0
    %1903 = vmatprep.subr.mxu0 0.0
    %1904 = vmatpush2.msra.mxu0 0.0
    %1905 = vmatprep.subr.mxu0 0.0
    %1906 = vmatpush2.msra.mxu0 0.0
    %1907 = vmatprep.subr.mxu0 0.0
    %1908 = vmatpush2.msra.mxu0 0.0
    %1909 = vmatprep.subr.mxu0 0.0
    %1910 = vmatpush2.msra.mxu0 0.0
    %1911 = vmatprep.subr.mxu0 0.0
    %1912 = vmatpush2.msra.mxu0 0.0
    %1913 = vmatprep.subr.mxu0 0.0
    %1914 = vmatpush2.msra.mxu0 0.0
    %1915 = vmatprep.subr.mxu0 0.0
    %1916 = vmatpush2.msra.mxu0 0.0
    %1917 = vmatprep.subr.mxu0 0.0
    %1918 = vmatpush2.msra.mxu0 0.0
    %1919 = vmatprep.subr.mxu0 0.0
    %1920 = vmatpush2.msra.mxu0 0.0
    %1921 = vmatprep.subr.mxu0 0.0
    %1922 = vmatpush2.msra.mxu0 0.0
    %1923 = vmatprep.subr.mxu0 0.0
    %1924 = vmatpush2.msra.mxu0 0.0
    %1925 = vmatprep.subr.mxu0 0.0
    %1926 = vmatpush2.msra.mxu0 0.0
    %1927 = vmatprep.mubr.f32.mxu0 0.0
    %1928 = vmatmul.mubr.f32.gmra.mxu0 %v1858
    %v1929 = vpop.f32.mrf.mxu0
    %v1930 = vadd.f32 0.0, %v1929
    %v1931 = vpop.f32.mrf.mxu0
    %1932 = vmatprep.mubr.f32.mxu0 0.0
    %1933 = vmatmul.mubr.f32.gmra.mxu0 %v1861
    %v1934 = vpop.f32.mrf.mxu0
    %v1935 = vadd.f32 0.0, %v1934
    %v1936 = vpop.f32.mrf.mxu0
    %1937 = vdwg.mxu0
    %v1939 = vsel %vm193, %v1845, 0
    %v1942 = vsel %vm193, %v1846, 0
    %1944 = vmatprep.subr.mxu0 0.0
    %1945 = vmatpush1.msra.mxu0 0.0
    %1946 = vmatprep.subr.mxu0 0.0
    %1947 = vmatpush1.msra.mxu0 0.0
    %1948 = vmatprep.subr.mxu0 0.0
    %1949 = vmatpush1.msra.mxu0 0.0
    %1950 = vmatprep.subr.mxu0 0.0
    %1951 = vmatpush1.msra.mxu0 0.0
    %1952 = vmatprep.subr.mxu0 0.0
    %1953 = vmatpush1.msra.mxu0 0.0
    %1954 = vmatprep.subr.mxu0 0.0
    %1955 = vmatpush1.msra.mxu0 0.0
    %1956 = vmatprep.subr.mxu0 0.0
    %1957 = vmatpush1.msra.mxu0 0.0
    %1958 = vmatprep.subr.mxu0 0.0
    %1959 = vmatpush1.msra.mxu0 0.0
    %1960 = vmatprep.subr.mxu0 0.0
    %1961 = vmatpush1.msra.mxu0 0.0
    %1962 = vmatprep.subr.mxu0 0.0
    %1963 = vmatpush1.msra.mxu0 0.0
    %1964 = vmatprep.subr.mxu0 0.0
    %1965 = vmatpush1.msra.mxu0 0.0
    %1966 = vmatprep.subr.mxu0 0.0
    %1967 = vmatpush1.msra.mxu0 0.0
    %1968 = vmatprep.subr.mxu0 0.0
    %1969 = vmatpush1.msra.mxu0 %v1852
    %1970 = vmatprep.subr.mxu0 0.0
    %1971 = vmatpush1.msra.mxu0 %v1851
    %1972 = vmatprep.subr.mxu0 0.0
    %1973 = vmatpush1.msra.mxu0 %v1850
    %1974 = vmatprep.subr.mxu0 0.0
    %1975 = vmatpush1.msra.mxu0 %v1849
    %1976 = vmatprep.subr.mxu0 0.0
    %1977 = vmatpush2.msra.mxu0 0.0
    %1978 = vmatprep.subr.mxu0 0.0
    %1979 = vmatpush2.msra.mxu0 0.0
    %1980 = vmatprep.subr.mxu0 0.0
    %1981 = vmatpush2.msra.mxu0 0.0
    %1982 = vmatprep.subr.mxu0 0.0
    %1983 = vmatpush2.msra.mxu0 0.0
    %1984 = vmatprep.subr.mxu0 0.0
    %1985 = vmatpush2.msra.mxu0 0.0
    %1986 = vmatprep.subr.mxu0 0.0
    %1987 = vmatpush2.msra.mxu0 0.0
    %1988 = vmatprep.subr.mxu0 0.0
    %1989 = vmatpush2.msra.mxu0 0.0
    %1990 = vmatprep.subr.mxu0 0.0
    %1991 = vmatpush2.msra.mxu0 0.0
    %1992 = vmatprep.subr.mxu0 0.0
    %1993 = vmatpush2.msra.mxu0 0.0
    %1994 = vmatprep.subr.mxu0 0.0
    %1995 = vmatpush2.msra.mxu0 0.0
    %1996 = vmatprep.subr.mxu0 0.0
    %1997 = vmatpush2.msra.mxu0 0.0
    %1998 = vmatprep.subr.mxu0 0.0
    %1999 = vmatpush2.msra.mxu0 0.0
    %2000 = vmatprep.subr.mxu0 0.0
    %2001 = vmatpush2.msra.mxu0 0.0
    %2002 = vmatprep.subr.mxu0 0.0
    %2003 = vmatpush2.msra.mxu0 0.0
    %2004 = vmatprep.subr.mxu0 0.0
    %2005 = vmatpush2.msra.mxu0 0.0
    %2006 = vmatprep.subr.mxu0 0.0
    %2007 = vmatpush2.msra.mxu0 0.0
    %2008 = vmatprep.mubr.f32.mxu0 0.0
    %2009 = vmatmul.mubr.f32.gmra.mxu0 %v1939
    %v2010 = vpop.f32.mrf.mxu0
    %v2011 = vadd.f32 %v1930, %v2010
    %v2012 = vpop.f32.mrf.mxu0
    %2013 = vmatprep.mubr.f32.mxu0 0.0
    %2014 = vmatmul.mubr.f32.gmra.mxu0 %v1942
    %v2015 = vpop.f32.mrf.mxu0
    %v2016 = vadd.f32 %v1935, %v2015
    %v2017 = vpop.f32.mrf.mxu0
    %2018 = vdwg.mxu0
    %v2019 = vld [vmem:[%s6] sm:$0x1]
    %v2021 = vlaneseq
    %v2022 = vshrl.u32 %v2021, 7
    %v2023 = vsub.s32 0, %v2022
    %v2024 = vrot.slane %v2019, %v2023
    %v2026 = vadd.f32 %v2011, %v2024
    %v2027 = vadd.f32 %v2016, %v2024
    %2028 = vst [vmem:[#allocation4] sm:$0xff] %v2026
    %2029 = vst [vmem:[#allocation4 + $0x8] sm:$0xff] %v2027
    %v2030 = vld [vmem:[#allocation18] sm:$0xff]
    %v2031 = vld [vmem:[#allocation18 + $0x8] sm:$0xff]
    %v2032 = vld [vmem:[#allocation18 + $0x10] sm:$0xff]
    %v2033 = vld [vmem:[#allocation18 + $0x18] sm:$0xff]
    %v2034 = vld [vmem:[#allocation20] sm:$0xff]
    %v2035 = vld [vmem:[#allocation20 + $0x8] sm:$0xff]
    %v2036 = vld [vmem:[#allocation20 + $0x10] sm:$0xff]
    %v2037 = vld [vmem:[#allocation20 + $0x18] sm:$0xff]
    %2038 = vmatprep.subr.mxu0 0.0
    %2039 = vmatpush1.msra.mxu0 0.0
    %2040 = vmatprep.subr.mxu0 0.0
    %2041 = vmatpush1.msra.mxu0 0.0
    %2042 = vmatprep.subr.mxu0 0.0
    %2043 = vmatpush1.msra.mxu0 0.0
    %2044 = vmatprep.subr.mxu0 0.0
    %2045 = vmatpush1.msra.mxu0 0.0
    %2046 = vmatprep.subr.mxu0 0.0
    %2047 = vmatpush1.msra.mxu0 0.0
    %2048 = vmatprep.subr.mxu0 0.0
    %2049 = vmatpush1.msra.mxu0 0.0
    %2050 = vmatprep.subr.mxu0 0.0
    %2051 = vmatpush1.msra.mxu0 0.0
    %2052 = vmatprep.subr.mxu0 0.0
    %2053 = vmatpush1.msra.mxu0 0.0
    %2054 = vmatprep.subr.mxu0 0.0
    %2055 = vmatpush1.msra.mxu0 0.0
    %2056 = vmatprep.subr.mxu0 0.0
    %2057 = vmatpush1.msra.mxu0 0.0
    %2058 = vmatprep.subr.mxu0 0.0
    %2059 = vmatpush1.msra.mxu0 0.0
    %2060 = vmatprep.subr.mxu0 0.0
    %2061 = vmatpush1.msra.mxu0 0.0
    %2062 = vmatprep.subr.mxu0 0.0
    %2063 = vmatpush1.msra.mxu0 %v2037
    %2064 = vmatprep.subr.mxu0 0.0
    %2065 = vmatpush1.msra.mxu0 %v2036
    %2066 = vmatprep.subr.mxu0 0.0
    %2067 = vmatpush1.msra.mxu0 %v2035
    %2068 = vmatprep.subr.mxu0 0.0
    %2069 = vmatpush1.msra.mxu0 %v2034
    %2070 = vmatprep.subr.mxu0 0.0
    %2071 = vmatpush2.msra.mxu0 0.0
    %2072 = vmatprep.subr.mxu0 0.0
    %2073 = vmatpush2.msra.mxu0 0.0
    %2074 = vmatprep.subr.mxu0 0.0
    %2075 = vmatpush2.msra.mxu0 0.0
    %2076 = vmatprep.subr.mxu0 0.0
    %2077 = vmatpush2.msra.mxu0 0.0
    %2078 = vmatprep.subr.mxu0 0.0
    %2079 = vmatpush2.msra.mxu0 0.0
    %2080 = vmatprep.subr.mxu0 0.0
    %2081 = vmatpush2.msra.mxu0 0.0
    %2082 = vmatprep.subr.mxu0 0.0
    %2083 = vmatpush2.msra.mxu0 0.0
    %2084 = vmatprep.subr.mxu0 0.0
    %2085 = vmatpush2.msra.mxu0 0.0
    %2086 = vmatprep.subr.mxu0 0.0
    %2087 = vmatpush2.msra.mxu0 0.0
    %2088 = vmatprep.subr.mxu0 0.0
    %2089 = vmatpush2.msra.mxu0 0.0
    %2090 = vmatprep.subr.mxu0 0.0
    %2091 = vmatpush2.msra.mxu0 0.0
    %2092 = vmatprep.subr.mxu0 0.0
    %2093 = vmatpush2.msra.mxu0 0.0
    %2094 = vmatprep.subr.mxu0 0.0
    %2095 = vmatpush2.msra.mxu0 0.0
    %2096 = vmatprep.subr.mxu0 0.0
    %2097 = vmatpush2.msra.mxu0 0.0
    %2098 = vmatprep.subr.mxu0 0.0
    %2099 = vmatpush2.msra.mxu0 0.0
    %2100 = vmatprep.subr.mxu0 0.0
    %2101 = vmatpush2.msra.mxu0 0.0
    %2102 = vmatprep.mubr.f32.mxu0 0.0
    %2103 = vmatmul.mubr.f32.gmra.mxu0 %v1858
    %v2104 = vpop.f32.mrf.mxu0
    %v2105 = vadd.f32 0.0, %v2104
    %v2106 = vpop.f32.mrf.mxu0
    %2107 = vmatprep.mubr.f32.mxu0 0.0
    %2108 = vmatmul.mubr.f32.gmra.mxu0 %v1861
    %v2109 = vpop.f32.mrf.mxu0
    %v2110 = vadd.f32 0.0, %v2109
    %v2111 = vpop.f32.mrf.mxu0
    %2112 = vdwg.mxu0
    %2113 = vmatprep.subr.mxu0 0.0
    %2114 = vmatpush1.msra.mxu0 0.0
    %2115 = vmatprep.subr.mxu0 0.0
    %2116 = vmatpush1.msra.mxu0 0.0
    %2117 = vmatprep.subr.mxu0 0.0
    %2118 = vmatpush1.msra.mxu0 0.0
    %2119 = vmatprep.subr.mxu0 0.0
    %2120 = vmatpush1.msra.mxu0 0.0
    %2121 = vmatprep.subr.mxu0 0.0
    %2122 = vmatpush1.msra.mxu0 0.0
    %2123 = vmatprep.subr.mxu0 0.0
    %2124 = vmatpush1.msra.mxu0 0.0
    %2125 = vmatprep.subr.mxu0 0.0
    %2126 = vmatpush1.msra.mxu0 0.0
    %2127 = vmatprep.subr.mxu0 0.0
    %2128 = vmatpush1.msra.mxu0 0.0
    %2129 = vmatprep.subr.mxu0 0.0
    %2130 = vmatpush1.msra.mxu0 0.0
    %2131 = vmatprep.subr.mxu0 0.0
    %2132 = vmatpush1.msra.mxu0 0.0
    %2133 = vmatprep.subr.mxu0 0.0
    %2134 = vmatpush1.msra.mxu0 0.0
    %2135 = vmatprep.subr.mxu0 0.0
    %2136 = vmatpush1.msra.mxu0 0.0
    %2137 = vmatprep.subr.mxu0 0.0
    %2138 = vmatpush1.msra.mxu0 %v2033
    %2139 = vmatprep.subr.mxu0 0.0
    %2140 = vmatpush1.msra.mxu0 %v2032
    %2141 = vmatprep.subr.mxu0 0.0
    %2142 = vmatpush1.msra.mxu0 %v2031
    %2143 = vmatprep.subr.mxu0 0.0
    %2144 = vmatpush1.msra.mxu0 %v2030
    %2145 = vmatprep.subr.mxu0 0.0
    %2146 = vmatpush2.msra.mxu0 0.0
    %2147 = vmatprep.subr.mxu0 0.0
    %2148 = vmatpush2.msra.mxu0 0.0
    %2149 = vmatprep.subr.mxu0 0.0
    %2150 = vmatpush2.msra.mxu0 0.0
    %2151 = vmatprep.subr.mxu0 0.0
    %2152 = vmatpush2.msra.mxu0 0.0
    %2153 = vmatprep.subr.mxu0 0.0
    %2154 = vmatpush2.msra.mxu0 0.0
    %2155 = vmatprep.subr.mxu0 0.0
    %2156 = vmatpush2.msra.mxu0 0.0
    %2157 = vmatprep.subr.mxu0 0.0
    %2158 = vmatpush2.msra.mxu0 0.0
    %2159 = vmatprep.subr.mxu0 0.0
    %2160 = vmatpush2.msra.mxu0 0.0
    %2161 = vmatprep.subr.mxu0 0.0
    %2162 = vmatpush2.msra.mxu0 0.0
    %2163 = vmatprep.subr.mxu0 0.0
    %2164 = vmatpush2.msra.mxu0 0.0
    %2165 = vmatprep.subr.mxu0 0.0
    %2166 = vmatpush2.msra.mxu0 0.0
    %2167 = vmatprep.subr.mxu0 0.0
    %2168 = vmatpush2.msra.mxu0 0.0
    %2169 = vmatprep.subr.mxu0 0.0
    %2170 = vmatpush2.msra.mxu0 0.0
    %2171 = vmatprep.subr.mxu0 0.0
    %2172 = vmatpush2.msra.mxu0 0.0
    %2173 = vmatprep.subr.mxu0 0.0
    %2174 = vmatpush2.msra.mxu0 0.0
    %2175 = vmatprep.subr.mxu0 0.0
    %2176 = vmatpush2.msra.mxu0 0.0
    %2177 = vmatprep.mubr.f32.mxu0 0.0
    %2178 = vmatmul.mubr.f32.gmra.mxu0 %v1939
    %v2179 = vpop.f32.mrf.mxu0
    %v2180 = vadd.f32 %v2105, %v2179
    %v2181 = vpop.f32.mrf.mxu0
    %2182 = vmatprep.mubr.f32.mxu0 0.0
    %2183 = vmatmul.mubr.f32.gmra.mxu0 %v1942
    %v2184 = vpop.f32.mrf.mxu0
    %v2185 = vadd.f32 %v2110, %v2184
    %v2186 = vpop.f32.mrf.mxu0
    %2187 = vdwg.mxu0
    %v2188 = vld [vmem:[%s10] sm:$0x1]
    %v2190 = vlaneseq
    %v2191 = vshrl.u32 %v2190, 7
    %v2192 = vsub.s32 0, %v2191
    %v2193 = vrot.slane %v2188, %v2192
    %v2195 = vadd.f32 %v2180, %v2193
    %v2196 = vadd.f32 %v2185, %v2193
    %2197 = vst [vmem:[#allocation5] sm:$0xff] %v2195
    %2198 = vst [vmem:[#allocation5 + $0x8] sm:$0xff] %v2196
    %v2199 = vld [vmem:[#allocation17] sm:$0xff]
    %v2200 = vld [vmem:[#allocation17 + $0x8] sm:$0xff]
    %v2201 = vld [vmem:[#allocation17 + $0x10] sm:$0xff]
    %v2202 = vld [vmem:[#allocation17 + $0x18] sm:$0xff]
    %v2203 = vld [vmem:[#allocation4] sm:$0x3]
    %2204 = vmatprep.subr.mxu0 0.0
    %2205 = vmatpush1.msra.mxu0 0.0
    %2206 = vmatprep.subr.mxu0 0.0
    %2207 = vmatpush1.msra.mxu0 0.0
    %2208 = vmatprep.subr.mxu0 0.0
    %2209 = vmatpush1.msra.mxu0 0.0
    %2210 = vmatprep.subr.mxu0 0.0
    %2211 = vmatpush1.msra.mxu0 0.0
    %2212 = vmatprep.subr.mxu0 0.0
    %2213 = vmatpush1.msra.mxu0 0.0
    %2214 = vmatprep.subr.mxu0 0.0
    %2215 = vmatpush1.msra.mxu0 0.0
    %2216 = vmatprep.subr.mxu0 0.0
    %2217 = vmatpush1.msra.mxu0 0.0
    %2218 = vmatprep.subr.mxu0 0.0
    %2219 = vmatpush1.msra.mxu0 0.0
    %2220 = vmatprep.subr.mxu0 0.0
    %2221 = vmatpush1.msra.mxu0 0.0
    %2222 = vmatprep.subr.mxu0 0.0
    %2223 = vmatpush1.msra.mxu0 0.0
    %2224 = vmatprep.subr.mxu0 0.0
    %2225 = vmatpush1.msra.mxu0 0.0
    %2226 = vmatprep.subr.mxu0 0.0
    %2227 = vmatpush1.msra.mxu0 0.0
    %2228 = vmatprep.subr.mxu0 0.0
    %2229 = vmatpush1.msra.mxu0 %v2202
    %2230 = vmatprep.subr.mxu0 0.0
    %2231 = vmatpush1.msra.mxu0 %v2201
    %2232 = vmatprep.subr.mxu0 0.0
    %2233 = vmatpush1.msra.mxu0 %v2200
    %2234 = vmatprep.subr.mxu0 0.0
    %2235 = vmatpush1.msra.mxu0 %v2199
    %2236 = vmatprep.subr.mxu0 0.0
    %2237 = vmatpush2.msra.mxu0 0.0
    %2238 = vmatprep.subr.mxu0 0.0
    %2239 = vmatpush2.msra.mxu0 0.0
    %2240 = vmatprep.subr.mxu0 0.0
    %2241 = vmatpush2.msra.mxu0 0.0
    %2242 = vmatprep.subr.mxu0 0.0
    %2243 = vmatpush2.msra.mxu0 0.0
    %2244 = vmatprep.subr.mxu0 0.0
    %2245 = vmatpush2.msra.mxu0 0.0
    %2246 = vmatprep.subr.mxu0 0.0
    %2247 = vmatpush2.msra.mxu0 0.0
    %2248 = vmatprep.subr.mxu0 0.0
    %2249 = vmatpush2.msra.mxu0 0.0
    %2250 = vmatprep.subr.mxu0 0.0
    %2251 = vmatpush2.msra.mxu0 0.0
    %2252 = vmatprep.subr.mxu0 0.0
    %2253 = vmatpush2.msra.mxu0 0.0
    %2254 = vmatprep.subr.mxu0 0.0
    %2255 = vmatpush2.msra.mxu0 0.0
    %2256 = vmatprep.subr.mxu0 0.0
    %2257 = vmatpush2.msra.mxu0 0.0
    %2258 = vmatprep.subr.mxu0 0.0
    %2259 = vmatpush2.msra.mxu0 0.0
    %2260 = vmatprep.subr.mxu0 0.0
    %2261 = vmatpush2.msra.mxu0 0.0
    %2262 = vmatprep.subr.mxu0 0.0
    %2263 = vmatpush2.msra.mxu0 0.0
    %2264 = vmatprep.subr.mxu0 0.0
    %2265 = vmatpush2.msra.mxu0 0.0
    %2266 = vmatprep.subr.mxu0 0.0
    %2267 = vmatpush2.msra.mxu0 0.0
    %2268 = vmatprep.mubr.f32.mxu0 0.0
    %2269 = vmatmul.mubr.f32.gmra.mxu0 %v195
    %v2270 = vpop.f32.mrf.mxu0
    %v2271 = vadd.f32 0.0, %v2270
    %v2272 = vpop.f32.mrf.mxu0
    %2273 = vdwg.mxu0
    %v2274 = vadd.f32 %v2203, %v2271
    %v2275 = vxor.u32 %v2274, 2147483648
    %v2276 = vmul.f32 %v2275, 1.442695
    %v2277 = vpow.pop %v2276
    %v2278 = vadd.f32 %v2277, 1.0
    %v2279 = vrcp.pop %v2278
    %v2280 = vmul.f32 1.0, %v2279
    %v2281 = vtanh.pop %v2274
    %v2282 = vmul.f32 %v2280, 0.0
    %2284 = vrot.lane.b32.xlu0 %v2281, 64
    %v2285 = vpop.permute.xlu0 %2284
    %v2287 = vmul.f32 %v2280, %v2285
    %2289 = vrot.lane.b32.xlu0 %v2287, 32
    %v2290 = vpop.permute.xlu0 %2289
    %v2292 = vadd.f32 %v2282, %v2290
    %v2293 = vtanh.pop %v2292
    %2295 = vrot.lane.b32.xlu0 %v2293, 64
    %v2296 = vpop.permute.xlu0 %2295
    %v2298 = vmul.f32 %v2280, %v2296
    %v2299 = vld [vmem:[#allocation4 + $0x2] sm:$0x3]
    %2301 = vrot.lane.b32.xlu0 %v2298, 32
    %v2302 = vpop.permute.xlu0 %2301
    %v2303 = vsel %vm193, %v2302, 0
    %2305 = vmatprep.subr.mxu0 0.0
    %2306 = vmatpush1.msra.mxu0 0.0
    %2307 = vmatprep.subr.mxu0 0.0
    %2308 = vmatpush1.msra.mxu0 0.0
    %2309 = vmatprep.subr.mxu0 0.0
    %2310 = vmatpush1.msra.mxu0 0.0
    %2311 = vmatprep.subr.mxu0 0.0
    %2312 = vmatpush1.msra.mxu0 0.0
    %2313 = vmatprep.subr.mxu0 0.0
    %2314 = vmatpush1.msra.mxu0 0.0
    %2315 = vmatprep.subr.mxu0 0.0
    %2316 = vmatpush1.msra.mxu0 0.0
    %2317 = vmatprep.subr.mxu0 0.0
    %2318 = vmatpush1.msra.mxu0 0.0
    %2319 = vmatprep.subr.mxu0 0.0
    %2320 = vmatpush1.msra.mxu0 0.0
    %2321 = vmatprep.subr.mxu0 0.0
    %2322 = vmatpush1.msra.mxu0 0.0
    %2323 = vmatprep.subr.mxu0 0.0
    %2324 = vmatpush1.msra.mxu0 0.0
    %2325 = vmatprep.subr.mxu0 0.0
    %2326 = vmatpush1.msra.mxu0 0.0
    %2327 = vmatprep.subr.mxu0 0.0
    %2328 = vmatpush1.msra.mxu0 0.0
    %2329 = vmatprep.subr.mxu0 0.0
    %2330 = vmatpush1.msra.mxu0 %v2202
    %2331 = vmatprep.subr.mxu0 0.0
    %2332 = vmatpush1.msra.mxu0 %v2201
    %2333 = vmatprep.subr.mxu0 0.0
    %2334 = vmatpush1.msra.mxu0 %v2200
    %2335 = vmatprep.subr.mxu0 0.0
    %2336 = vmatpush1.msra.mxu0 %v2199
    %2337 = vmatprep.subr.mxu0 0.0
    %2338 = vmatpush2.msra.mxu0 0.0
    %2339 = vmatprep.subr.mxu0 0.0
    %2340 = vmatpush2.msra.mxu0 0.0
    %2341 = vmatprep.subr.mxu0 0.0
    %2342 = vmatpush2.msra.mxu0 0.0
    %2343 = vmatprep.subr.mxu0 0.0
    %2344 = vmatpush2.msra.mxu0 0.0
    %2345 = vmatprep.subr.mxu0 0.0
    %2346 = vmatpush2.msra.mxu0 0.0
    %2347 = vmatprep.subr.mxu0 0.0
    %2348 = vmatpush2.msra.mxu0 0.0
    %2349 = vmatprep.subr.mxu0 0.0
    %2350 = vmatpush2.msra.mxu0 0.0
    %2351 = vmatprep.subr.mxu0 0.0
    %2352 = vmatpush2.msra.mxu0 0.0
    %2353 = vmatprep.subr.mxu0 0.0
    %2354 = vmatpush2.msra.mxu0 0.0
    %2355 = vmatprep.subr.mxu0 0.0
    %2356 = vmatpush2.msra.mxu0 0.0
    %2357 = vmatprep.subr.mxu0 0.0
    %2358 = vmatpush2.msra.mxu0 0.0
    %2359 = vmatprep.subr.mxu0 0.0
    %2360 = vmatpush2.msra.mxu0 0.0
    %2361 = vmatprep.subr.mxu0 0.0
    %2362 = vmatpush2.msra.mxu0 0.0
    %2363 = vmatprep.subr.mxu0 0.0
    %2364 = vmatpush2.msra.mxu0 0.0
    %2365 = vmatprep.subr.mxu0 0.0
    %2366 = vmatpush2.msra.mxu0 0.0
    %2367 = vmatprep.subr.mxu0 0.0
    %2368 = vmatpush2.msra.mxu0 0.0
    %2369 = vmatprep.mubr.f32.mxu0 0.0
    %2370 = vmatmul.mubr.f32.gmra.mxu0 %v2303
    %v2371 = vpop.f32.mrf.mxu0
    %v2372 = vadd.f32 0.0, %v2371
    %v2373 = vpop.f32.mrf.mxu0
    %2374 = vdwg.mxu0
    %v2375 = vadd.f32 %v2299, %v2372
    %v2376 = vxor.u32 %v2375, 2147483648
    %v2377 = vmul.f32 %v2376, 1.442695
    %v2378 = vpow.pop %v2377
    %v2379 = vadd.f32 %v2378, 1.0
    %v2380 = vrcp.pop %v2379
    %v2381 = vmul.f32 1.0, %v2380
    %v2382 = vtanh.pop %v2375
    %v2383 = vmul.f32 %v2381, %v2292
    %2385 = vrot.lane.b32.xlu0 %v2382, 64
    %v2386 = vpop.permute.xlu0 %2385
    %v2388 = vmul.f32 %v2381, %v2386
    %2390 = vrot.lane.b32.xlu0 %v2388, 32
    %v2391 = vpop.permute.xlu0 %2390
    %v2393 = vadd.f32 %v2383, %v2391
    %v2394 = vtanh.pop %v2393
    %2396 = vrot.lane.b32.xlu0 %v2394, 64
    %v2397 = vpop.permute.xlu0 %2396
    %v2399 = vmul.f32 %v2381, %v2397
    %v2400 = vld [vmem:[#allocation4 + $0x4] sm:$0x3]
    %2402 = vrot.lane.b32.xlu0 %v2399, 32
    %v2403 = vpop.permute.xlu0 %2402
    %v2404 = vsel %vm193, %v2403, 0
    %2406 = vmatprep.subr.mxu0 0.0
    %2407 = vmatpush1.msra.mxu0 0.0
    %2408 = vmatprep.subr.mxu0 0.0
    %2409 = vmatpush1.msra.mxu0 0.0
    %2410 = vmatprep.subr.mxu0 0.0
    %2411 = vmatpush1.msra.mxu0 0.0
    %2412 = vmatprep.subr.mxu0 0.0
    %2413 = vmatpush1.msra.mxu0 0.0
    %2414 = vmatprep.subr.mxu0 0.0
    %2415 = vmatpush1.msra.mxu0 0.0
    %2416 = vmatprep.subr.mxu0 0.0
    %2417 = vmatpush1.msra.mxu0 0.0
    %2418 = vmatprep.subr.mxu0 0.0
    %2419 = vmatpush1.msra.mxu0 0.0
    %2420 = vmatprep.subr.mxu0 0.0
    %2421 = vmatpush1.msra.mxu0 0.0
    %2422 = vmatprep.subr.mxu0 0.0
    %2423 = vmatpush1.msra.mxu0 0.0
    %2424 = vmatprep.subr.mxu0 0.0
    %2425 = vmatpush1.msra.mxu0 0.0
    %2426 = vmatprep.subr.mxu0 0.0
    %2427 = vmatpush1.msra.mxu0 0.0
    %2428 = vmatprep.subr.mxu0 0.0
    %2429 = vmatpush1.msra.mxu0 0.0
    %2430 = vmatprep.subr.mxu0 0.0
    %2431 = vmatpush1.msra.mxu0 %v2202
    %2432 = vmatprep.subr.mxu0 0.0
    %2433 = vmatpush1.msra.mxu0 %v2201
    %2434 = vmatprep.subr.mxu0 0.0
    %2435 = vmatpush1.msra.mxu0 %v2200
    %2436 = vmatprep.subr.mxu0 0.0
    %2437 = vmatpush1.msra.mxu0 %v2199
    %2438 = vmatprep.subr.mxu0 0.0
    %2439 = vmatpush2.msra.mxu0 0.0
    %2440 = vmatprep.subr.mxu0 0.0
    %2441 = vmatpush2.msra.mxu0 0.0
    %2442 = vmatprep.subr.mxu0 0.0
    %2443 = vmatpush2.msra.mxu0 0.0
    %2444 = vmatprep.subr.mxu0 0.0
    %2445 = vmatpush2.msra.mxu0 0.0
    %2446 = vmatprep.subr.mxu0 0.0
    %2447 = vmatpush2.msra.mxu0 0.0
    %2448 = vmatprep.subr.mxu0 0.0
    %2449 = vmatpush2.msra.mxu0 0.0
    %2450 = vmatprep.subr.mxu0 0.0
    %2451 = vmatpush2.msra.mxu0 0.0
    %2452 = vmatprep.subr.mxu0 0.0
    %2453 = vmatpush2.msra.mxu0 0.0
    %2454 = vmatprep.subr.mxu0 0.0
    %2455 = vmatpush2.msra.mxu0 0.0
    %2456 = vmatprep.subr.mxu0 0.0
    %2457 = vmatpush2.msra.mxu0 0.0
    %2458 = vmatprep.subr.mxu0 0.0
    %2459 = vmatpush2.msra.mxu0 0.0
    %2460 = vmatprep.subr.mxu0 0.0
    %2461 = vmatpush2.msra.mxu0 0.0
    %2462 = vmatprep.subr.mxu0 0.0
    %2463 = vmatpush2.msra.mxu0 0.0
    %2464 = vmatprep.subr.mxu0 0.0
    %2465 = vmatpush2.msra.mxu0 0.0
    %2466 = vmatprep.subr.mxu0 0.0
    %2467 = vmatpush2.msra.mxu0 0.0
    %2468 = vmatprep.subr.mxu0 0.0
    %2469 = vmatpush2.msra.mxu0 0.0
    %2470 = vmatprep.mubr.f32.mxu0 0.0
    %2471 = vmatmul.mubr.f32.gmra.mxu0 %v2404
    %v2472 = vpop.f32.mrf.mxu0
    %v2473 = vadd.f32 0.0, %v2472
    %v2474 = vpop.f32.mrf.mxu0
    %2475 = vdwg.mxu0
    %v2476 = vadd.f32 %v2400, %v2473
    %v2477 = vxor.u32 %v2476, 2147483648
    %v2478 = vmul.f32 %v2477, 1.442695
    %v2479 = vpow.pop %v2478
    %v2480 = vadd.f32 %v2479, 1.0
    %v2481 = vrcp.pop %v2480
    %v2482 = vmul.f32 1.0, %v2481
    %v2483 = vtanh.pop %v2476
    %v2484 = vmul.f32 %v2482, %v2393
    %2486 = vrot.lane.b32.xlu0 %v2483, 64
    %v2487 = vpop.permute.xlu0 %2486
    %v2489 = vmul.f32 %v2482, %v2487
    %2491 = vrot.lane.b32.xlu0 %v2489, 32
    %v2492 = vpop.permute.xlu0 %2491
    %v2494 = vadd.f32 %v2484, %v2492
    %v2495 = vtanh.pop %v2494
    %2497 = vrot.lane.b32.xlu0 %v2495, 64
    %v2498 = vpop.permute.xlu0 %2497
    %v2500 = vmul.f32 %v2482, %v2498
    %v2501 = vld [vmem:[#allocation4 + $0x6] sm:$0x3]
    %2503 = vrot.lane.b32.xlu0 %v2500, 32
    %v2504 = vpop.permute.xlu0 %2503
    %v2505 = vsel %vm193, %v2504, 0
    %2507 = vmatprep.subr.mxu0 0.0
    %2508 = vmatpush1.msra.mxu0 0.0
    %2509 = vmatprep.subr.mxu0 0.0
    %2510 = vmatpush1.msra.mxu0 0.0
    %2511 = vmatprep.subr.mxu0 0.0
    %2512 = vmatpush1.msra.mxu0 0.0
    %2513 = vmatprep.subr.mxu0 0.0
    %2514 = vmatpush1.msra.mxu0 0.0
    %2515 = vmatprep.subr.mxu0 0.0
    %2516 = vmatpush1.msra.mxu0 0.0
    %2517 = vmatprep.subr.mxu0 0.0
    %2518 = vmatpush1.msra.mxu0 0.0
    %2519 = vmatprep.subr.mxu0 0.0
    %2520 = vmatpush1.msra.mxu0 0.0
    %2521 = vmatprep.subr.mxu0 0.0
    %2522 = vmatpush1.msra.mxu0 0.0
    %2523 = vmatprep.subr.mxu0 0.0
    %2524 = vmatpush1.msra.mxu0 0.0
    %2525 = vmatprep.subr.mxu0 0.0
    %2526 = vmatpush1.msra.mxu0 0.0
    %2527 = vmatprep.subr.mxu0 0.0
    %2528 = vmatpush1.msra.mxu0 0.0
    %2529 = vmatprep.subr.mxu0 0.0
    %2530 = vmatpush1.msra.mxu0 0.0
    %2531 = vmatprep.subr.mxu0 0.0
    %2532 = vmatpush1.msra.mxu0 %v2202
    %2533 = vmatprep.subr.mxu0 0.0
    %2534 = vmatpush1.msra.mxu0 %v2201
    %2535 = vmatprep.subr.mxu0 0.0
    %2536 = vmatpush1.msra.mxu0 %v2200
    %2537 = vmatprep.subr.mxu0 0.0
    %2538 = vmatpush1.msra.mxu0 %v2199
    %2539 = vmatprep.subr.mxu0 0.0
    %2540 = vmatpush2.msra.mxu0 0.0
    %2541 = vmatprep.subr.mxu0 0.0
    %2542 = vmatpush2.msra.mxu0 0.0
    %2543 = vmatprep.subr.mxu0 0.0
    %2544 = vmatpush2.msra.mxu0 0.0
    %2545 = vmatprep.subr.mxu0 0.0
    %2546 = vmatpush2.msra.mxu0 0.0
    %2547 = vmatprep.subr.mxu0 0.0
    %2548 = vmatpush2.msra.mxu0 0.0
    %2549 = vmatprep.subr.mxu0 0.0
    %2550 = vmatpush2.msra.mxu0 0.0
    %2551 = vmatprep.subr.mxu0 0.0
    %2552 = vmatpush2.msra.mxu0 0.0
    %2553 = vmatprep.subr.mxu0 0.0
    %2554 = vmatpush2.msra.mxu0 0.0
    %2555 = vmatprep.subr.mxu0 0.0
    %2556 = vmatpush2.msra.mxu0 0.0
    %2557 = vmatprep.subr.mxu0 0.0
    %2558 = vmatpush2.msra.mxu0 0.0
    %2559 = vmatprep.subr.mxu0 0.0
    %2560 = vmatpush2.msra.mxu0 0.0
    %2561 = vmatprep.subr.mxu0 0.0
    %2562 = vmatpush2.msra.mxu0 0.0
    %2563 = vmatprep.subr.mxu0 0.0
    %2564 = vmatpush2.msra.mxu0 0.0
    %2565 = vmatprep.subr.mxu0 0.0
    %2566 = vmatpush2.msra.mxu0 0.0
    %2567 = vmatprep.subr.mxu0 0.0
    %2568 = vmatpush2.msra.mxu0 0.0
    %2569 = vmatprep.subr.mxu0 0.0
    %2570 = vmatpush2.msra.mxu0 0.0
    %2571 = vmatprep.mubr.f32.mxu0 0.0
    %2572 = vmatmul.mubr.f32.gmra.mxu0 %v2505
    %v2573 = vpop.f32.mrf.mxu0
    %v2574 = vadd.f32 0.0, %v2573
    %v2575 = vpop.f32.mrf.mxu0
    %2576 = vdwg.mxu0
    %v2577 = vadd.f32 %v2501, %v2574
    %v2578 = vxor.u32 %v2577, 2147483648
    %v2579 = vmul.f32 %v2578, 1.442695
    %v2580 = vpow.pop %v2579
    %v2581 = vadd.f32 %v2580, 1.0
    %v2582 = vrcp.pop %v2581
    %v2583 = vmul.f32 1.0, %v2582
    %v2584 = vtanh.pop %v2577
    %v2585 = vmul.f32 %v2583, %v2494
    %2587 = vrot.lane.b32.xlu0 %v2584, 64
    %v2588 = vpop.permute.xlu0 %2587
    %v2590 = vmul.f32 %v2583, %v2588
    %2592 = vrot.lane.b32.xlu0 %v2590, 32
    %v2593 = vpop.permute.xlu0 %2592
    %v2595 = vadd.f32 %v2585, %v2593
    %v2596 = vtanh.pop %v2595
    %2598 = vrot.lane.b32.xlu0 %v2596, 64
    %v2599 = vpop.permute.xlu0 %2598
    %v2601 = vmul.f32 %v2583, %v2599
    %v2602 = vld [vmem:[#allocation4 + $0x8] sm:$0x3]
    %2604 = vrot.lane.b32.xlu0 %v2601, 32
    %v2605 = vpop.permute.xlu0 %2604
    %v2606 = vsel %vm193, %v2605, 0
    %2608 = vmatprep.subr.mxu0 0.0
    %2609 = vmatpush1.msra.mxu0 0.0
    %2610 = vmatprep.subr.mxu0 0.0
    %2611 = vmatpush1.msra.mxu0 0.0
    %2612 = vmatprep.subr.mxu0 0.0
    %2613 = vmatpush1.msra.mxu0 0.0
    %2614 = vmatprep.subr.mxu0 0.0
    %2615 = vmatpush1.msra.mxu0 0.0
    %2616 = vmatprep.subr.mxu0 0.0
    %2617 = vmatpush1.msra.mxu0 0.0
    %2618 = vmatprep.subr.mxu0 0.0
    %2619 = vmatpush1.msra.mxu0 0.0
    %2620 = vmatprep.subr.mxu0 0.0
    %2621 = vmatpush1.msra.mxu0 0.0
    %2622 = vmatprep.subr.mxu0 0.0
    %2623 = vmatpush1.msra.mxu0 0.0
    %2624 = vmatprep.subr.mxu0 0.0
    %2625 = vmatpush1.msra.mxu0 0.0
    %2626 = vmatprep.subr.mxu0 0.0
    %2627 = vmatpush1.msra.mxu0 0.0
    %2628 = vmatprep.subr.mxu0 0.0
    %2629 = vmatpush1.msra.mxu0 0.0
    %2630 = vmatprep.subr.mxu0 0.0
    %2631 = vmatpush1.msra.mxu0 0.0
    %2632 = vmatprep.subr.mxu0 0.0
    %2633 = vmatpush1.msra.mxu0 %v2202
    %2634 = vmatprep.subr.mxu0 0.0
    %2635 = vmatpush1.msra.mxu0 %v2201
    %2636 = vmatprep.subr.mxu0 0.0
    %2637 = vmatpush1.msra.mxu0 %v2200
    %2638 = vmatprep.subr.mxu0 0.0
    %2639 = vmatpush1.msra.mxu0 %v2199
    %2640 = vmatprep.subr.mxu0 0.0
    %2641 = vmatpush2.msra.mxu0 0.0
    %2642 = vmatprep.subr.mxu0 0.0
    %2643 = vmatpush2.msra.mxu0 0.0
    %2644 = vmatprep.subr.mxu0 0.0
    %2645 = vmatpush2.msra.mxu0 0.0
    %2646 = vmatprep.subr.mxu0 0.0
    %2647 = vmatpush2.msra.mxu0 0.0
    %2648 = vmatprep.subr.mxu0 0.0
    %2649 = vmatpush2.msra.mxu0 0.0
    %2650 = vmatprep.subr.mxu0 0.0
    %2651 = vmatpush2.msra.mxu0 0.0
    %2652 = vmatprep.subr.mxu0 0.0
    %2653 = vmatpush2.msra.mxu0 0.0
    %2654 = vmatprep.subr.mxu0 0.0
    %2655 = vmatpush2.msra.mxu0 0.0
    %2656 = vmatprep.subr.mxu0 0.0
    %2657 = vmatpush2.msra.mxu0 0.0
    %2658 = vmatprep.subr.mxu0 0.0
    %2659 = vmatpush2.msra.mxu0 0.0
    %2660 = vmatprep.subr.mxu0 0.0
    %2661 = vmatpush2.msra.mxu0 0.0
    %2662 = vmatprep.subr.mxu0 0.0
    %2663 = vmatpush2.msra.mxu0 0.0
    %2664 = vmatprep.subr.mxu0 0.0
    %2665 = vmatpush2.msra.mxu0 0.0
    %2666 = vmatprep.subr.mxu0 0.0
    %2667 = vmatpush2.msra.mxu0 0.0
    %2668 = vmatprep.subr.mxu0 0.0
    %2669 = vmatpush2.msra.mxu0 0.0
    %2670 = vmatprep.subr.mxu0 0.0
    %2671 = vmatpush2.msra.mxu0 0.0
    %2672 = vmatprep.mubr.f32.mxu0 0.0
    %2673 = vmatmul.mubr.f32.gmra.mxu0 %v2606
    %v2674 = vpop.f32.mrf.mxu0
    %v2675 = vadd.f32 0.0, %v2674
    %v2676 = vpop.f32.mrf.mxu0
    %2677 = vdwg.mxu0
    %v2678 = vadd.f32 %v2602, %v2675
    %v2679 = vxor.u32 %v2678, 2147483648
    %v2680 = vmul.f32 %v2679, 1.442695
    %v2681 = vpow.pop %v2680
    %v2682 = vadd.f32 %v2681, 1.0
    %v2683 = vrcp.pop %v2682
    %v2684 = vmul.f32 1.0, %v2683
    %v2685 = vtanh.pop %v2678
    %v2686 = vmul.f32 %v2684, %v2595
    %2688 = vrot.lane.b32.xlu0 %v2685, 64
    %v2689 = vpop.permute.xlu0 %2688
    %v2691 = vmul.f32 %v2684, %v2689
    %2693 = vrot.lane.b32.xlu0 %v2691, 32
    %v2694 = vpop.permute.xlu0 %2693
    %v2696 = vadd.f32 %v2686, %v2694
    %v2697 = vtanh.pop %v2696
    %2699 = vrot.lane.b32.xlu0 %v2697, 64
    %v2700 = vpop.permute.xlu0 %2699
    %v2702 = vmul.f32 %v2684, %v2700
    %v2703 = vld [vmem:[#allocation4 + $0xa] sm:$0x3]
    %2705 = vrot.lane.b32.xlu0 %v2702, 32
    %v2706 = vpop.permute.xlu0 %2705
    %v2707 = vsel %vm193, %v2706, 0
    %2709 = vmatprep.subr.mxu0 0.0
    %2710 = vmatpush1.msra.mxu0 0.0
    %2711 = vmatprep.subr.mxu0 0.0
    %2712 = vmatpush1.msra.mxu0 0.0
    %2713 = vmatprep.subr.mxu0 0.0
    %2714 = vmatpush1.msra.mxu0 0.0
    %2715 = vmatprep.subr.mxu0 0.0
    %2716 = vmatpush1.msra.mxu0 0.0
    %2717 = vmatprep.subr.mxu0 0.0
    %2718 = vmatpush1.msra.mxu0 0.0
    %2719 = vmatprep.subr.mxu0 0.0
    %2720 = vmatpush1.msra.mxu0 0.0
    %2721 = vmatprep.subr.mxu0 0.0
    %2722 = vmatpush1.msra.mxu0 0.0
    %2723 = vmatprep.subr.mxu0 0.0
    %2724 = vmatpush1.msra.mxu0 0.0
    %2725 = vmatprep.subr.mxu0 0.0
    %2726 = vmatpush1.msra.mxu0 0.0
    %2727 = vmatprep.subr.mxu0 0.0
    %2728 = vmatpush1.msra.mxu0 0.0
    %2729 = vmatprep.subr.mxu0 0.0
    %2730 = vmatpush1.msra.mxu0 0.0
    %2731 = vmatprep.subr.mxu0 0.0
    %2732 = vmatpush1.msra.mxu0 0.0
    %2733 = vmatprep.subr.mxu0 0.0
    %2734 = vmatpush1.msra.mxu0 %v2202
    %2735 = vmatprep.subr.mxu0 0.0
    %2736 = vmatpush1.msra.mxu0 %v2201
    %2737 = vmatprep.subr.mxu0 0.0
    %2738 = vmatpush1.msra.mxu0 %v2200
    %2739 = vmatprep.subr.mxu0 0.0
    %2740 = vmatpush1.msra.mxu0 %v2199
    %2741 = vmatprep.subr.mxu0 0.0
    %2742 = vmatpush2.msra.mxu0 0.0
    %2743 = vmatprep.subr.mxu0 0.0
    %2744 = vmatpush2.msra.mxu0 0.0
    %2745 = vmatprep.subr.mxu0 0.0
    %2746 = vmatpush2.msra.mxu0 0.0
    %2747 = vmatprep.subr.mxu0 0.0
    %2748 = vmatpush2.msra.mxu0 0.0
    %2749 = vmatprep.subr.mxu0 0.0
    %2750 = vmatpush2.msra.mxu0 0.0
    %2751 = vmatprep.subr.mxu0 0.0
    %2752 = vmatpush2.msra.mxu0 0.0
    %2753 = vmatprep.subr.mxu0 0.0
    %2754 = vmatpush2.msra.mxu0 0.0
    %2755 = vmatprep.subr.mxu0 0.0
    %2756 = vmatpush2.msra.mxu0 0.0
    %2757 = vmatprep.subr.mxu0 0.0
    %2758 = vmatpush2.msra.mxu0 0.0
    %2759 = vmatprep.subr.mxu0 0.0
    %2760 = vmatpush2.msra.mxu0 0.0
    %2761 = vmatprep.subr.mxu0 0.0
    %2762 = vmatpush2.msra.mxu0 0.0
    %2763 = vmatprep.subr.mxu0 0.0
    %2764 = vmatpush2.msra.mxu0 0.0
    %2765 = vmatprep.subr.mxu0 0.0
    %2766 = vmatpush2.msra.mxu0 0.0
    %2767 = vmatprep.subr.mxu0 0.0
    %2768 = vmatpush2.msra.mxu0 0.0
    %2769 = vmatprep.subr.mxu0 0.0
    %2770 = vmatpush2.msra.mxu0 0.0
    %2771 = vmatprep.subr.mxu0 0.0
    %2772 = vmatpush2.msra.mxu0 0.0
    %2773 = vmatprep.mubr.f32.mxu0 0.0
    %2774 = vmatmul.mubr.f32.gmra.mxu0 %v2707
    %v2775 = vpop.f32.mrf.mxu0
    %v2776 = vadd.f32 0.0, %v2775
    %v2777 = vpop.f32.mrf.mxu0
    %2778 = vdwg.mxu0
    %v2779 = vadd.f32 %v2703, %v2776
    %v2780 = vxor.u32 %v2779, 2147483648
    %v2781 = vmul.f32 %v2780, 1.442695
    %v2782 = vpow.pop %v2781
    %v2783 = vadd.f32 %v2782, 1.0
    %v2784 = vrcp.pop %v2783
    %v2785 = vmul.f32 1.0, %v2784
    %v2786 = vtanh.pop %v2779
    %v2787 = vmul.f32 %v2785, %v2696
    %2789 = vrot.lane.b32.xlu0 %v2786, 64
    %v2790 = vpop.permute.xlu0 %2789
    %v2792 = vmul.f32 %v2785, %v2790
    %2794 = vrot.lane.b32.xlu0 %v2792, 32
    %v2795 = vpop.permute.xlu0 %2794
    %v2797 = vadd.f32 %v2787, %v2795
    %v2798 = vtanh.pop %v2797
    %2800 = vrot.lane.b32.xlu0 %v2798, 64
    %v2801 = vpop.permute.xlu0 %2800
    %v2803 = vmul.f32 %v2785, %v2801
    %v2804 = vld [vmem:[#allocation4 + $0xc] sm:$0x3]
    %2806 = vrot.lane.b32.xlu0 %v2803, 32
    %v2807 = vpop.permute.xlu0 %2806
    %v2808 = vsel %vm193, %v2807, 0
    %2810 = vmatprep.subr.mxu0 0.0
    %2811 = vmatpush1.msra.mxu0 0.0
    %2812 = vmatprep.subr.mxu0 0.0
    %2813 = vmatpush1.msra.mxu0 0.0
    %2814 = vmatprep.subr.mxu0 0.0
    %2815 = vmatpush1.msra.mxu0 0.0
    %2816 = vmatprep.subr.mxu0 0.0
    %2817 = vmatpush1.msra.mxu0 0.0
    %2818 = vmatprep.subr.mxu0 0.0
    %2819 = vmatpush1.msra.mxu0 0.0
    %2820 = vmatprep.subr.mxu0 0.0
    %2821 = vmatpush1.msra.mxu0 0.0
    %2822 = vmatprep.subr.mxu0 0.0
    %2823 = vmatpush1.msra.mxu0 0.0
    %2824 = vmatprep.subr.mxu0 0.0
    %2825 = vmatpush1.msra.mxu0 0.0
    %2826 = vmatprep.subr.mxu0 0.0
    %2827 = vmatpush1.msra.mxu0 0.0
    %2828 = vmatprep.subr.mxu0 0.0
    %2829 = vmatpush1.msra.mxu0 0.0
    %2830 = vmatprep.subr.mxu0 0.0
    %2831 = vmatpush1.msra.mxu0 0.0
    %2832 = vmatprep.subr.mxu0 0.0
    %2833 = vmatpush1.msra.mxu0 0.0
    %2834 = vmatprep.subr.mxu0 0.0
    %2835 = vmatpush1.msra.mxu0 %v2202
    %2836 = vmatprep.subr.mxu0 0.0
    %2837 = vmatpush1.msra.mxu0 %v2201
    %2838 = vmatprep.subr.mxu0 0.0
    %2839 = vmatpush1.msra.mxu0 %v2200
    %2840 = vmatprep.subr.mxu0 0.0
    %2841 = vmatpush1.msra.mxu0 %v2199
    %2842 = vmatprep.subr.mxu0 0.0
    %2843 = vmatpush2.msra.mxu0 0.0
    %2844 = vmatprep.subr.mxu0 0.0
    %2845 = vmatpush2.msra.mxu0 0.0
    %2846 = vmatprep.subr.mxu0 0.0
    %2847 = vmatpush2.msra.mxu0 0.0
    %2848 = vmatprep.subr.mxu0 0.0
    %2849 = vmatpush2.msra.mxu0 0.0
    %2850 = vmatprep.subr.mxu0 0.0
    %2851 = vmatpush2.msra.mxu0 0.0
    %2852 = vmatprep.subr.mxu0 0.0
    %2853 = vmatpush2.msra.mxu0 0.0
    %2854 = vmatprep.subr.mxu0 0.0
    %2855 = vmatpush2.msra.mxu0 0.0
    %2856 = vmatprep.subr.mxu0 0.0
    %2857 = vmatpush2.msra.mxu0 0.0
    %2858 = vmatprep.subr.mxu0 0.0
    %2859 = vmatpush2.msra.mxu0 0.0
    %2860 = vmatprep.subr.mxu0 0.0
    %2861 = vmatpush2.msra.mxu0 0.0
    %2862 = vmatprep.subr.mxu0 0.0
    %2863 = vmatpush2.msra.mxu0 0.0
    %2864 = vmatprep.subr.mxu0 0.0
    %2865 = vmatpush2.msra.mxu0 0.0
    %2866 = vmatprep.subr.mxu0 0.0
    %2867 = vmatpush2.msra.mxu0 0.0
    %2868 = vmatprep.subr.mxu0 0.0
    %2869 = vmatpush2.msra.mxu0 0.0
    %2870 = vmatprep.subr.mxu0 0.0
    %2871 = vmatpush2.msra.mxu0 0.0
    %2872 = vmatprep.subr.mxu0 0.0
    %2873 = vmatpush2.msra.mxu0 0.0
    %2874 = vmatprep.mubr.f32.mxu0 0.0
    %2875 = vmatmul.mubr.f32.gmra.mxu0 %v2808
    %v2876 = vpop.f32.mrf.mxu0
    %v2877 = vadd.f32 0.0, %v2876
    %v2878 = vpop.f32.mrf.mxu0
    %2879 = vdwg.mxu0
    %v2880 = vadd.f32 %v2804, %v2877
    %v2881 = vxor.u32 %v2880, 2147483648
    %v2882 = vmul.f32 %v2881, 1.442695
    %v2883 = vpow.pop %v2882
    %v2884 = vadd.f32 %v2883, 1.0
    %v2885 = vrcp.pop %v2884
    %v2886 = vmul.f32 1.0, %v2885
    %v2887 = vtanh.pop %v2880
    %v2888 = vmul.f32 %v2886, %v2797
    %2890 = vrot.lane.b32.xlu0 %v2887, 64
    %v2891 = vpop.permute.xlu0 %2890
    %v2893 = vmul.f32 %v2886, %v2891
    %2895 = vrot.lane.b32.xlu0 %v2893, 32
    %v2896 = vpop.permute.xlu0 %2895
    %v2898 = vadd.f32 %v2888, %v2896
    %v2899 = vtanh.pop %v2898
    %2901 = vrot.lane.b32.xlu0 %v2899, 64
    %v2902 = vpop.permute.xlu0 %2901
    %v2904 = vmul.f32 %v2886, %v2902
    %v2905 = vld [vmem:[#allocation4 + $0xe] sm:$0x3]
    %2907 = vrot.lane.b32.xlu0 %v2904, 32
    %v2908 = vpop.permute.xlu0 %2907
    %v2909 = vsel %vm193, %v2908, 0
    %2911 = vmatprep.subr.mxu0 0.0
    %2912 = vmatpush1.msra.mxu0 0.0
    %2913 = vmatprep.subr.mxu0 0.0
    %2914 = vmatpush1.msra.mxu0 0.0
    %2915 = vmatprep.subr.mxu0 0.0
    %2916 = vmatpush1.msra.mxu0 0.0
    %2917 = vmatprep.subr.mxu0 0.0
    %2918 = vmatpush1.msra.mxu0 0.0
    %2919 = vmatprep.subr.mxu0 0.0
    %2920 = vmatpush1.msra.mxu0 0.0
    %2921 = vmatprep.subr.mxu0 0.0
    %2922 = vmatpush1.msra.mxu0 0.0
    %2923 = vmatprep.subr.mxu0 0.0
    %2924 = vmatpush1.msra.mxu0 0.0
    %2925 = vmatprep.subr.mxu0 0.0
    %2926 = vmatpush1.msra.mxu0 0.0
    %2927 = vmatprep.subr.mxu0 0.0
    %2928 = vmatpush1.msra.mxu0 0.0
    %2929 = vmatprep.subr.mxu0 0.0
    %2930 = vmatpush1.msra.mxu0 0.0
    %2931 = vmatprep.subr.mxu0 0.0
    %2932 = vmatpush1.msra.mxu0 0.0
    %2933 = vmatprep.subr.mxu0 0.0
    %2934 = vmatpush1.msra.mxu0 0.0
    %2935 = vmatprep.subr.mxu0 0.0
    %2936 = vmatpush1.msra.mxu0 %v2202
    %2937 = vmatprep.subr.mxu0 0.0
    %2938 = vmatpush1.msra.mxu0 %v2201
    %2939 = vmatprep.subr.mxu0 0.0
    %2940 = vmatpush1.msra.mxu0 %v2200
    %2941 = vmatprep.subr.mxu0 0.0
    %2942 = vmatpush1.msra.mxu0 %v2199
    %2943 = vmatprep.subr.mxu0 0.0
    %2944 = vmatpush2.msra.mxu0 0.0
    %2945 = vmatprep.subr.mxu0 0.0
    %2946 = vmatpush2.msra.mxu0 0.0
    %2947 = vmatprep.subr.mxu0 0.0
    %2948 = vmatpush2.msra.mxu0 0.0
    %2949 = vmatprep.subr.mxu0 0.0
    %2950 = vmatpush2.msra.mxu0 0.0
    %2951 = vmatprep.subr.mxu0 0.0
    %2952 = vmatpush2.msra.mxu0 0.0
    %2953 = vmatprep.subr.mxu0 0.0
    %2954 = vmatpush2.msra.mxu0 0.0
    %2955 = vmatprep.subr.mxu0 0.0
    %2956 = vmatpush2.msra.mxu0 0.0
    %2957 = vmatprep.subr.mxu0 0.0
    %2958 = vmatpush2.msra.mxu0 0.0
    %2959 = vmatprep.subr.mxu0 0.0
    %2960 = vmatpush2.msra.mxu0 0.0
    %2961 = vmatprep.subr.mxu0 0.0
    %2962 = vmatpush2.msra.mxu0 0.0
    %2963 = vmatprep.subr.mxu0 0.0
    %2964 = vmatpush2.msra.mxu0 0.0
    %2965 = vmatprep.subr.mxu0 0.0
    %2966 = vmatpush2.msra.mxu0 0.0
    %2967 = vmatprep.subr.mxu0 0.0
    %2968 = vmatpush2.msra.mxu0 0.0
    %2969 = vmatprep.subr.mxu0 0.0
    %2970 = vmatpush2.msra.mxu0 0.0
    %2971 = vmatprep.subr.mxu0 0.0
    %2972 = vmatpush2.msra.mxu0 0.0
    %2973 = vmatprep.subr.mxu0 0.0
    %2974 = vmatpush2.msra.mxu0 0.0
    %2975 = vmatprep.mubr.f32.mxu0 0.0
    %2976 = vmatmul.mubr.f32.gmra.mxu0 %v2909
    %v2977 = vpop.f32.mrf.mxu0
    %v2978 = vadd.f32 0.0, %v2977
    %v2979 = vpop.f32.mrf.mxu0
    %2980 = vdwg.mxu0
    %v2981 = vadd.f32 %v2905, %v2978
    %v2982 = vxor.u32 %v2981, 2147483648
    %v2983 = vmul.f32 %v2982, 1.442695
    %v2984 = vpow.pop %v2983
    %v2985 = vadd.f32 %v2984, 1.0
    %v2986 = vrcp.pop %v2985
    %v2987 = vmul.f32 1.0, %v2986
    %v2988 = vtanh.pop %v2981
    %v2989 = vmul.f32 %v2987, %v2898
    %2991 = vrot.lane.b32.xlu0 %v2988, 64
    %v2992 = vpop.permute.xlu0 %2991
    %v2994 = vmul.f32 %v2987, %v2992
    %2996 = vrot.lane.b32.xlu0 %v2994, 32
    %v2997 = vpop.permute.xlu0 %2996
    %v2999 = vadd.f32 %v2989, %v2997
    %v3000 = vtanh.pop %v2999
    %3002 = vrot.lane.b32.xlu0 %v3000, 64
    %v3003 = vpop.permute.xlu0 %3002
    %v3005 = vmul.f32 %v2987, %v3003
    %v3006 = vld [vmem:[#allocation21] sm:$0xff]
    %v3007 = vld [vmem:[#allocation21 + $0x8] sm:$0xff]
    %v3008 = vld [vmem:[#allocation21 + $0x10] sm:$0xff]
    %v3009 = vld [vmem:[#allocation21 + $0x18] sm:$0xff]
    %v3010 = vld [vmem:[#allocation5 + $0xe] sm:$0x3]
    %3011 = vmatprep.subr.mxu0 0.0
    %3012 = vmatpush1.msra.mxu0 0.0
    %3013 = vmatprep.subr.mxu0 0.0
    %3014 = vmatpush1.msra.mxu0 0.0
    %3015 = vmatprep.subr.mxu0 0.0
    %3016 = vmatpush1.msra.mxu0 0.0
    %3017 = vmatprep.subr.mxu0 0.0
    %3018 = vmatpush1.msra.mxu0 0.0
    %3019 = vmatprep.subr.mxu0 0.0
    %3020 = vmatpush1.msra.mxu0 0.0
    %3021 = vmatprep.subr.mxu0 0.0
    %3022 = vmatpush1.msra.mxu0 0.0
    %3023 = vmatprep.subr.mxu0 0.0
    %3024 = vmatpush1.msra.mxu0 0.0
    %3025 = vmatprep.subr.mxu0 0.0
    %3026 = vmatpush1.msra.mxu0 0.0
    %3027 = vmatprep.subr.mxu0 0.0
    %3028 = vmatpush1.msra.mxu0 0.0
    %3029 = vmatprep.subr.mxu0 0.0
    %3030 = vmatpush1.msra.mxu0 0.0
    %3031 = vmatprep.subr.mxu0 0.0
    %3032 = vmatpush1.msra.mxu0 0.0
    %3033 = vmatprep.subr.mxu0 0.0
    %3034 = vmatpush1.msra.mxu0 0.0
    %3035 = vmatprep.subr.mxu0 0.0
    %3036 = vmatpush1.msra.mxu0 %v3009
    %3037 = vmatprep.subr.mxu0 0.0
    %3038 = vmatpush1.msra.mxu0 %v3008
    %3039 = vmatprep.subr.mxu0 0.0
    %3040 = vmatpush1.msra.mxu0 %v3007
    %3041 = vmatprep.subr.mxu0 0.0
    %3042 = vmatpush1.msra.mxu0 %v3006
    %3043 = vmatprep.subr.mxu0 0.0
    %3044 = vmatpush2.msra.mxu0 0.0
    %3045 = vmatprep.subr.mxu0 0.0
    %3046 = vmatpush2.msra.mxu0 0.0
    %3047 = vmatprep.subr.mxu0 0.0
    %3048 = vmatpush2.msra.mxu0 0.0
    %3049 = vmatprep.subr.mxu0 0.0
    %3050 = vmatpush2.msra.mxu0 0.0
    %3051 = vmatprep.subr.mxu0 0.0
    %3052 = vmatpush2.msra.mxu0 0.0
    %3053 = vmatprep.subr.mxu0 0.0
    %3054 = vmatpush2.msra.mxu0 0.0
    %3055 = vmatprep.subr.mxu0 0.0
    %3056 = vmatpush2.msra.mxu0 0.0
    %3057 = vmatprep.subr.mxu0 0.0
    %3058 = vmatpush2.msra.mxu0 0.0
    %3059 = vmatprep.subr.mxu0 0.0
    %3060 = vmatpush2.msra.mxu0 0.0
    %3061 = vmatprep.subr.mxu0 0.0
    %3062 = vmatpush2.msra.mxu0 0.0
    %3063 = vmatprep.subr.mxu0 0.0
    %3064 = vmatpush2.msra.mxu0 0.0
    %3065 = vmatprep.subr.mxu0 0.0
    %3066 = vmatpush2.msra.mxu0 0.0
    %3067 = vmatprep.subr.mxu0 0.0
    %3068 = vmatpush2.msra.mxu0 0.0
    %3069 = vmatprep.subr.mxu0 0.0
    %3070 = vmatpush2.msra.mxu0 0.0
    %3071 = vmatprep.subr.mxu0 0.0
    %3072 = vmatpush2.msra.mxu0 0.0
    %3073 = vmatprep.subr.mxu0 0.0
    %3074 = vmatpush2.msra.mxu0 0.0
    %3075 = vmatprep.mubr.f32.mxu0 0.0
    %3076 = vmatmul.mubr.f32.gmra.mxu0 %v195
    %v3077 = vpop.f32.mrf.mxu0
    %v3078 = vadd.f32 0.0, %v3077
    %v3079 = vpop.f32.mrf.mxu0
    %3080 = vdwg.mxu0
    %v3081 = vadd.f32 %v3010, %v3078
    %v3082 = vxor.u32 %v3081, 2147483648
    %v3083 = vmul.f32 %v3082, 1.442695
    %v3084 = vpow.pop %v3083
    %v3085 = vadd.f32 %v3084, 1.0
    %v3086 = vrcp.pop %v3085
    %v3087 = vmul.f32 1.0, %v3086
    %v3088 = vtanh.pop %v3081
    %v3089 = vmul.f32 %v3087, 0.0
    %3091 = vrot.lane.b32.xlu0 %v3088, 64
    %v3092 = vpop.permute.xlu0 %3091
    %v3094 = vmul.f32 %v3087, %v3092
    %3096 = vrot.lane.b32.xlu0 %v3094, 32
    %v3097 = vpop.permute.xlu0 %3096
    %v3099 = vadd.f32 %v3089, %v3097
    %v3100 = vtanh.pop %v3099
    %3102 = vrot.lane.b32.xlu0 %v3100, 64
    %v3103 = vpop.permute.xlu0 %3102
    %v3105 = vmul.f32 %v3087, %v3103
    %v3106 = vld [vmem:[#allocation5 + $0xc] sm:$0x3]
    %3108 = vrot.lane.b32.xlu0 %v3105, 32
    %v3109 = vpop.permute.xlu0 %3108
    %v3110 = vsel %vm193, %v3109, 0
    %3112 = vmatprep.subr.mxu0 0.0
    %3113 = vmatpush1.msra.mxu0 0.0
    %3114 = vmatprep.subr.mxu0 0.0
    %3115 = vmatpush1.msra.mxu0 0.0
    %3116 = vmatprep.subr.mxu0 0.0
    %3117 = vmatpush1.msra.mxu0 0.0
    %3118 = vmatprep.subr.mxu0 0.0
    %3119 = vmatpush1.msra.mxu0 0.0
    %3120 = vmatprep.subr.mxu0 0.0
    %3121 = vmatpush1.msra.mxu0 0.0
    %3122 = vmatprep.subr.mxu0 0.0
    %3123 = vmatpush1.msra.mxu0 0.0
    %3124 = vmatprep.subr.mxu0 0.0
    %3125 = vmatpush1.msra.mxu0 0.0
    %3126 = vmatprep.subr.mxu0 0.0
    %3127 = vmatpush1.msra.mxu0 0.0
    %3128 = vmatprep.subr.mxu0 0.0
    %3129 = vmatpush1.msra.mxu0 0.0
    %3130 = vmatprep.subr.mxu0 0.0
    %3131 = vmatpush1.msra.mxu0 0.0
    %3132 = vmatprep.subr.mxu0 0.0
    %3133 = vmatpush1.msra.mxu0 0.0
    %3134 = vmatprep.subr.mxu0 0.0
    %3135 = vmatpush1.msra.mxu0 0.0
    %3136 = vmatprep.subr.mxu0 0.0
    %3137 = vmatpush1.msra.mxu0 %v3009
    %3138 = vmatprep.subr.mxu0 0.0
    %3139 = vmatpush1.msra.mxu0 %v3008
    %3140 = vmatprep.subr.mxu0 0.0
    %3141 = vmatpush1.msra.mxu0 %v3007
    %3142 = vmatprep.subr.mxu0 0.0
    %3143 = vmatpush1.msra.mxu0 %v3006
    %3144 = vmatprep.subr.mxu0 0.0
    %3145 = vmatpush2.msra.mxu0 0.0
    %3146 = vmatprep.subr.mxu0 0.0
    %3147 = vmatpush2.msra.mxu0 0.0
    %3148 = vmatprep.subr.mxu0 0.0
    %3149 = vmatpush2.msra.mxu0 0.0
    %3150 = vmatprep.subr.mxu0 0.0
    %3151 = vmatpush2.msra.mxu0 0.0
    %3152 = vmatprep.subr.mxu0 0.0
    %3153 = vmatpush2.msra.mxu0 0.0
    %3154 = vmatprep.subr.mxu0 0.0
    %3155 = vmatpush2.msra.mxu0 0.0
    %3156 = vmatprep.subr.mxu0 0.0
    %3157 = vmatpush2.msra.mxu0 0.0
    %3158 = vmatprep.subr.mxu0 0.0
    %3159 = vmatpush2.msra.mxu0 0.0
    %3160 = vmatprep.subr.mxu0 0.0
    %3161 = vmatpush2.msra.mxu0 0.0
    %3162 = vmatprep.subr.mxu0 0.0
    %3163 = vmatpush2.msra.mxu0 0.0
    %3164 = vmatprep.subr.mxu0 0.0
    %3165 = vmatpush2.msra.mxu0 0.0
    %3166 = vmatprep.subr.mxu0 0.0
    %3167 = vmatpush2.msra.mxu0 0.0
    %3168 = vmatprep.subr.mxu0 0.0
    %3169 = vmatpush2.msra.mxu0 0.0
    %3170 = vmatprep.subr.mxu0 0.0
    %3171 = vmatpush2.msra.mxu0 0.0
    %3172 = vmatprep.subr.mxu0 0.0
    %3173 = vmatpush2.msra.mxu0 0.0
    %3174 = vmatprep.subr.mxu0 0.0
    %3175 = vmatpush2.msra.mxu0 0.0
    %3176 = vmatprep.mubr.f32.mxu0 0.0
    %3177 = vmatmul.mubr.f32.gmra.mxu0 %v3110
    %v3178 = vpop.f32.mrf.mxu0
    %v3179 = vadd.f32 0.0, %v3178
    %v3180 = vpop.f32.mrf.mxu0
    %3181 = vdwg.mxu0
    %v3182 = vadd.f32 %v3106, %v3179
    %v3183 = vxor.u32 %v3182, 2147483648
    %v3184 = vmul.f32 %v3183, 1.442695
    %v3185 = vpow.pop %v3184
    %v3186 = vadd.f32 %v3185, 1.0
    %v3187 = vrcp.pop %v3186
    %v3188 = vmul.f32 1.0, %v3187
    %v3189 = vtanh.pop %v3182
    %v3190 = vmul.f32 %v3188, %v3099
    %3192 = vrot.lane.b32.xlu0 %v3189, 64
    %v3193 = vpop.permute.xlu0 %3192
    %v3195 = vmul.f32 %v3188, %v3193
    %3197 = vrot.lane.b32.xlu0 %v3195, 32
    %v3198 = vpop.permute.xlu0 %3197
    %v3200 = vadd.f32 %v3190, %v3198
    %v3201 = vtanh.pop %v3200
    %3203 = vrot.lane.b32.xlu0 %v3201, 64
    %v3204 = vpop.permute.xlu0 %3203
    %v3206 = vmul.f32 %v3188, %v3204
    %v3207 = vld [vmem:[#allocation5 + $0xa] sm:$0x3]
    %3209 = vrot.lane.b32.xlu0 %v3206, 32
    %v3210 = vpop.permute.xlu0 %3209
    %v3211 = vsel %vm193, %v3210, 0
    %3213 = vmatprep.subr.mxu0 0.0
    %3214 = vmatpush1.msra.mxu0 0.0
    %3215 = vmatprep.subr.mxu0 0.0
    %3216 = vmatpush1.msra.mxu0 0.0
    %3217 = vmatprep.subr.mxu0 0.0
    %3218 = vmatpush1.msra.mxu0 0.0
    %3219 = vmatprep.subr.mxu0 0.0
    %3220 = vmatpush1.msra.mxu0 0.0
    %3221 = vmatprep.subr.mxu0 0.0
    %3222 = vmatpush1.msra.mxu0 0.0
    %3223 = vmatprep.subr.mxu0 0.0
    %3224 = vmatpush1.msra.mxu0 0.0
    %3225 = vmatprep.subr.mxu0 0.0
    %3226 = vmatpush1.msra.mxu0 0.0
    %3227 = vmatprep.subr.mxu0 0.0
    %3228 = vmatpush1.msra.mxu0 0.0
    %3229 = vmatprep.subr.mxu0 0.0
    %3230 = vmatpush1.msra.mxu0 0.0
    %3231 = vmatprep.subr.mxu0 0.0
    %3232 = vmatpush1.msra.mxu0 0.0
    %3233 = vmatprep.subr.mxu0 0.0
    %3234 = vmatpush1.msra.mxu0 0.0
    %3235 = vmatprep.subr.mxu0 0.0
    %3236 = vmatpush1.msra.mxu0 0.0
    %3237 = vmatprep.subr.mxu0 0.0
    %3238 = vmatpush1.msra.mxu0 %v3009
    %3239 = vmatprep.subr.mxu0 0.0
    %3240 = vmatpush1.msra.mxu0 %v3008
    %3241 = vmatprep.subr.mxu0 0.0
    %3242 = vmatpush1.msra.mxu0 %v3007
    %3243 = vmatprep.subr.mxu0 0.0
    %3244 = vmatpush1.msra.mxu0 %v3006
    %3245 = vmatprep.subr.mxu0 0.0
    %3246 = vmatpush2.msra.mxu0 0.0
    %3247 = vmatprep.subr.mxu0 0.0
    %3248 = vmatpush2.msra.mxu0 0.0
    %3249 = vmatprep.subr.mxu0 0.0
    %3250 = vmatpush2.msra.mxu0 0.0
    %3251 = vmatprep.subr.mxu0 0.0
    %3252 = vmatpush2.msra.mxu0 0.0
    %3253 = vmatprep.subr.mxu0 0.0
    %3254 = vmatpush2.msra.mxu0 0.0
    %3255 = vmatprep.subr.mxu0 0.0
    %3256 = vmatpush2.msra.mxu0 0.0
    %3257 = vmatprep.subr.mxu0 0.0
    %3258 = vmatpush2.msra.mxu0 0.0
    %3259 = vmatprep.subr.mxu0 0.0
    %3260 = vmatpush2.msra.mxu0 0.0
    %3261 = vmatprep.subr.mxu0 0.0
    %3262 = vmatpush2.msra.mxu0 0.0
    %3263 = vmatprep.subr.mxu0 0.0
    %3264 = vmatpush2.msra.mxu0 0.0
    %3265 = vmatprep.subr.mxu0 0.0
    %3266 = vmatpush2.msra.mxu0 0.0
    %3267 = vmatprep.subr.mxu0 0.0
    %3268 = vmatpush2.msra.mxu0 0.0
    %3269 = vmatprep.subr.mxu0 0.0
    %3270 = vmatpush2.msra.mxu0 0.0
    %3271 = vmatprep.subr.mxu0 0.0
    %3272 = vmatpush2.msra.mxu0 0.0
    %3273 = vmatprep.subr.mxu0 0.0
    %3274 = vmatpush2.msra.mxu0 0.0
    %3275 = vmatprep.subr.mxu0 0.0
    %3276 = vmatpush2.msra.mxu0 0.0
    %3277 = vmatprep.mubr.f32.mxu0 0.0
    %3278 = vmatmul.mubr.f32.gmra.mxu0 %v3211
    %v3279 = vpop.f32.mrf.mxu0
    %v3280 = vadd.f32 0.0, %v3279
    %v3281 = vpop.f32.mrf.mxu0
    %3282 = vdwg.mxu0
    %v3283 = vadd.f32 %v3207, %v3280
    %v3284 = vxor.u32 %v3283, 2147483648
    %v3285 = vmul.f32 %v3284, 1.442695
    %v3286 = vpow.pop %v3285
    %v3287 = vadd.f32 %v3286, 1.0
    %v3288 = vrcp.pop %v3287
    %v3289 = vmul.f32 1.0, %v3288
    %v3290 = vtanh.pop %v3283
    %v3291 = vmul.f32 %v3289, %v3200
    %3293 = vrot.lane.b32.xlu0 %v3290, 64
    %v3294 = vpop.permute.xlu0 %3293
    %v3296 = vmul.f32 %v3289, %v3294
    %3298 = vrot.lane.b32.xlu0 %v3296, 32
    %v3299 = vpop.permute.xlu0 %3298
    %v3301 = vadd.f32 %v3291, %v3299
    %v3302 = vtanh.pop %v3301
    %3304 = vrot.lane.b32.xlu0 %v3302, 64
    %v3305 = vpop.permute.xlu0 %3304
    %v3307 = vmul.f32 %v3289, %v3305
    %v3308 = vld [vmem:[#allocation5 + $0x8] sm:$0x3]
    %3310 = vrot.lane.b32.xlu0 %v3307, 32
    %v3311 = vpop.permute.xlu0 %3310
    %v3312 = vsel %vm193, %v3311, 0
    %3314 = vmatprep.subr.mxu0 0.0
    %3315 = vmatpush1.msra.mxu0 0.0
    %3316 = vmatprep.subr.mxu0 0.0
    %3317 = vmatpush1.msra.mxu0 0.0
    %3318 = vmatprep.subr.mxu0 0.0
    %3319 = vmatpush1.msra.mxu0 0.0
    %3320 = vmatprep.subr.mxu0 0.0
    %3321 = vmatpush1.msra.mxu0 0.0
    %3322 = vmatprep.subr.mxu0 0.0
    %3323 = vmatpush1.msra.mxu0 0.0
    %3324 = vmatprep.subr.mxu0 0.0
    %3325 = vmatpush1.msra.mxu0 0.0
    %3326 = vmatprep.subr.mxu0 0.0
    %3327 = vmatpush1.msra.mxu0 0.0
    %3328 = vmatprep.subr.mxu0 0.0
    %3329 = vmatpush1.msra.mxu0 0.0
    %3330 = vmatprep.subr.mxu0 0.0
    %3331 = vmatpush1.msra.mxu0 0.0
    %3332 = vmatprep.subr.mxu0 0.0
    %3333 = vmatpush1.msra.mxu0 0.0
    %3334 = vmatprep.subr.mxu0 0.0
    %3335 = vmatpush1.msra.mxu0 0.0
    %3336 = vmatprep.subr.mxu0 0.0
    %3337 = vmatpush1.msra.mxu0 0.0
    %3338 = vmatprep.subr.mxu0 0.0
    %3339 = vmatpush1.msra.mxu0 %v3009
    %3340 = vmatprep.subr.mxu0 0.0
    %3341 = vmatpush1.msra.mxu0 %v3008
    %3342 = vmatprep.subr.mxu0 0.0
    %3343 = vmatpush1.msra.mxu0 %v3007
    %3344 = vmatprep.subr.mxu0 0.0
    %3345 = vmatpush1.msra.mxu0 %v3006
    %3346 = vmatprep.subr.mxu0 0.0
    %3347 = vmatpush2.msra.mxu0 0.0
    %3348 = vmatprep.subr.mxu0 0.0
    %3349 = vmatpush2.msra.mxu0 0.0
    %3350 = vmatprep.subr.mxu0 0.0
    %3351 = vmatpush2.msra.mxu0 0.0
    %3352 = vmatprep.subr.mxu0 0.0
    %3353 = vmatpush2.msra.mxu0 0.0
    %3354 = vmatprep.subr.mxu0 0.0
    %3355 = vmatpush2.msra.mxu0 0.0
    %3356 = vmatprep.subr.mxu0 0.0
    %3357 = vmatpush2.msra.mxu0 0.0
    %3358 = vmatprep.subr.mxu0 0.0
    %3359 = vmatpush2.msra.mxu0 0.0
    %3360 = vmatprep.subr.mxu0 0.0
    %3361 = vmatpush2.msra.mxu0 0.0
    %3362 = vmatprep.subr.mxu0 0.0
    %3363 = vmatpush2.msra.mxu0 0.0
    %3364 = vmatprep.subr.mxu0 0.0
    %3365 = vmatpush2.msra.mxu0 0.0
    %3366 = vmatprep.subr.mxu0 0.0
    %3367 = vmatpush2.msra.mxu0 0.0
    %3368 = vmatprep.subr.mxu0 0.0
    %3369 = vmatpush2.msra.mxu0 0.0
    %3370 = vmatprep.subr.mxu0 0.0
    %3371 = vmatpush2.msra.mxu0 0.0
    %3372 = vmatprep.subr.mxu0 0.0
    %3373 = vmatpush2.msra.mxu0 0.0
    %3374 = vmatprep.subr.mxu0 0.0
    %3375 = vmatpush2.msra.mxu0 0.0
    %3376 = vmatprep.subr.mxu0 0.0
    %3377 = vmatpush2.msra.mxu0 0.0
    %3378 = vmatprep.mubr.f32.mxu0 0.0
    %3379 = vmatmul.mubr.f32.gmra.mxu0 %v3312
    %v3380 = vpop.f32.mrf.mxu0
    %v3381 = vadd.f32 0.0, %v3380
    %v3382 = vpop.f32.mrf.mxu0
    %3383 = vdwg.mxu0
    %v3384 = vadd.f32 %v3308, %v3381
    %v3385 = vxor.u32 %v3384, 2147483648
    %v3386 = vmul.f32 %v3385, 1.442695
    %v3387 = vpow.pop %v3386
    %v3388 = vadd.f32 %v3387, 1.0
    %v3389 = vrcp.pop %v3388
    %v3390 = vmul.f32 1.0, %v3389
    %v3391 = vtanh.pop %v3384
    %v3392 = vmul.f32 %v3390, %v3301
    %3394 = vrot.lane.b32.xlu0 %v3391, 64
    %v3395 = vpop.permute.xlu0 %3394
    %v3397 = vmul.f32 %v3390, %v3395
    %3399 = vrot.lane.b32.xlu0 %v3397, 32
    %v3400 = vpop.permute.xlu0 %3399
    %v3402 = vadd.f32 %v3392, %v3400
    %v3403 = vtanh.pop %v3402
    %3405 = vrot.lane.b32.xlu0 %v3403, 64
    %v3406 = vpop.permute.xlu0 %3405
    %v3408 = vmul.f32 %v3390, %v3406
    %v3409 = vld [vmem:[#allocation5 + $0x6] sm:$0x3]
    %3411 = vrot.lane.b32.xlu0 %v3408, 32
    %v3412 = vpop.permute.xlu0 %3411
    %v3413 = vsel %vm193, %v3412, 0
    %3415 = vmatprep.subr.mxu0 0.0
    %3416 = vmatpush1.msra.mxu0 0.0
    %3417 = vmatprep.subr.mxu0 0.0
    %3418 = vmatpush1.msra.mxu0 0.0
    %3419 = vmatprep.subr.mxu0 0.0
    %3420 = vmatpush1.msra.mxu0 0.0
    %3421 = vmatprep.subr.mxu0 0.0
    %3422 = vmatpush1.msra.mxu0 0.0
    %3423 = vmatprep.subr.mxu0 0.0
    %3424 = vmatpush1.msra.mxu0 0.0
    %3425 = vmatprep.subr.mxu0 0.0
    %3426 = vmatpush1.msra.mxu0 0.0
    %3427 = vmatprep.subr.mxu0 0.0
    %3428 = vmatpush1.msra.mxu0 0.0
    %3429 = vmatprep.subr.mxu0 0.0
    %3430 = vmatpush1.msra.mxu0 0.0
    %3431 = vmatprep.subr.mxu0 0.0
    %3432 = vmatpush1.msra.mxu0 0.0
    %3433 = vmatprep.subr.mxu0 0.0
    %3434 = vmatpush1.msra.mxu0 0.0
    %3435 = vmatprep.subr.mxu0 0.0
    %3436 = vmatpush1.msra.mxu0 0.0
    %3437 = vmatprep.subr.mxu0 0.0
    %3438 = vmatpush1.msra.mxu0 0.0
    %3439 = vmatprep.subr.mxu0 0.0
    %3440 = vmatpush1.msra.mxu0 %v3009
    %3441 = vmatprep.subr.mxu0 0.0
    %3442 = vmatpush1.msra.mxu0 %v3008
    %3443 = vmatprep.subr.mxu0 0.0
    %3444 = vmatpush1.msra.mxu0 %v3007
    %3445 = vmatprep.subr.mxu0 0.0
    %3446 = vmatpush1.msra.mxu0 %v3006
    %3447 = vmatprep.subr.mxu0 0.0
    %3448 = vmatpush2.msra.mxu0 0.0
    %3449 = vmatprep.subr.mxu0 0.0
    %3450 = vmatpush2.msra.mxu0 0.0
    %3451 = vmatprep.subr.mxu0 0.0
    %3452 = vmatpush2.msra.mxu0 0.0
    %3453 = vmatprep.subr.mxu0 0.0
    %3454 = vmatpush2.msra.mxu0 0.0
    %3455 = vmatprep.subr.mxu0 0.0
    %3456 = vmatpush2.msra.mxu0 0.0
    %3457 = vmatprep.subr.mxu0 0.0
    %3458 = vmatpush2.msra.mxu0 0.0
    %3459 = vmatprep.subr.mxu0 0.0
    %3460 = vmatpush2.msra.mxu0 0.0
    %3461 = vmatprep.subr.mxu0 0.0
    %3462 = vmatpush2.msra.mxu0 0.0
    %3463 = vmatprep.subr.mxu0 0.0
    %3464 = vmatpush2.msra.mxu0 0.0
    %3465 = vmatprep.subr.mxu0 0.0
    %3466 = vmatpush2.msra.mxu0 0.0
    %3467 = vmatprep.subr.mxu0 0.0
    %3468 = vmatpush2.msra.mxu0 0.0
    %3469 = vmatprep.subr.mxu0 0.0
    %3470 = vmatpush2.msra.mxu0 0.0
    %3471 = vmatprep.subr.mxu0 0.0
    %3472 = vmatpush2.msra.mxu0 0.0
    %3473 = vmatprep.subr.mxu0 0.0
    %3474 = vmatpush2.msra.mxu0 0.0
    %3475 = vmatprep.subr.mxu0 0.0
    %3476 = vmatpush2.msra.mxu0 0.0
    %3477 = vmatprep.subr.mxu0 0.0
    %3478 = vmatpush2.msra.mxu0 0.0
    %3479 = vmatprep.mubr.f32.mxu0 0.0
    %3480 = vmatmul.mubr.f32.gmra.mxu0 %v3413
    %v3481 = vpop.f32.mrf.mxu0
    %v3482 = vadd.f32 0.0, %v3481
    %v3483 = vpop.f32.mrf.mxu0
    %3484 = vdwg.mxu0
    %v3485 = vadd.f32 %v3409, %v3482
    %v3486 = vxor.u32 %v3485, 2147483648
    %v3487 = vmul.f32 %v3486, 1.442695
    %v3488 = vpow.pop %v3487
    %v3489 = vadd.f32 %v3488, 1.0
    %v3490 = vrcp.pop %v3489
    %v3491 = vmul.f32 1.0, %v3490
    %v3492 = vtanh.pop %v3485
    %v3493 = vmul.f32 %v3491, %v3402
    %3495 = vrot.lane.b32.xlu0 %v3492, 64
    %v3496 = vpop.permute.xlu0 %3495
    %v3498 = vmul.f32 %v3491, %v3496
    %3500 = vrot.lane.b32.xlu0 %v3498, 32
    %v3501 = vpop.permute.xlu0 %3500
    %v3503 = vadd.f32 %v3493, %v3501
    %v3504 = vtanh.pop %v3503
    %3506 = vrot.lane.b32.xlu0 %v3504, 64
    %v3507 = vpop.permute.xlu0 %3506
    %v3509 = vmul.f32 %v3491, %v3507
    %v3510 = vld [vmem:[#allocation5 + $0x4] sm:$0x3]
    %3512 = vrot.lane.b32.xlu0 %v3509, 32
    %v3513 = vpop.permute.xlu0 %3512
    %v3514 = vsel %vm193, %v3513, 0
    %3516 = vmatprep.subr.mxu0 0.0
    %3517 = vmatpush1.msra.mxu0 0.0
    %3518 = vmatprep.subr.mxu0 0.0
    %3519 = vmatpush1.msra.mxu0 0.0
    %3520 = vmatprep.subr.mxu0 0.0
    %3521 = vmatpush1.msra.mxu0 0.0
    %3522 = vmatprep.subr.mxu0 0.0
    %3523 = vmatpush1.msra.mxu0 0.0
    %3524 = vmatprep.subr.mxu0 0.0
    %3525 = vmatpush1.msra.mxu0 0.0
    %3526 = vmatprep.subr.mxu0 0.0
    %3527 = vmatpush1.msra.mxu0 0.0
    %3528 = vmatprep.subr.mxu0 0.0
    %3529 = vmatpush1.msra.mxu0 0.0
    %3530 = vmatprep.subr.mxu0 0.0
    %3531 = vmatpush1.msra.mxu0 0.0
    %3532 = vmatprep.subr.mxu0 0.0
    %3533 = vmatpush1.msra.mxu0 0.0
    %3534 = vmatprep.subr.mxu0 0.0
    %3535 = vmatpush1.msra.mxu0 0.0
    %3536 = vmatprep.subr.mxu0 0.0
    %3537 = vmatpush1.msra.mxu0 0.0
    %3538 = vmatprep.subr.mxu0 0.0
    %3539 = vmatpush1.msra.mxu0 0.0
    %3540 = vmatprep.subr.mxu0 0.0
    %3541 = vmatpush1.msra.mxu0 %v3009
    %3542 = vmatprep.subr.mxu0 0.0
    %3543 = vmatpush1.msra.mxu0 %v3008
    %3544 = vmatprep.subr.mxu0 0.0
    %3545 = vmatpush1.msra.mxu0 %v3007
    %3546 = vmatprep.subr.mxu0 0.0
    %3547 = vmatpush1.msra.mxu0 %v3006
    %3548 = vmatprep.subr.mxu0 0.0
    %3549 = vmatpush2.msra.mxu0 0.0
    %3550 = vmatprep.subr.mxu0 0.0
    %3551 = vmatpush2.msra.mxu0 0.0
    %3552 = vmatprep.subr.mxu0 0.0
    %3553 = vmatpush2.msra.mxu0 0.0
    %3554 = vmatprep.subr.mxu0 0.0
    %3555 = vmatpush2.msra.mxu0 0.0
    %3556 = vmatprep.subr.mxu0 0.0
    %3557 = vmatpush2.msra.mxu0 0.0
    %3558 = vmatprep.subr.mxu0 0.0
    %3559 = vmatpush2.msra.mxu0 0.0
    %3560 = vmatprep.subr.mxu0 0.0
    %3561 = vmatpush2.msra.mxu0 0.0
    %3562 = vmatprep.subr.mxu0 0.0
    %3563 = vmatpush2.msra.mxu0 0.0
    %3564 = vmatprep.subr.mxu0 0.0
    %3565 = vmatpush2.msra.mxu0 0.0
    %3566 = vmatprep.subr.mxu0 0.0
    %3567 = vmatpush2.msra.mxu0 0.0
    %3568 = vmatprep.subr.mxu0 0.0
    %3569 = vmatpush2.msra.mxu0 0.0
    %3570 = vmatprep.subr.mxu0 0.0
    %3571 = vmatpush2.msra.mxu0 0.0
    %3572 = vmatprep.subr.mxu0 0.0
    %3573 = vmatpush2.msra.mxu0 0.0
    %3574 = vmatprep.subr.mxu0 0.0
    %3575 = vmatpush2.msra.mxu0 0.0
    %3576 = vmatprep.subr.mxu0 0.0
    %3577 = vmatpush2.msra.mxu0 0.0
    %3578 = vmatprep.subr.mxu0 0.0
    %3579 = vmatpush2.msra.mxu0 0.0
    %3580 = vmatprep.mubr.f32.mxu0 0.0
    %3581 = vmatmul.mubr.f32.gmra.mxu0 %v3514
    %v3582 = vpop.f32.mrf.mxu0
    %v3583 = vadd.f32 0.0, %v3582
    %v3584 = vpop.f32.mrf.mxu0
    %3585 = vdwg.mxu0
    %v3586 = vadd.f32 %v3510, %v3583
    %v3587 = vxor.u32 %v3586, 2147483648
    %v3588 = vmul.f32 %v3587, 1.442695
    %v3589 = vpow.pop %v3588
    %v3590 = vadd.f32 %v3589, 1.0
    %v3591 = vrcp.pop %v3590
    %v3592 = vmul.f32 1.0, %v3591
    %v3593 = vtanh.pop %v3586
    %v3594 = vmul.f32 %v3592, %v3503
    %3596 = vrot.lane.b32.xlu0 %v3593, 64
    %v3597 = vpop.permute.xlu0 %3596
    %v3599 = vmul.f32 %v3592, %v3597
    %3601 = vrot.lane.b32.xlu0 %v3599, 32
    %v3602 = vpop.permute.xlu0 %3601
    %v3604 = vadd.f32 %v3594, %v3602
    %v3605 = vtanh.pop %v3604
    %3607 = vrot.lane.b32.xlu0 %v3605, 64
    %v3608 = vpop.permute.xlu0 %3607
    %v3610 = vmul.f32 %v3592, %v3608
    %v3611 = vld [vmem:[#allocation5 + $0x2] sm:$0x3]
    %3613 = vrot.lane.b32.xlu0 %v3610, 32
    %v3614 = vpop.permute.xlu0 %3613
    %v3615 = vsel %vm193, %v3614, 0
    %3617 = vmatprep.subr.mxu0 0.0
    %3618 = vmatpush1.msra.mxu0 0.0
    %3619 = vmatprep.subr.mxu0 0.0
    %3620 = vmatpush1.msra.mxu0 0.0
    %3621 = vmatprep.subr.mxu0 0.0
    %3622 = vmatpush1.msra.mxu0 0.0
    %3623 = vmatprep.subr.mxu0 0.0
    %3624 = vmatpush1.msra.mxu0 0.0
    %3625 = vmatprep.subr.mxu0 0.0
    %3626 = vmatpush1.msra.mxu0 0.0
    %3627 = vmatprep.subr.mxu0 0.0
    %3628 = vmatpush1.msra.mxu0 0.0
    %3629 = vmatprep.subr.mxu0 0.0
    %3630 = vmatpush1.msra.mxu0 0.0
    %3631 = vmatprep.subr.mxu0 0.0
    %3632 = vmatpush1.msra.mxu0 0.0
    %3633 = vmatprep.subr.mxu0 0.0
    %3634 = vmatpush1.msra.mxu0 0.0
    %3635 = vmatprep.subr.mxu0 0.0
    %3636 = vmatpush1.msra.mxu0 0.0
    %3637 = vmatprep.subr.mxu0 0.0
    %3638 = vmatpush1.msra.mxu0 0.0
    %3639 = vmatprep.subr.mxu0 0.0
    %3640 = vmatpush1.msra.mxu0 0.0
    %3641 = vmatprep.subr.mxu0 0.0
    %3642 = vmatpush1.msra.mxu0 %v3009
    %3643 = vmatprep.subr.mxu0 0.0
    %3644 = vmatpush1.msra.mxu0 %v3008
    %3645 = vmatprep.subr.mxu0 0.0
    %3646 = vmatpush1.msra.mxu0 %v3007
    %3647 = vmatprep.subr.mxu0 0.0
    %3648 = vmatpush1.msra.mxu0 %v3006
    %3649 = vmatprep.subr.mxu0 0.0
    %3650 = vmatpush2.msra.mxu0 0.0
    %3651 = vmatprep.subr.mxu0 0.0
    %3652 = vmatpush2.msra.mxu0 0.0
    %3653 = vmatprep.subr.mxu0 0.0
    %3654 = vmatpush2.msra.mxu0 0.0
    %3655 = vmatprep.subr.mxu0 0.0
    %3656 = vmatpush2.msra.mxu0 0.0
    %3657 = vmatprep.subr.mxu0 0.0
    %3658 = vmatpush2.msra.mxu0 0.0
    %3659 = vmatprep.subr.mxu0 0.0
    %3660 = vmatpush2.msra.mxu0 0.0
    %3661 = vmatprep.subr.mxu0 0.0
    %3662 = vmatpush2.msra.mxu0 0.0
    %3663 = vmatprep.subr.mxu0 0.0
    %3664 = vmatpush2.msra.mxu0 0.0
    %3665 = vmatprep.subr.mxu0 0.0
    %3666 = vmatpush2.msra.mxu0 0.0
    %3667 = vmatprep.subr.mxu0 0.0
    %3668 = vmatpush2.msra.mxu0 0.0
    %3669 = vmatprep.subr.mxu0 0.0
    %3670 = vmatpush2.msra.mxu0 0.0
    %3671 = vmatprep.subr.mxu0 0.0
    %3672 = vmatpush2.msra.mxu0 0.0
    %3673 = vmatprep.subr.mxu0 0.0
    %3674 = vmatpush2.msra.mxu0 0.0
    %3675 = vmatprep.subr.mxu0 0.0
    %3676 = vmatpush2.msra.mxu0 0.0
    %3677 = vmatprep.subr.mxu0 0.0
    %3678 = vmatpush2.msra.mxu0 0.0
    %3679 = vmatprep.subr.mxu0 0.0
    %3680 = vmatpush2.msra.mxu0 0.0
    %3681 = vmatprep.mubr.f32.mxu0 0.0
    %3682 = vmatmul.mubr.f32.gmra.mxu0 %v3615
    %v3683 = vpop.f32.mrf.mxu0
    %v3684 = vadd.f32 0.0, %v3683
    %v3685 = vpop.f32.mrf.mxu0
    %3686 = vdwg.mxu0
    %v3687 = vadd.f32 %v3611, %v3684
    %v3688 = vxor.u32 %v3687, 2147483648
    %v3689 = vmul.f32 %v3688, 1.442695
    %v3690 = vpow.pop %v3689
    %v3691 = vadd.f32 %v3690, 1.0
    %v3692 = vrcp.pop %v3691
    %v3693 = vmul.f32 1.0, %v3692
    %v3694 = vtanh.pop %v3687
    %v3695 = vmul.f32 %v3693, %v3604
    %3697 = vrot.lane.b32.xlu0 %v3694, 64
    %v3698 = vpop.permute.xlu0 %3697
    %v3700 = vmul.f32 %v3693, %v3698
    %3702 = vrot.lane.b32.xlu0 %v3700, 32
    %v3703 = vpop.permute.xlu0 %3702
    %v3705 = vadd.f32 %v3695, %v3703
    %v3706 = vtanh.pop %v3705
    %3708 = vrot.lane.b32.xlu0 %v3706, 64
    %v3709 = vpop.permute.xlu0 %3708
    %v3711 = vmul.f32 %v3693, %v3709
    %v3712 = vld [vmem:[#allocation5] sm:$0x3]
    %3714 = vrot.lane.b32.xlu0 %v3711, 32
    %v3715 = vpop.permute.xlu0 %3714
    %v3716 = vsel %vm193, %v3715, 0
    %3718 = vmatprep.subr.mxu0 0.0
    %3719 = vmatpush1.msra.mxu0 0.0
    %3720 = vmatprep.subr.mxu0 0.0
    %3721 = vmatpush1.msra.mxu0 0.0
    %3722 = vmatprep.subr.mxu0 0.0
    %3723 = vmatpush1.msra.mxu0 0.0
    %3724 = vmatprep.subr.mxu0 0.0
    %3725 = vmatpush1.msra.mxu0 0.0
    %3726 = vmatprep.subr.mxu0 0.0
    %3727 = vmatpush1.msra.mxu0 0.0
    %3728 = vmatprep.subr.mxu0 0.0
    %3729 = vmatpush1.msra.mxu0 0.0
    %3730 = vmatprep.subr.mxu0 0.0
    %3731 = vmatpush1.msra.mxu0 0.0
    %3732 = vmatprep.subr.mxu0 0.0
    %3733 = vmatpush1.msra.mxu0 0.0
    %3734 = vmatprep.subr.mxu0 0.0
    %3735 = vmatpush1.msra.mxu0 0.0
    %3736 = vmatprep.subr.mxu0 0.0
    %3737 = vmatpush1.msra.mxu0 0.0
    %3738 = vmatprep.subr.mxu0 0.0
    %3739 = vmatpush1.msra.mxu0 0.0
    %3740 = vmatprep.subr.mxu0 0.0
    %3741 = vmatpush1.msra.mxu0 0.0
    %3742 = vmatprep.subr.mxu0 0.0
    %3743 = vmatpush1.msra.mxu0 %v3009
    %3744 = vmatprep.subr.mxu0 0.0
    %3745 = vmatpush1.msra.mxu0 %v3008
    %3746 = vmatprep.subr.mxu0 0.0
    %3747 = vmatpush1.msra.mxu0 %v3007
    %3748 = vmatprep.subr.mxu0 0.0
    %3749 = vmatpush1.msra.mxu0 %v3006
    %3750 = vmatprep.subr.mxu0 0.0
    %3751 = vmatpush2.msra.mxu0 0.0
    %3752 = vmatprep.subr.mxu0 0.0
    %3753 = vmatpush2.msra.mxu0 0.0
    %3754 = vmatprep.subr.mxu0 0.0
    %3755 = vmatpush2.msra.mxu0 0.0
    %3756 = vmatprep.subr.mxu0 0.0
    %3757 = vmatpush2.msra.mxu0 0.0
    %3758 = vmatprep.subr.mxu0 0.0
    %3759 = vmatpush2.msra.mxu0 0.0
    %3760 = vmatprep.subr.mxu0 0.0
    %3761 = vmatpush2.msra.mxu0 0.0
    %3762 = vmatprep.subr.mxu0 0.0
    %3763 = vmatpush2.msra.mxu0 0.0
    %3764 = vmatprep.subr.mxu0 0.0
    %3765 = vmatpush2.msra.mxu0 0.0
    %3766 = vmatprep.subr.mxu0 0.0
    %3767 = vmatpush2.msra.mxu0 0.0
    %3768 = vmatprep.subr.mxu0 0.0
    %3769 = vmatpush2.msra.mxu0 0.0
    %3770 = vmatprep.subr.mxu0 0.0
    %3771 = vmatpush2.msra.mxu0 0.0
    %3772 = vmatprep.subr.mxu0 0.0
    %3773 = vmatpush2.msra.mxu0 0.0
    %3774 = vmatprep.subr.mxu0 0.0
    %3775 = vmatpush2.msra.mxu0 0.0
    %3776 = vmatprep.subr.mxu0 0.0
    %3777 = vmatpush2.msra.mxu0 0.0
    %3778 = vmatprep.subr.mxu0 0.0
    %3779 = vmatpush2.msra.mxu0 0.0
    %3780 = vmatprep.subr.mxu0 0.0
    %3781 = vmatpush2.msra.mxu0 0.0
    %3782 = vmatprep.mubr.f32.mxu0 0.0
    %3783 = vmatmul.mubr.f32.gmra.mxu0 %v3716
    %v3784 = vpop.f32.mrf.mxu0
    %v3785 = vadd.f32 0.0, %v3784
    %v3786 = vpop.f32.mrf.mxu0
    %3787 = vdwg.mxu0
    %v3788 = vadd.f32 %v3712, %v3785
    %v3789 = vxor.u32 %v3788, 2147483648
    %v3790 = vmul.f32 %v3789, 1.442695
    %v3791 = vpow.pop %v3790
    %v3792 = vadd.f32 %v3791, 1.0
    %v3793 = vrcp.pop %v3792
    %v3794 = vmul.f32 1.0, %v3793
    %v3795 = vtanh.pop %v3788
    %v3796 = vmul.f32 %v3794, %v3705
    %3798 = vrot.lane.b32.xlu0 %v3795, 64
    %v3799 = vpop.permute.xlu0 %3798
    %v3801 = vmul.f32 %v3794, %v3799
    %3803 = vrot.lane.b32.xlu0 %v3801, 32
    %v3804 = vpop.permute.xlu0 %3803
    %v3806 = vadd.f32 %v3796, %v3804
    %v3807 = vtanh.pop %v3806
    %3809 = vrot.lane.b32.xlu0 %v3807, 64
    %v3810 = vpop.permute.xlu0 %3809
    %v3812 = vmul.f32 %v3794, %v3810
    %v3813 = vld [vmem:[%s12] sm:$0x1]
    %v3815 = vlaneseq
    %v3816 = vshrl.u32 %v3815, 7
    %v3817 = vsub.s32 0, %v3816
    %v3818 = vrot.slane %v3813, %v3817
    %3819 = vrot.lane.b32.xlu0 %v3818, 96
    %v3820 = vpop.permute.xlu0 %3819
    %v3822 = vmul.f32 %v3005, %v3820
    %3824 = vrot.lane.b32.xlu0 %v3822, 32
    %v3825 = vpop.permute.xlu0 %3824
    %v3827 = vsel %vm296, %v3825, 0.0
    %3828 = vadd.xlane.f32.xlu0 %v3827
    %v3829 = vpop.xlane.xlu0 %3828
    %v3830 = vld [vmem:[%s13] sm:$0x1]
    %v3832 = vlaneseq
    %v3833 = vshrl.u32 %v3832, 7
    %v3834 = vsub.s32 0, %v3833
    %v3835 = vrot.slane %v3830, %v3834
    %3836 = vrot.lane.b32.xlu0 %v3835, 96
    %v3837 = vpop.permute.xlu0 %3836
    %v3839 = vmul.f32 %v3812, %v3837
    %3841 = vrot.lane.b32.xlu0 %v3839, 32
    %v3842 = vpop.permute.xlu0 %3841
    %v3844 = vsel %vm296, %v3842, 0.0
    %3845 = vadd.xlane.f32.xlu0 %v3844
    %v3846 = vpop.xlane.xlu0 %3845
    %v3847 = vadd.f32 %v3829, %v3846
    %v3848 = vld [vmem:[#allocation6] sm:$0x1]
    %v3850 = vlaneseq
    %v3851 = vshrl.u32 %v3850, 7
    %v3852 = vsub.s32 0, %v3851
    %v3853 = vrot.slane %v3848, %v3852
    %v3855 = vadd.f32 %v3847, %v3853
    %vm3856 = vcmask 1024
    %3857 = vst.msk [vmem:[%s15] sm:$0x3] %vm3856, %v3855
    // Predicated region
    $region102: #{tpu_custom_call.1} parent=1 // pred_check
      _
    $region103: #{tpu_custom_call.1} parent=1 // pred_check_branch
      %3859 = sbr.rel (0) target = $region105
    $region104: #{tpu_custom_call.1} parent=1 // pred_region
      _
    $region105: #{tpu_custom_call.1} parent=1 // pred_fallthru
      _
    // Predicated region
    $region106: #{tpu_custom_call.1} parent=1 // pred_check
      _
    $region107: #{tpu_custom_call.1} parent=1 // pred_check_branch
      %3861 = sbr.rel (0) target = $region109
    $region108: #{tpu_custom_call.1} parent=1 // pred_region
      _
    $region109: #{tpu_custom_call.1} parent=1 // pred_fallthru
      _
    %3862 = vsyncpa [#allocation8], 1
    %3863 = vsyncpa [#allocation10], 1
    %3864 = vsyncpa [#allocation13], 1
    %3865 = vsyncpa [#allocation16], 1
    %3866 = vsyncpa [#allocation19], 1
    %3867 = vsyncpa [#allocation22], 1

</llo_original>
